<compile_context>
chip_gen: v5e
topology: v5e:2x2
jax: 0.10.0
libtpu: 0.0.40
codegen_flags: <defaults>
</compile_context>

<pallas_src>
import functools

import jax
import jax.numpy as jnp
from jax.experimental import pallas as pl
from jax.experimental.pallas import tpu as pltpu

_P_DROP = 0.3
_KEEP = 1.0 - _P_DROP
_LEAKY_SLOPE = 0.2


def _leaky_relu(h):
    return jnp.where(h > 0, h, jnp.float32(_LEAKY_SLOPE) * h)


def _disc_kernel(x_ref, m1_ref, m2_ref, m3_ref,
                 w1_ref, b1_ref, w2_ref, b2_ref, w3_ref, b3_ref,
                 w4_ref, b4_ref, o_ref):
    # fc1: [tb, 784] @ [784, 1024]  (bf16 in, f32 accumulate)
    x = x_ref[...].astype(jnp.bfloat16)
    h = jnp.dot(x, w1_ref[...], preferred_element_type=jnp.float32) + b1_ref[...]
    h = _leaky_relu(h)
    h = (h * m1_ref[...]).astype(jnp.bfloat16)   # dropout: mask holds 0 or 1/(1-p)

    # fc2: [tb, 1024] @ [1024, 512]
    h = jnp.dot(h, w2_ref[...], preferred_element_type=jnp.float32) + b2_ref[...]
    h = _leaky_relu(h)
    h = (h * m2_ref[...]).astype(jnp.bfloat16)

    # fc3: [tb, 512] @ [512, 256]
    h = jnp.dot(h, w3_ref[...], preferred_element_type=jnp.float32) + b3_ref[...]
    h = _leaky_relu(h)
    h = h * m3_ref[...]                          # stays f32

    # fc4 (256 -> 1): VPU multiply + XLU lane reduction (avoids N=1 MXU matmul
    # and the masked 1-lane store path).
    z = jnp.sum(h * w4_ref[...].astype(jnp.float32), axis=-1, keepdims=True)
    z = z + b4_ref[...]

    # sigmoid; exp goes to the EUP, exp(-z) overflow saturates to the right limit
    o_ref[...] = 1.0 / (1.0 + jnp.exp(-z))


def _round_up(n, m):
    return ((n + m - 1) // m) * m


@functools.partial(jax.jit, static_argnames=("training", "tile_b"))
def discriminator_forward(x, params, key, *, training=True, tile_b=None):
    """x: [B, 784] float32. Returns [B, 1] float32 sigmoid outputs."""
    w1, b1, w2, b2, w3, b3, w4, b4 = params
    B = x.shape[0]
    if tile_b is None:
        tile_b = min(256, _round_up(B, 16))      # 16-row tiles keep bf16 blocks tile-native
    Bp = _round_up(B, tile_b)

    x = x.astype(jnp.float32)
    if Bp != B:
        x = jnp.pad(x, ((0, Bp - B), (0, 0)))

    # Dropout keep-masks built outside the kernel with jax.random (portable to
    # interpret mode); 1/(1-p) scale folded into the mask values.
    def make_mask(k, f):
        if not training:
            return jnp.ones((Bp, f), jnp.bfloat16)
        keep = jax.random.bernoulli(k, _KEEP, (Bp, f))
        return jnp.where(keep, jnp.bfloat16(1.0 / _KEEP), jnp.bfloat16(0.0))

    k1, k2, k3 = jax.random.split(key, 3)
    m1 = make_mask(k1, 1024)
    m2 = make_mask(k2, 512)
    m3 = make_mask(k3, 256)

    row = lambda i: (i, 0)   # batch-tiled operands
    rep = lambda i: (0, 0)   # VMEM-resident operands (weights / biases)

    out = pl.pallas_call(
        _disc_kernel,
        out_shape=jax.ShapeDtypeStruct((Bp, 1), jnp.float32),
        grid=(Bp // tile_b,),
        in_specs=[
            pl.BlockSpec((tile_b, 784), row),    # x
            pl.BlockSpec((tile_b, 1024), row),   # dropout mask 1
            pl.BlockSpec((tile_b, 512), row),    # dropout mask 2
            pl.BlockSpec((tile_b, 256), row),    # dropout mask 3
            pl.BlockSpec((784, 1024), rep),      # w1 (bf16, resident)
            pl.BlockSpec((1, 1024), rep),        # b1
            pl.BlockSpec((1024, 512), rep),      # w2
            pl.BlockSpec((1, 512), rep),         # b2
            pl.BlockSpec((512, 256), rep),       # w3
            pl.BlockSpec((1, 256), rep),         # b3
            pl.BlockSpec((1, 256), rep),         # w4 as a row vector
            pl.BlockSpec((1, 1), rep),           # b4
        ],
        out_specs=pl.BlockSpec((tile_b, 1), row),
        compiler_params=pltpu.CompilerParams(
            dimension_semantics=("parallel",),   # shard batch tiles across TCs (v7x)
            vmem_limit_bytes=32 << 20,
        ),
    )(x, m1, m2, m3, w1, b1, w2, b2, w3, b3, w4, b4)

    return out[:B]


def init_params(key):
    """torch.nn.Linear-style init (uniform +/- 1/sqrt(fan_in)).

    Weights are returned pre-transposed to [in, out] and cast to bf16; biases
    are f32 [1, out].  fc4's weight is stored as a (1, 256) row vector for the
    in-kernel VPU reduction.
    """
    dims = [(784, 1024), (1024, 512), (512, 256), (256, 1)]
    keys = jax.random.split(key, 2 * len(dims))
    params = []
    for i, (fin, fout) in enumerate(dims):
        bound = 1.0 / (fin ** 0.5)
        w = jax.random.uniform(keys[2 * i], (fin, fout), jnp.float32, -bound, bound)
        b = jax.random.uniform(keys[2 * i + 1], (1, fout), jnp.float32, -bound, bound)
        if fout == 1:
            w = w.T                              # (256, 1) -> (1, 256)
        params += [w.astype(jnp.bfloat16), b]
    return tuple(params)


if __name__ == "__main__":
    key = jax.random.PRNGKey(0)
    pkey, xkey, dkey = jax.random.split(key, 3)

    params = init_params(pkey)
    B = 32                                       # small MNIST-flattened batch
    x = jax.random.normal(xkey, (B, 784), dtype=jnp.float32)

    out = discriminator_forward(x, params, dkey, training=True, tile_b=16)
    jax.block_until_ready(out)

    assert out.shape == (B, 1), out.shape
    assert bool(jnp.all((out >= 0.0) & (out <= 1.0))), "sigmoid output out of range"
    print("KERNEL_OK")
</pallas_src>

<mosaic_0001>
module attributes {stable_mosaic.version = 11 : i64} {
  func.func @_disc_kernel(%arg0: i32, %arg1: memref<16x784xf32, #tpu.memory_space<vmem>>, %arg2: memref<16x1024xbf16, #tpu.memory_space<vmem>>, %arg3: memref<16x512xbf16, #tpu.memory_space<vmem>>, %arg4: memref<16x256xbf16, #tpu.memory_space<vmem>>, %arg5: memref<784x1024xbf16, #tpu.memory_space<vmem>>, %arg6: memref<1x1024xf32, #tpu.memory_space<vmem>>, %arg7: memref<1024x512xbf16, #tpu.memory_space<vmem>>, %arg8: memref<1x512xf32, #tpu.memory_space<vmem>>, %arg9: memref<512x256xbf16, #tpu.memory_space<vmem>>, %arg10: memref<1x256xf32, #tpu.memory_space<vmem>>, %arg11: memref<1x256xbf16, #tpu.memory_space<vmem>>, %arg12: memref<1x1xf32, #tpu.memory_space<vmem>>, %arg13: memref<16x1xf32, #tpu.memory_space<vmem>>) attributes {dimension_semantics = [#tpu.dimension_semantics<parallel>], iteration_bounds = array<i64: 2>, scalar_prefetch = 0 : i64, scratch_operands = 0 : i64, tpu.core_type = #tpu.core_type<tc>, window_params = [{transform_indices = @transform_0, window_bounds = array<i64: 16, 784>}, {transform_indices = @transform_1, window_bounds = array<i64: 16, 1024>}, {transform_indices = @transform_2, window_bounds = array<i64: 16, 512>}, {transform_indices = @transform_3, window_bounds = array<i64: 16, 256>}, {pipeline_mode = #tpu.pipeline_mode<synchronous>, transform_indices = @transform_4, window_bounds = array<i64: 784, 1024>}, {pipeline_mode = #tpu.pipeline_mode<synchronous>, transform_indices = @transform_5, window_bounds = array<i64: 1, 1024>}, {pipeline_mode = #tpu.pipeline_mode<synchronous>, transform_indices = @transform_6, window_bounds = array<i64: 1024, 512>}, {pipeline_mode = #tpu.pipeline_mode<synchronous>, transform_indices = @transform_7, window_bounds = array<i64: 1, 512>}, {pipeline_mode = #tpu.pipeline_mode<synchronous>, transform_indices = @transform_8, window_bounds = array<i64: 512, 256>}, {pipeline_mode = #tpu.pipeline_mode<synchronous>, transform_indices = @transform_9, window_bounds = array<i64: 1, 256>}, {pipeline_mode = #tpu.pipeline_mode<synchronous>, transform_indices = @transform_10, window_bounds = array<i64: 1, 256>}, {pipeline_mode = #tpu.pipeline_mode<synchronous>, transform_indices = @transform_11, window_bounds = array<i64: 1, 1>}, {transform_indices = @transform_12, window_bounds = array<i64: 16, 1>}]} {
    %c0 = arith.constant 0 : index
    %c0_0 = arith.constant 0 : index
    %0 = vector.load %arg1[%c0, %c0_0] : memref<16x784xf32, #tpu.memory_space<vmem>>, vector<16x784xf32>
    %1 = arith.truncf %0 : vector<16x784xf32> to vector<16x784xbf16>
    %c0_1 = arith.constant 0 : index
    %c0_2 = arith.constant 0 : index
    %2 = vector.load %arg5[%c0_1, %c0_2] : memref<784x1024xbf16, #tpu.memory_space<vmem>>, vector<784x1024xbf16>
    %cst = arith.constant dense<0.000000e+00> : vector<16x1024xf32>
    %3 = tpu.matmul %1, %2, %cst {dimension_numbers = #tpu.dot_dimension_numbers<[1], [0], [0], [1], [0, 0, 1, 1], [], []>} : vector<16x784xbf16>, vector<784x1024xbf16>, vector<16x1024xf32> -> vector<16x1024xf32>
    %c0_3 = arith.constant 0 : index
    %c0_4 = arith.constant 0 : index
    %4 = vector.load %arg6[%c0_3, %c0_4] : memref<1x1024xf32, #tpu.memory_space<vmem>>, vector<1x1024xf32>
    %5 = vector.broadcast %4 : vector<1x1024xf32> to vector<16x1024xf32>
    %6 = arith.addf %3, %5 : vector<16x1024xf32>
    %cst_5 = arith.constant 0.000000e+00 : f32
    %7 = vector.broadcast %cst_5 : f32 to vector<16x1024xf32>
    %8 = arith.cmpf ogt, %6, %7 : vector<16x1024xf32>
    %cst_6 = arith.constant 2.000000e-01 : f32
    %9 = vector.broadcast %cst_6 : f32 to vector<16x1024xf32>
    %10 = arith.mulf %9, %6 : vector<16x1024xf32>
    %11 = arith.select %8, %6, %10 : vector<16x1024xi1>, vector<16x1024xf32>
    %c0_7 = arith.constant 0 : index
    %c0_8 = arith.constant 0 : index
    %12 = vector.load %arg2[%c0_7, %c0_8] : memref<16x1024xbf16, #tpu.memory_space<vmem>>, vector<16x1024xbf16>
    %13 = arith.extf %12 : vector<16x1024xbf16> to vector<16x1024xf32>
    %14 = arith.mulf %11, %13 : vector<16x1024xf32>
    %15 = arith.truncf %14 : vector<16x1024xf32> to vector<16x1024xbf16>
    %c0_9 = arith.constant 0 : index
    %c0_10 = arith.constant 0 : index
    %16 = vector.load %arg7[%c0_9, %c0_10] : memref<1024x512xbf16, #tpu.memory_space<vmem>>, vector<1024x512xbf16>
    %cst_11 = arith.constant dense<0.000000e+00> : vector<16x512xf32>
    %17 = tpu.matmul %15, %16, %cst_11 {dimension_numbers = #tpu.dot_dimension_numbers<[1], [0], [0], [1], [0, 0, 1, 1], [], []>} : vector<16x1024xbf16>, vector<1024x512xbf16>, vector<16x512xf32> -> vector<16x512xf32>
    %c0_12 = arith.constant 0 : index
    %c0_13 = arith.constant 0 : index
    %18 = vector.load %arg8[%c0_12, %c0_13] : memref<1x512xf32, #tpu.memory_space<vmem>>, vector<1x512xf32>
    %19 = vector.broadcast %18 : vector<1x512xf32> to vector<16x512xf32>
    %20 = arith.addf %17, %19 : vector<16x512xf32>
    %cst_14 = arith.constant 0.000000e+00 : f32
    %21 = vector.broadcast %cst_14 : f32 to vector<16x512xf32>
    %22 = arith.cmpf ogt, %20, %21 : vector<16x512xf32>
    %cst_15 = arith.constant 2.000000e-01 : f32
    %23 = vector.broadcast %cst_15 : f32 to vector<16x512xf32>
    %24 = arith.mulf %23, %20 : vector<16x512xf32>
    %25 = arith.select %22, %20, %24 : vector<16x512xi1>, vector<16x512xf32>
    %c0_16 = arith.constant 0 : index
    %c0_17 = arith.constant 0 : index
    %26 = vector.load %arg3[%c0_16, %c0_17] : memref<16x512xbf16, #tpu.memory_space<vmem>>, vector<16x512xbf16>
    %27 = arith.extf %26 : vector<16x512xbf16> to vector<16x512xf32>
    %28 = arith.mulf %25, %27 : vector<16x512xf32>
    %29 = arith.truncf %28 : vector<16x512xf32> to vector<16x512xbf16>
    %c0_18 = arith.constant 0 : index
    %c0_19 = arith.constant 0 : index
    %30 = vector.load %arg9[%c0_18, %c0_19] : memref<512x256xbf16, #tpu.memory_space<vmem>>, vector<512x256xbf16>
    %cst_20 = arith.constant dense<0.000000e+00> : vector<16x256xf32>
    %31 = tpu.matmul %29, %30, %cst_20 {dimension_numbers = #tpu.dot_dimension_numbers<[1], [0], [0], [1], [0, 0, 1, 1], [], []>} : vector<16x512xbf16>, vector<512x256xbf16>, vector<16x256xf32> -> vector<16x256xf32>
    %c0_21 = arith.constant 0 : index
    %c0_22 = arith.constant 0 : index
    %32 = vector.load %arg10[%c0_21, %c0_22] : memref<1x256xf32, #tpu.memory_space<vmem>>, vector<1x256xf32>
    %33 = vector.broadcast %32 : vector<1x256xf32> to vector<16x256xf32>
    %34 = arith.addf %31, %33 : vector<16x256xf32>
    %cst_23 = arith.constant 0.000000e+00 : f32
    %35 = vector.broadcast %cst_23 : f32 to vector<16x256xf32>
    %36 = arith.cmpf ogt, %34, %35 : vector<16x256xf32>
    %cst_24 = arith.constant 2.000000e-01 : f32
    %37 = vector.broadcast %cst_24 : f32 to vector<16x256xf32>
    %38 = arith.mulf %37, %34 : vector<16x256xf32>
    %39 = arith.select %36, %34, %38 : vector<16x256xi1>, vector<16x256xf32>
    %c0_25 = arith.constant 0 : index
    %c0_26 = arith.constant 0 : index
    %40 = vector.load %arg4[%c0_25, %c0_26] : memref<16x256xbf16, #tpu.memory_space<vmem>>, vector<16x256xbf16>
    %41 = arith.extf %40 : vector<16x256xbf16> to vector<16x256xf32>
    %42 = arith.mulf %39, %41 : vector<16x256xf32>
    %c0_27 = arith.constant 0 : index
    %c0_28 = arith.constant 0 : index
    %43 = vector.load %arg11[%c0_27, %c0_28] : memref<1x256xbf16, #tpu.memory_space<vmem>>, vector<1x256xbf16>
    %44 = arith.extf %43 : vector<1x256xbf16> to vector<1x256xf32>
    %45 = vector.broadcast %44 : vector<1x256xf32> to vector<16x256xf32>
    %46 = arith.mulf %42, %45 : vector<16x256xf32>
    %cst_29 = arith.constant dense<0.000000e+00> : vector<16xf32>
    %47 = vector.multi_reduction <add>, %46, %cst_29 [1] : vector<16x256xf32> to vector<16xf32>
    %48 = vector.shape_cast %47 : vector<16xf32> to vector<16x1xf32>
    %c0_30 = arith.constant 0 : index
    %c0_31 = arith.constant 0 : index
    %49 = vector.load %arg12[%c0_30, %c0_31] : memref<1x1xf32, #tpu.memory_space<vmem>>, vector<1x1xf32>
    %50 = vector.broadcast %49 : vector<1x1xf32> to vector<16x1xf32>
    %51 = arith.addf %48, %50 : vector<16x1xf32>
    %cst_32 = arith.constant 0.000000e+00 : f32
    %52 = vector.broadcast %cst_32 : f32 to vector<16x1xf32>
    %53 = arith.subf %52, %51 : vector<16x1xf32>
    %54 = math.exp %53 : vector<16x1xf32>
    %cst_33 = arith.constant 1.000000e+00 : f32
    %55 = vector.broadcast %cst_33 : f32 to vector<16x1xf32>
    %56 = arith.addf %55, %54 : vector<16x1xf32>
    %cst_34 = arith.constant 1.000000e+00 : f32
    %57 = vector.broadcast %cst_34 : f32 to vector<16x1xf32>
    %58 = arith.divf %57, %56 : vector<16x1xf32>
    %c0_35 = arith.constant 0 : index
    %c0_36 = arith.constant 0 : index
    %59 = vector.load %arg13[%c0_35, %c0_36] : memref<16x1xf32, #tpu.memory_space<vmem>>, vector<16x1xf32>
    tpu.vector_store %arg13[%c0_35, %c0_36], %58 {strides = array<i32>} : memref<16x1xf32, #tpu.memory_space<vmem>>, vector<16x1xf32>,
    return
  }
  func.func @transform_0(%arg0: i32) -> (i32, i32) {
    %c0_i32 = arith.constant 0 : i32
    %c0_i32_0 = arith.constant 0 : i32
    return %arg0, %c0_i32 : i32, i32
  }
  func.func @transform_1(%arg0: i32) -> (i32, i32) {
    %c0_i32 = arith.constant 0 : i32
    %c0_i32_0 = arith.constant 0 : i32
    return %arg0, %c0_i32 : i32, i32
  }
  func.func @transform_2(%arg0: i32) -> (i32, i32) {
    %c0_i32 = arith.constant 0 : i32
    %c0_i32_0 = arith.constant 0 : i32
    return %arg0, %c0_i32 : i32, i32
  }
  func.func @transform_3(%arg0: i32) -> (i32, i32) {
    %c0_i32 = arith.constant 0 : i32
    %c0_i32_0 = arith.constant 0 : i32
    return %arg0, %c0_i32 : i32, i32
  }
  func.func @transform_4(%arg0: i32) -> (i32, i32) {
    %c0_i32 = arith.constant 0 : i32
    %c0_i32_0 = arith.constant 0 : i32
    %c0_i32_1 = arith.constant 0 : i32
    return %c0_i32, %c0_i32_0 : i32, i32
  }
  func.func @transform_5(%arg0: i32) -> (i32, i32) {
    %c0_i32 = arith.constant 0 : i32
    %c0_i32_0 = arith.constant 0 : i32
    %c0_i32_1 = arith.constant 0 : i32
    return %c0_i32, %c0_i32_0 : i32, i32
  }
  func.func @transform_6(%arg0: i32) -> (i32, i32) {
    %c0_i32 = arith.constant 0 : i32
    %c0_i32_0 = arith.constant 0 : i32
    %c0_i32_1 = arith.constant 0 : i32
    return %c0_i32, %c0_i32_0 : i32, i32
  }
  func.func @transform_7(%arg0: i32) -> (i32, i32) {
    %c0_i32 = arith.constant 0 : i32
    %c0_i32_0 = arith.constant 0 : i32
    %c0_i32_1 = arith.constant 0 : i32
    return %c0_i32, %c0_i32_0 : i32, i32
  }
  func.func @transform_8(%arg0: i32) -> (i32, i32) {
    %c0_i32 = arith.constant 0 : i32
    %c0_i32_0 = arith.constant 0 : i32
    %c0_i32_1 = arith.constant 0 : i32
    return %c0_i32, %c0_i32_0 : i32, i32
  }
  func.func @transform_9(%arg0: i32) -> (i32, i32) {
    %c0_i32 = arith.constant 0 : i32
    %c0_i32_0 = arith.constant 0 : i32
    %c0_i32_1 = arith.constant 0 : i32
    return %c0_i32, %c0_i32_0 : i32, i32
  }
  func.func @transform_10(%arg0: i32) -> (i32, i32) {
    %c0_i32 = arith.constant 0 : i32
    %c0_i32_0 = arith.constant 0 : i32
    %c0_i32_1 = arith.constant 0 : i32
    return %c0_i32, %c0_i32_0 : i32, i32
  }
  func.func @transform_11(%arg0: i32) -> (i32, i32) {
    %c0_i32 = arith.constant 0 : i32
    %c0_i32_0 = arith.constant 0 : i32
    %c0_i32_1 = arith.constant 0 : i32
    return %c0_i32, %c0_i32_0 : i32, i32
  }
  func.func @transform_12(%arg0: i32) -> (i32, i32) {
    %c0_i32 = arith.constant 0 : i32
    %c0_i32_0 = arith.constant 0 : i32
    return %arg0, %c0_i32 : i32, i32
  }
}

</mosaic_0001>

<llo_original>
// kernel: discriminator_forward.3
$region0: #{discriminator_forward.3}
  #allocation0 [shape = 'u32[]', space=smem, size = 0x4, offset = 0x4, fixed_abs, tag = 'smem constant byte address 0x4 - core index']
  #allocation1 [shape = 'u32[72,128]{1,0:T(1,128)}', space=vmem, size = 0x9000, scoped, tag = 'internal scratch']
  #allocation2 [shape = 'f32[1,1]{1,0:T(1,128)S(1)}', space=vmem, size = 0x200, scoped, tag = 'scoped memory for discriminator_forward.3']
  %s0 = inlined_call_operand.hbm [shape: f32[32,784], index: 0, kind: input, shape index: {}]
  %s1 = inlined_call_operand.vmem [shape: bf16[32,1024], index: 1, kind: input, shape index: {}]
  %s2 = inlined_call_operand.vmem [shape: bf16[32,512], index: 2, kind: input, shape index: {}]
  %s3 = inlined_call_operand.vmem [shape: bf16[32,256], index: 3, kind: input, shape index: {}]
  %s4 = inlined_call_operand.hbm [shape: bf16[784,1024], index: 4, kind: input, shape index: {}]
  %s5 = inlined_call_operand.hbm [shape: f32[1,1024], index: 5, kind: input, shape index: {}]
  %s6 = inlined_call_operand.hbm [shape: bf16[1024,512], index: 6, kind: input, shape index: {}]
  %s7 = inlined_call_operand.hbm [shape: f32[1,512], index: 7, kind: input, shape index: {}]
  %s8 = inlined_call_operand.hbm [shape: bf16[512,256], index: 8, kind: input, shape index: {}]
  %s9 = inlined_call_operand.hbm [shape: f32[1,256], index: 9, kind: input, shape index: {}]
  %s10 = inlined_call_operand.hbm [shape: bf16[1,256], index: 10, kind: input, shape index: {}]
  %s11 = inlined_call_operand.<no memory space> [shape: f32[1,1], index: 11, kind: input, shape index: {}]
  %s12 = inlined_call_operand.vmem [shape: f32[32,1], index: 12, kind: output, shape index: {}]
  %s13 = sld [smem:[#allocation0]]
  $region113: #{discriminator_forward.3} parent=0
    _
  %s15 = ssub.s32 1, %s13
  %s16 = scalar_select 0, %s15, %s13
  %v17 = vstv %s11
  %18 = vst [vmem:[#allocation2] sm:$0x1] %v17
  $region1: #{discriminator_forward.3} parent=0
    #allocation3 [shape = 'u8[114688]{0}', space=vmem, size = 0x1c000, scoped, tag = 'input window, operand 0']
    #allocation4 [shape = 's32[2]{0}', space=sflag, size = 0x8, scoped, tag = 'scoped memory for discriminator_forward.3']
    #allocation5 [shape = 'u8[1605632]{0}', space=vmem, size = 0x188000, scoped, tag = 'input window, operand 4, single buffered']
    #allocation6 [shape = 's32[1]{0}', space=sflag, size = 0x4, scoped, tag = 'scoped memory for discriminator_forward.3']
    #allocation7 [shape = 'u8[4096]{0}', space=vmem, size = 0x1000, scoped, tag = 'input window, operand 5, single buffered']
    #allocation8 [shape = 'u8[1048576]{0}', space=vmem, size = 0x100000, scoped, tag = 'input window, operand 6, single buffered']
    #allocation9 [shape = 's32[1]{0}', space=sflag, size = 0x4, scoped, tag = 'scoped memory for discriminator_forward.3']
    #allocation10 [shape = 'u8[2048]{0}', space=vmem, size = 0x800, scoped, tag = 'input window, operand 7, single buffered']
    #allocation11 [shape = 'u8[262144]{0}', space=vmem, size = 0x40000, scoped, tag = 'input window, operand 8, single buffered']
    #allocation12 [shape = 's32[1]{0}', space=sflag, size = 0x4, scoped, tag = 'scoped memory for discriminator_forward.3']
    #allocation13 [shape = 'u8[1024]{0}', space=vmem, size = 0x400, scoped, tag = 'input window, operand 9, single buffered']
    #allocation14 [shape = 'u8[1024]{0}', space=vmem, size = 0x400, scoped, tag = 'input window, operand 10, single buffered']
    #allocation15 [shape = 's32[1]{0}', space=sflag, size = 0x4, scoped, tag = 'scoped memory for discriminator_forward.3']
    %19 = vsyncpa [#allocation4], 0
    %s20 = scalar_lea.sflag [#allocation4], 1
    %21 = vsyncpa %s20, 0
    %22 = vsyncpa [#allocation6], 0
    %23 = vsyncpa [#allocation9], 0
    %24 = vsyncpa [#allocation12], 0
    %25 = vsyncpa [#allocation15], 0
    loop: start=0, step=1, limit=4
    $region2: #{discriminator_forward.3} parent=1 // loop_pre_header
      _
    $region3: #{discriminator_forward.3} parent=1 // loop_header
      %s27 = sphi 0, %s31
      %p28 = scmp.ge.s32.totalorder %s27, 4
      %s37 = sphi 0, %s39
      %s40 = sphi 0, %s37
      %s41 = sphi 0, %s40
      %s57 = sphi 0, %s41
      %s63 = sphi 0, %s65
      %s66 = sphi 0, %s63
      %s67 = sphi 0, %s66
      %s83 = sphi 0, %s67
      %s89 = sphi 0, %s91
      %s92 = sphi 0, %s89
      %s93 = sphi 0, %s92
      %s109 = sphi 0, %s93
      %s115 = sphi 0, %s117
      %s118 = sphi 0, %s115
      %s119 = sphi 0, %s118
      %s135 = sphi 0, %s119
      %s139 = sphi 0, %s139
      %s141 = sphi 0, %s139
      %s142 = sphi 0, %s141
      %s156 = sphi 0, %s142
      %s160 = sphi 0, %s160
      %s162 = sphi 0, %s160
      %s163 = sphi 0, %s162
      %s177 = sphi 0, %s163
      %s181 = sphi 0, %s181
      %s183 = sphi 0, %s181
      %s184 = sphi 0, %s183
      %s198 = sphi 0, %s184
      %s202 = sphi 0, %s202
      %s204 = sphi 0, %s202
      %s205 = sphi 0, %s204
      %s219 = sphi 0, %s205
      %s223 = sphi 0, %s223
      %s225 = sphi 0, %s223
      %s226 = sphi 0, %s225
      %s240 = sphi 0, %s226
      %s244 = sphi 0, %s244
      %s246 = sphi 0, %s244
      %s247 = sphi 0, %s246
      %s261 = sphi 0, %s247
      %s265 = sphi 0, %s265
      %s267 = sphi 0, %s265
      %s268 = sphi 0, %s267
      %s282 = sphi 0, %s268
      %s286 = sphi 0, %s286
      %s288 = sphi 0, %s286
      %s289 = sphi 0, %s288
      %s303 = sphi 0, %s289
      %s309 = sphi 0, %s311
      %s312 = sphi 0, %s309
      %s313 = sphi 0, %s312
      %s329 = sphi 0, %s313
    $region4: #{discriminator_forward.3} parent=1 // loop_header_branch
      %30 = sbr.rel (%p28) target = $region8
    $region5: #{discriminator_forward.3} parent=1 // loop_body
      %s32 = ssub.s32 %s27, 1
      %s33 = ssub.s32 %s27, 2
      %s34 = sadd.s32 %s27, 1
      %s35 = ssub.s32 %s27, %s34
      %p36 = scmp.eq.s32.totalorder %s35, 0
      %s38 = sadd.s32 %s37, 1
      %s39 = scalar_select %p36, %s37, %s38
      %p42 = pneg %p36
      %p43 = scmp.eq.s32.totalorder %s27, 1
      %p44 = por %p42, %p43
      %p45 = scmp.ne.s32.totalorder %s37, %s40
      %p46 = scmp.eq.s32.totalorder %s27, 0
      %p47 = por %p45, %p46
      %p48 = scmp.ne.s32.totalorder %s37, %s40
      %p49 = scmp.eq.s32.totalorder %s32, 1
      %p50 = por %p48, %p49
      %p51 = scmp.ne.s32.totalorder %s40, %s41
      %p52 = scmp.eq.s32.totalorder %s32, 0
      %p53 = por %p51, %p52
      %p54 = scmp.ne.s32.totalorder %s40, %s41
      %p55 = scmp.eq.s32.totalorder %s33, 1
      %p56 = por %p54, %p55
      %p58 = scmp.ne.s32.totalorder %s41, %s57
      %p59 = scmp.eq.s32.totalorder %s33, 0
      %p60 = por %p58, %p59
      %s61 = ssub.s32 %s27, %s34
      %p62 = scmp.eq.s32.totalorder %s61, 0
      %s64 = sadd.s32 %s63, 1
      %s65 = scalar_select %p62, %s63, %s64
      %p68 = pneg %p62
      %p69 = scmp.eq.s32.totalorder %s27, 1
      %p70 = por %p68, %p69
      %p71 = scmp.ne.s32.totalorder %s63, %s66
      %p72 = scmp.eq.s32.totalorder %s27, 0
      %p73 = por %p71, %p72
      %p74 = scmp.ne.s32.totalorder %s63, %s66
      %p75 = scmp.eq.s32.totalorder %s32, 1
      %p76 = por %p74, %p75
      %p77 = scmp.ne.s32.totalorder %s66, %s67
      %p78 = scmp.eq.s32.totalorder %s32, 0
      %p79 = por %p77, %p78
      %p80 = scmp.ne.s32.totalorder %s66, %s67
      %p81 = scmp.eq.s32.totalorder %s33, 1
      %p82 = por %p80, %p81
      %p84 = scmp.ne.s32.totalorder %s67, %s83
      %p85 = scmp.eq.s32.totalorder %s33, 0
      %p86 = por %p84, %p85
      %s87 = ssub.s32 %s27, %s34
      %p88 = scmp.eq.s32.totalorder %s87, 0
      %s90 = sadd.s32 %s89, 1
      %s91 = scalar_select %p88, %s89, %s90
      %p94 = pneg %p88
      %p95 = scmp.eq.s32.totalorder %s27, 1
      %p96 = por %p94, %p95
      %p97 = scmp.ne.s32.totalorder %s89, %s92
      %p98 = scmp.eq.s32.totalorder %s27, 0
      %p99 = por %p97, %p98
      %p100 = scmp.ne.s32.totalorder %s89, %s92
      %p101 = scmp.eq.s32.totalorder %s32, 1
      %p102 = por %p100, %p101
      %p103 = scmp.ne.s32.totalorder %s92, %s93
      %p104 = scmp.eq.s32.totalorder %s32, 0
      %p105 = por %p103, %p104
      %p106 = scmp.ne.s32.totalorder %s92, %s93
      %p107 = scmp.eq.s32.totalorder %s33, 1
      %p108 = por %p106, %p107
      %p110 = scmp.ne.s32.totalorder %s93, %s109
      %p111 = scmp.eq.s32.totalorder %s33, 0
      %p112 = por %p110, %p111
      %s113 = ssub.s32 %s27, %s34
      %p114 = scmp.eq.s32.totalorder %s113, 0
      %s116 = sadd.s32 %s115, 1
      %s117 = scalar_select %p114, %s115, %s116
      %p120 = pneg %p114
      %p121 = scmp.eq.s32.totalorder %s27, 1
      %p122 = por %p120, %p121
      %p123 = scmp.ne.s32.totalorder %s115, %s118
      %p124 = scmp.eq.s32.totalorder %s27, 0
      %p125 = por %p123, %p124
      %p126 = scmp.ne.s32.totalorder %s115, %s118
      %p127 = scmp.eq.s32.totalorder %s32, 1
      %p128 = por %p126, %p127
      %p129 = scmp.ne.s32.totalorder %s118, %s119
      %p130 = scmp.eq.s32.totalorder %s32, 0
      %p131 = por %p129, %p130
      %p132 = scmp.ne.s32.totalorder %s118, %s119
      %p133 = scmp.eq.s32.totalorder %s33, 1
      %p134 = por %p132, %p133
      %p136 = scmp.ne.s32.totalorder %s119, %s135
      %p137 = scmp.eq.s32.totalorder %s33, 0
      %p138 = por %p136, %p137
      %s140 = sadd.s32 %s139, 1
      %p143 = scmp.eq.s32.totalorder %s27, 1
      %p144 = scmp.ne.s32.totalorder %s139, %s141
      %p145 = scmp.eq.s32.totalorder %s27, 0
      %p146 = por %p144, %p145
      %p147 = scmp.ne.s32.totalorder %s139, %s141
      %p148 = scmp.eq.s32.totalorder %s32, 1
      %p149 = por %p147, %p148
      %p150 = scmp.ne.s32.totalorder %s141, %s142
      %p151 = scmp.eq.s32.totalorder %s32, 0
      %p152 = por %p150, %p151
      %p153 = scmp.ne.s32.totalorder %s141, %s142
      %p154 = scmp.eq.s32.totalorder %s33, 1
      %p155 = por %p153, %p154
      %p157 = scmp.ne.s32.totalorder %s142, %s156
      %p158 = scmp.eq.s32.totalorder %s33, 0
      %p159 = por %p157, %p158
      %s161 = sadd.s32 %s160, 1
      %p164 = scmp.eq.s32.totalorder %s27, 1
      %p165 = scmp.ne.s32.totalorder %s160, %s162
      %p166 = scmp.eq.s32.totalorder %s27, 0
      %p167 = por %p165, %p166
      %p168 = scmp.ne.s32.totalorder %s160, %s162
      %p169 = scmp.eq.s32.totalorder %s32, 1
      %p170 = por %p168, %p169
      %p171 = scmp.ne.s32.totalorder %s162, %s163
      %p172 = scmp.eq.s32.totalorder %s32, 0
      %p173 = por %p171, %p172
      %p174 = scmp.ne.s32.totalorder %s162, %s163
      %p175 = scmp.eq.s32.totalorder %s33, 1
      %p176 = por %p174, %p175
      %p178 = scmp.ne.s32.totalorder %s163, %s177
      %p179 = scmp.eq.s32.totalorder %s33, 0
      %p180 = por %p178, %p179
      %s182 = sadd.s32 %s181, 1
      %p185 = scmp.eq.s32.totalorder %s27, 1
      %p186 = scmp.ne.s32.totalorder %s181, %s183
      %p187 = scmp.eq.s32.totalorder %s27, 0
      %p188 = por %p186, %p187
      %p189 = scmp.ne.s32.totalorder %s181, %s183
      %p190 = scmp.eq.s32.totalorder %s32, 1
      %p191 = por %p189, %p190
      %p192 = scmp.ne.s32.totalorder %s183, %s184
      %p193 = scmp.eq.s32.totalorder %s32, 0
      %p194 = por %p192, %p193
      %p195 = scmp.ne.s32.totalorder %s183, %s184
      %p196 = scmp.eq.s32.totalorder %s33, 1
      %p197 = por %p195, %p196
      %p199 = scmp.ne.s32.totalorder %s184, %s198
      %p200 = scmp.eq.s32.totalorder %s33, 0
      %p201 = por %p199, %p200
      %s203 = sadd.s32 %s202, 1
      %p206 = scmp.eq.s32.totalorder %s27, 1
      %p207 = scmp.ne.s32.totalorder %s202, %s204
      %p208 = scmp.eq.s32.totalorder %s27, 0
      %p209 = por %p207, %p208
      %p210 = scmp.ne.s32.totalorder %s202, %s204
      %p211 = scmp.eq.s32.totalorder %s32, 1
      %p212 = por %p210, %p211
      %p213 = scmp.ne.s32.totalorder %s204, %s205
      %p214 = scmp.eq.s32.totalorder %s32, 0
      %p215 = por %p213, %p214
      %p216 = scmp.ne.s32.totalorder %s204, %s205
      %p217 = scmp.eq.s32.totalorder %s33, 1
      %p218 = por %p216, %p217
      %p220 = scmp.ne.s32.totalorder %s205, %s219
      %p221 = scmp.eq.s32.totalorder %s33, 0
      %p222 = por %p220, %p221
      %s224 = sadd.s32 %s223, 1
      %p227 = scmp.eq.s32.totalorder %s27, 1
      %p228 = scmp.ne.s32.totalorder %s223, %s225
      %p229 = scmp.eq.s32.totalorder %s27, 0
      %p230 = por %p228, %p229
      %p231 = scmp.ne.s32.totalorder %s223, %s225
      %p232 = scmp.eq.s32.totalorder %s32, 1
      %p233 = por %p231, %p232
      %p234 = scmp.ne.s32.totalorder %s225, %s226
      %p235 = scmp.eq.s32.totalorder %s32, 0
      %p236 = por %p234, %p235
      %p237 = scmp.ne.s32.totalorder %s225, %s226
      %p238 = scmp.eq.s32.totalorder %s33, 1
      %p239 = por %p237, %p238
      %p241 = scmp.ne.s32.totalorder %s226, %s240
      %p242 = scmp.eq.s32.totalorder %s33, 0
      %p243 = por %p241, %p242
      %s245 = sadd.s32 %s244, 1
      %p248 = scmp.eq.s32.totalorder %s27, 1
      %p249 = scmp.ne.s32.totalorder %s244, %s246
      %p250 = scmp.eq.s32.totalorder %s27, 0
      %p251 = por %p249, %p250
      %p252 = scmp.ne.s32.totalorder %s244, %s246
      %p253 = scmp.eq.s32.totalorder %s32, 1
      %p254 = por %p252, %p253
      %p255 = scmp.ne.s32.totalorder %s246, %s247
      %p256 = scmp.eq.s32.totalorder %s32, 0
      %p257 = por %p255, %p256
      %p258 = scmp.ne.s32.totalorder %s246, %s247
      %p259 = scmp.eq.s32.totalorder %s33, 1
      %p260 = por %p258, %p259
      %p262 = scmp.ne.s32.totalorder %s247, %s261
      %p263 = scmp.eq.s32.totalorder %s33, 0
      %p264 = por %p262, %p263
      %s266 = sadd.s32 %s265, 1
      %p269 = scmp.eq.s32.totalorder %s27, 1
      %p270 = scmp.ne.s32.totalorder %s265, %s267
      %p271 = scmp.eq.s32.totalorder %s27, 0
      %p272 = por %p270, %p271
      %p273 = scmp.ne.s32.totalorder %s265, %s267
      %p274 = scmp.eq.s32.totalorder %s32, 1
      %p275 = por %p273, %p274
      %p276 = scmp.ne.s32.totalorder %s267, %s268
      %p277 = scmp.eq.s32.totalorder %s32, 0
      %p278 = por %p276, %p277
      %p279 = scmp.ne.s32.totalorder %s267, %s268
      %p280 = scmp.eq.s32.totalorder %s33, 1
      %p281 = por %p279, %p280
      %p283 = scmp.ne.s32.totalorder %s268, %s282
      %p284 = scmp.eq.s32.totalorder %s33, 0
      %p285 = por %p283, %p284
      %s287 = sadd.s32 %s286, 1
      %p290 = scmp.eq.s32.totalorder %s27, 1
      %p291 = scmp.ne.s32.totalorder %s286, %s288
      %p292 = scmp.eq.s32.totalorder %s27, 0
      %p293 = por %p291, %p292
      %p294 = scmp.ne.s32.totalorder %s286, %s288
      %p295 = scmp.eq.s32.totalorder %s32, 1
      %p296 = por %p294, %p295
      %p297 = scmp.ne.s32.totalorder %s288, %s289
      %p298 = scmp.eq.s32.totalorder %s32, 0
      %p299 = por %p297, %p298
      %p300 = scmp.ne.s32.totalorder %s288, %s289
      %p301 = scmp.eq.s32.totalorder %s33, 1
      %p302 = por %p300, %p301
      %p304 = scmp.ne.s32.totalorder %s289, %s303
      %p305 = scmp.eq.s32.totalorder %s33, 0
      %p306 = por %p304, %p305
      %s307 = ssub.s32 %s27, %s34
      %p308 = scmp.eq.s32.totalorder %s307, 0
      %s310 = sadd.s32 %s309, 1
      %s311 = scalar_select %p308, %s309, %s310
      %p314 = pneg %p308
      %p315 = scmp.eq.s32.totalorder %s27, 1
      %p316 = por %p314, %p315
      %p317 = scmp.ne.s32.totalorder %s309, %s312
      %p318 = scmp.eq.s32.totalorder %s27, 0
      %p319 = por %p317, %p318
      %p320 = scmp.ne.s32.totalorder %s309, %s312
      %p321 = scmp.eq.s32.totalorder %s32, 1
      %p322 = por %p320, %p321
      %p323 = scmp.ne.s32.totalorder %s312, %s313
      %p324 = scmp.eq.s32.totalorder %s32, 0
      %p325 = por %p323, %p324
      %p326 = scmp.ne.s32.totalorder %s312, %s313
      %p327 = scmp.eq.s32.totalorder %s33, 1
      %p328 = por %p326, %p327
      %p330 = scmp.ne.s32.totalorder %s313, %s329
      %p331 = scmp.eq.s32.totalorder %s33, 0
      %p332 = por %p330, %p331
      %p333 = scmp.le.s32.totalorder 1, %s27
      %p334 = scmp.lt.s32.totalorder %s27, 3
      %p335 = pnand %p333, %p334
      %p336 = pneg %p335
      // Predicated region
      $region9: #{discriminator_forward.3} parent=5 // pred_check
        _
      $region10: #{discriminator_forward.3} parent=5 // pred_check_branch
        %338 = sbr.rel (%p335) target = $region12
      $region11: #{discriminator_forward.3} parent=5 // pred_region
        %s339 = ssub.s32 %s27, 1
        // Predicated region
        $region13: #{discriminator_forward.3} parent=11 // pred_check
          %p340 = pneg %p152
        $region14: #{discriminator_forward.3} parent=11 // pred_check_branch
          %342 = sbr.rel (%p340) target = $region16
        $region15: #{discriminator_forward.3} parent=11 // pred_region
          %344 = vsyncadd [#allocation6], 0
          %s345 = sshll.u32 %s4, 4
          %s346 = int_to_ptr.hbm [resolvable:$true] %s345
          %s347 = sshll.u32 [#allocation5], 4
          %s348 = int_to_ptr.vmem [resolvable:$true] %s347
          %353 = dma.hbm_to_vmem [thread:$0]  %s346, 50176, %s348, [#allocation6], 512, 512, 32
        $region16: #{discriminator_forward.3} parent=11 // pred_fallthru
          _
        // Predicated region
        $region17: #{discriminator_forward.3} parent=11 // pred_check
          %p354 = pneg %p173
        $region18: #{discriminator_forward.3} parent=11 // pred_check_branch
          %356 = sbr.rel (%p354) target = $region20
        $region19: #{discriminator_forward.3} parent=11 // pred_region
          %358 = vsyncadd [#allocation6], 0
          %s360 = sshll.u32 %s5, 4
          %s361 = int_to_ptr.hbm [resolvable:$true] %s360
          %s362 = sshll.u32 [#allocation7], 4
          %s363 = int_to_ptr.vmem [resolvable:$true] %s362
          %365 = dma.hbm_to_vmem [thread:$0]  %s361, 128, %s363, [#allocation6]
        $region20: #{discriminator_forward.3} parent=11 // pred_fallthru
          _
        // Predicated region
        $region21: #{discriminator_forward.3} parent=11 // pred_check
          %p366 = pneg %p194
        $region22: #{discriminator_forward.3} parent=11 // pred_check_branch
          %368 = sbr.rel (%p366) target = $region24
        $region23: #{discriminator_forward.3} parent=11 // pred_region
          %370 = vsyncadd [#allocation9], 0
          %s371 = sshll.u32 %s6, 4
          %s372 = int_to_ptr.hbm [resolvable:$true] %s371
          %s373 = sshll.u32 [#allocation8], 4
          %s374 = int_to_ptr.vmem [resolvable:$true] %s373
          %379 = dma.hbm_to_vmem [thread:$0]  %s372, 32768, %s374, [#allocation9], 256, 256, 16
        $region24: #{discriminator_forward.3} parent=11 // pred_fallthru
          _
        // Predicated region
        $region25: #{discriminator_forward.3} parent=11 // pred_check
          %p380 = pneg %p215
        $region26: #{discriminator_forward.3} parent=11 // pred_check_branch
          %382 = sbr.rel (%p380) target = $region28
        $region27: #{discriminator_forward.3} parent=11 // pred_region
          %384 = vsyncadd [#allocation9], 0
          %s386 = sshll.u32 %s7, 4
          %s387 = int_to_ptr.hbm [resolvable:$true] %s386
          %s388 = sshll.u32 [#allocation10], 4
          %s389 = int_to_ptr.vmem [resolvable:$true] %s388
          %391 = dma.hbm_to_vmem [thread:$0]  %s387, 64, %s389, [#allocation9]
        $region28: #{discriminator_forward.3} parent=11 // pred_fallthru
          _
        // Predicated region
        $region29: #{discriminator_forward.3} parent=11 // pred_check
          %p392 = pneg %p236
        $region30: #{discriminator_forward.3} parent=11 // pred_check_branch
          %394 = sbr.rel (%p392) target = $region32
        $region31: #{discriminator_forward.3} parent=11 // pred_region
          %396 = vsyncadd [#allocation12], 0
          %s397 = sshll.u32 %s8, 4
          %s398 = int_to_ptr.hbm [resolvable:$true] %s397
          %s399 = sshll.u32 [#allocation11], 4
          %s400 = int_to_ptr.vmem [resolvable:$true] %s399
          %405 = dma.hbm_to_vmem [thread:$0]  %s398, 8192, %s400, [#allocation12], 128, 128, 8
        $region32: #{discriminator_forward.3} parent=11 // pred_fallthru
          _
        // Predicated region
        $region33: #{discriminator_forward.3} parent=11 // pred_check
          %p406 = pneg %p257
        $region34: #{discriminator_forward.3} parent=11 // pred_check_branch
          %408 = sbr.rel (%p406) target = $region36
        $region35: #{discriminator_forward.3} parent=11 // pred_region
          %410 = vsyncadd [#allocation12], 0
          %s412 = sshll.u32 %s9, 4
          %s413 = int_to_ptr.hbm [resolvable:$true] %s412
          %s414 = sshll.u32 [#allocation13], 4
          %s415 = int_to_ptr.vmem [resolvable:$true] %s414
          %417 = dma.hbm_to_vmem [thread:$0]  %s413, 32, %s415, [#allocation12]
        $region36: #{discriminator_forward.3} parent=11 // pred_fallthru
          _
        // Predicated region
        $region37: #{discriminator_forward.3} parent=11 // pred_check
          %p418 = pneg %p278
        $region38: #{discriminator_forward.3} parent=11 // pred_check_branch
          %420 = sbr.rel (%p418) target = $region40
        $region39: #{discriminator_forward.3} parent=11 // pred_region
          %422 = vsyncadd [#allocation15], 0
          %s424 = sshll.u32 %s10, 4
          %s425 = int_to_ptr.hbm [resolvable:$true] %s424
          %s426 = sshll.u32 [#allocation14], 4
          %s427 = int_to_ptr.vmem [resolvable:$true] %s426
          %429 = dma.hbm_to_vmem [thread:$0]  %s425, 32, %s427, [#allocation15]
        $region40: #{discriminator_forward.3} parent=11 // pred_fallthru
          _
        // Predicated region
        $region41: #{discriminator_forward.3} parent=11 // pred_check
          %p430 = pneg %p299
        $region42: #{discriminator_forward.3} parent=11 // pred_check_branch
          %432 = sbr.rel (%p430) target = $region44
        $region43: #{discriminator_forward.3} parent=11 // pred_region
          _
        $region44: #{discriminator_forward.3} parent=11 // pred_fallthru
          _
      $region12: #{discriminator_forward.3} parent=5 // pred_fallthru
        _
      %p433 = scmp.lt.s32.totalorder %s27, 2
      // Predicated region
      $region45: #{discriminator_forward.3} parent=5 // pred_check
        %p434 = pneg %p433
      $region46: #{discriminator_forward.3} parent=5 // pred_check_branch
        %436 = sbr.rel (%p434) target = $region48
      $region47: #{discriminator_forward.3} parent=5 // pred_region
        // Predicated region
        $region49: #{discriminator_forward.3} parent=47 // pred_check
          %p437 = pneg %p47
        $region50: #{discriminator_forward.3} parent=47 // pred_check_branch
          %439 = sbr.rel (%p437) target = $region52
        $region51: #{discriminator_forward.3} parent=47 // pred_region
          %s440 = sand.u32 %s37, 1
          %s441 = scalar_lea.sflag [#allocation4], %s440
          %s442 = sand.u32 %s37, 1
          %s443 = smul.addr %s442, 112
          %s444 = scalar_lea.vmem [#allocation3], %s443
          %s445 = smul.u32 2, %s27
          %447 = vsyncadd %s441, 0
          %s448 = smul.addr %s445, 7
          %s449 = smul.addr %s448, 8
          %s450 = scalar_lea.hbm %s0, %s449
          %s451 = sshll.u32 %s450, 4
          %s452 = int_to_ptr.hbm [resolvable:$true] %s451
          %s453 = sshll.u32 %s444, 4
          %s454 = int_to_ptr.vmem [resolvable:$true] %s453
          %459 = dma.hbm_to_vmem [thread:$0]  %s452, 1792, %s454, %s441, 896, 896, 56
        $region52: #{discriminator_forward.3} parent=47 // pred_fallthru
          _
        // Predicated region
        $region53: #{discriminator_forward.3} parent=47 // pred_check
          %p460 = pneg %p73
        $region54: #{discriminator_forward.3} parent=47 // pred_check_branch
          %462 = sbr.rel (%p460) target = $region56
        $region55: #{discriminator_forward.3} parent=47 // pred_region
          %s463 = smul.u32 2, %s27
          %p464 = scmp.lt.s32.totalorder %s463, 3
          %s465 = scalar_select %p464, %s463, 3
          %s466 = smul.addr %s465, 8
          %s467 = smul.addr %s466, 4
          %s468 = scalar_lea.vmem %s1, %s467
          %s469 = smul.u32 2, %s27
        $region56: #{discriminator_forward.3} parent=47 // pred_fallthru
          _
        // Predicated region
        $region57: #{discriminator_forward.3} parent=47 // pred_check
          %p470 = pneg %p99
        $region58: #{discriminator_forward.3} parent=47 // pred_check_branch
          %472 = sbr.rel (%p470) target = $region60
        $region59: #{discriminator_forward.3} parent=47 // pred_region
          %s473 = smul.u32 2, %s27
          %p474 = scmp.lt.s32.totalorder %s473, 3
          %s475 = scalar_select %p474, %s473, 3
          %s476 = smul.addr %s475, 4
          %s477 = smul.addr %s476, 4
          %s478 = scalar_lea.vmem %s2, %s477
          %s479 = smul.u32 2, %s27
        $region60: #{discriminator_forward.3} parent=47 // pred_fallthru
          _
        // Predicated region
        $region61: #{discriminator_forward.3} parent=47 // pred_check
          %p480 = pneg %p125
        $region62: #{discriminator_forward.3} parent=47 // pred_check_branch
          %482 = sbr.rel (%p480) target = $region64
        $region63: #{discriminator_forward.3} parent=47 // pred_region
          %s483 = smul.u32 2, %s27
          %p484 = scmp.lt.s32.totalorder %s483, 3
          %s485 = scalar_select %p484, %s483, 3
          %s486 = smul.addr %s485, 2
          %s487 = smul.addr %s486, 4
          %s488 = scalar_lea.vmem %s3, %s487
          %s489 = smul.u32 2, %s27
        $region64: #{discriminator_forward.3} parent=47 // pred_fallthru
          _
      $region48: #{discriminator_forward.3} parent=5 // pred_fallthru
        _
      %p490 = scmp.le.s32.totalorder 1, %s27
      %p491 = scmp.lt.s32.totalorder %s27, 3
      %p492 = pnand %p490, %p491
      %p493 = pneg %p492
      // Predicated region
      $region65: #{discriminator_forward.3} parent=5 // pred_check
        _
      $region66: #{discriminator_forward.3} parent=5 // pred_check_branch
        %495 = sbr.rel (%p492) target = $region68
      $region67: #{discriminator_forward.3} parent=5 // pred_region
        %s496 = ssub.s32 %s27, 1
        %s497 = sand.u32 %s40, 1
        %s498 = scalar_lea.sflag [#allocation4], %s497
        %s499 = sand.u32 %s40, 1
        %s500 = smul.addr %s499, 112
        %s501 = scalar_lea.vmem [#allocation3], %s500
        // Predicated region
        $region69: #{discriminator_forward.3} parent=67 // pred_check
          %p502 = pneg %p53
        $region70: #{discriminator_forward.3} parent=67 // pred_check_branch
          %504 = sbr.rel (%p502) target = $region72
        $region71: #{discriminator_forward.3} parent=67 // pred_region
          %506 = dma.done %s498, 1792
        $region72: #{discriminator_forward.3} parent=67 // pred_fallthru
          _
        // Predicated region
        $region73: #{discriminator_forward.3} parent=67 // pred_check
          %p507 = pneg %p152
        $region74: #{discriminator_forward.3} parent=67 // pred_check_branch
          %509 = sbr.rel (%p507) target = $region76
        $region75: #{discriminator_forward.3} parent=67 // pred_region
          %511 = dma.done [#allocation6], 50176
        $region76: #{discriminator_forward.3} parent=67 // pred_fallthru
          _
        // Predicated region
        $region77: #{discriminator_forward.3} parent=67 // pred_check
          %p512 = pneg %p173
        $region78: #{discriminator_forward.3} parent=67 // pred_check_branch
          %514 = sbr.rel (%p512) target = $region80
        $region79: #{discriminator_forward.3} parent=67 // pred_region
          %516 = dma.done [#allocation6], 128
        $region80: #{discriminator_forward.3} parent=67 // pred_fallthru
          _
        // Predicated region
        $region81: #{discriminator_forward.3} parent=67 // pred_check
          %p517 = pneg %p194
        $region82: #{discriminator_forward.3} parent=67 // pred_check_branch
          %519 = sbr.rel (%p517) target = $region84
        $region83: #{discriminator_forward.3} parent=67 // pred_region
          %521 = dma.done [#allocation9], 32768
        $region84: #{discriminator_forward.3} parent=67 // pred_fallthru
          _
        // Predicated region
        $region85: #{discriminator_forward.3} parent=67 // pred_check
          %p522 = pneg %p215
        $region86: #{discriminator_forward.3} parent=67 // pred_check_branch
          %524 = sbr.rel (%p522) target = $region88
        $region87: #{discriminator_forward.3} parent=67 // pred_region
          %526 = dma.done [#allocation9], 64
        $region88: #{discriminator_forward.3} parent=67 // pred_fallthru
          _
        // Predicated region
        $region89: #{discriminator_forward.3} parent=67 // pred_check
          %p527 = pneg %p236
        $region90: #{discriminator_forward.3} parent=67 // pred_check_branch
          %529 = sbr.rel (%p527) target = $region92
        $region91: #{discriminator_forward.3} parent=67 // pred_region
          %531 = dma.done [#allocation12], 8192
        $region92: #{discriminator_forward.3} parent=67 // pred_fallthru
          _
        // Predicated region
        $region93: #{discriminator_forward.3} parent=67 // pred_check
          %p532 = pneg %p257
        $region94: #{discriminator_forward.3} parent=67 // pred_check_branch
          %534 = sbr.rel (%p532) target = $region96
        $region95: #{discriminator_forward.3} parent=67 // pred_region
          %536 = dma.done [#allocation12], 32
        $region96: #{discriminator_forward.3} parent=67 // pred_fallthru
          _
        // Predicated region
        $region97: #{discriminator_forward.3} parent=67 // pred_check
          %p537 = pneg %p278
        $region98: #{discriminator_forward.3} parent=67 // pred_check_branch
          %539 = sbr.rel (%p537) target = $region100
        $region99: #{discriminator_forward.3} parent=67 // pred_region
          %541 = dma.done [#allocation15], 32
        $region100: #{discriminator_forward.3} parent=67 // pred_fallthru
          _
        %s542 = sand.u32 %s40, 1
        %s543 = scalar_lea.sflag [#allocation4], %s542
        %s544 = sand.u32 %s40, 1
        %s545 = smul.addr %s544, 112
        %s546 = scalar_lea.vmem [#allocation3], %s545
        %p547 = pneg %p53
        %p548 = pneg %p50
        %s549 = smul.u32 2, %s32
        %p550 = scmp.lt.s32.totalorder %s549, 3
        %s551 = scalar_select %p550, %s549, 3
        %s552 = smul.addr %s551, 8
        %s553 = smul.addr %s552, 4
        %s554 = scalar_lea.vmem %s1, %s553
        %p555 = pneg %p79
        %p556 = pneg %p76
        %s557 = smul.u32 2, %s32
        %p558 = scmp.lt.s32.totalorder %s557, 3
        %s559 = scalar_select %p558, %s557, 3
        %s560 = smul.addr %s559, 4
        %s561 = smul.addr %s560, 4
        %s562 = scalar_lea.vmem %s2, %s561
        %p563 = pneg %p105
        %p564 = pneg %p102
        %s565 = smul.u32 2, %s32
        %p566 = scmp.lt.s32.totalorder %s565, 3
        %s567 = scalar_select %p566, %s565, 3
        %s568 = smul.addr %s567, 2
        %s569 = smul.addr %s568, 4
        %s570 = scalar_lea.vmem %s3, %s569
        %p571 = pneg %p131
        %p572 = pneg %p128
        %p573 = pneg %p152
        %p574 = pneg %p149
        %p575 = pneg %p173
        %p576 = pneg %p170
        %p577 = pneg %p194
        %p578 = pneg %p191
        %p579 = pneg %p215
        %p580 = pneg %p212
        %p581 = pneg %p236
        %p582 = pneg %p233
        %p583 = pneg %p257
        %p584 = pneg %p254
        %p585 = pneg %p278
        %p586 = pneg %p275
        %p587 = pneg %p299
        %p588 = pneg %p296
        %p589 = pneg %p325
        %p590 = pneg %p322
        %s591 = smul.u32 2, %s32
        %p592 = scmp.lt.s32.totalorder %s591, 3
        %s593 = scalar_select %p592, %s591, 3
        %s594 = smul.addr %s593, 8
        %s595 = scalar_lea.vmem %s12, %s594
        %s596 = smul.u32 2, %s32
        %s597 = smul.u32 2, %s32
        %p598 = scmp.lt.s32.totalorder %s597, 3
        %s599 = scalar_select %p598, %s597, 3
        %s600 = smul.addr %s599, 8
        %s601 = smul.addr %s600, 4
        %s602 = scalar_lea.vmem %s1, %s601
        %s603 = smul.u32 2, %s32
        %s604 = smul.u32 2, %s32
        %p605 = scmp.lt.s32.totalorder %s604, 3
        %s606 = scalar_select %p605, %s604, 3
        %s607 = smul.addr %s606, 4
        %s608 = smul.addr %s607, 4
        %s609 = scalar_lea.vmem %s2, %s608
        %s610 = smul.u32 2, %s32
        %s611 = smul.u32 2, %s32
        %p612 = scmp.lt.s32.totalorder %s611, 3
        %s613 = scalar_select %p612, %s611, 3
        %s614 = smul.addr %s613, 2
        %s615 = smul.addr %s614, 4
        %s616 = scalar_lea.vmem %s3, %s615
        %s617 = smul.u32 2, %s32
        %s618 = smul.u32 2, %s32
        %p619 = scmp.lt.s32.totalorder %s618, 3
        %s620 = scalar_select %p619, %s618, 3
        %s621 = smul.addr %s620, 8
        %s622 = scalar_lea.vmem %s12, %s621
        %s623 = smul.u32 2, %s32
        %v625 = vld [vmem:[%s501] sm:$0xff]
        %v626 = vld [vmem:[%s501 + $0x8] sm:$0xff]
        %v627 = vld [vmem:[%s501 + $0x10] sm:$0xff]
        %v628 = vld [vmem:[%s501 + $0x18] sm:$0xff]
        %v629 = vld [vmem:[%s501 + $0x20] sm:$0xff]
        %v630 = vld [vmem:[%s501 + $0x28] sm:$0xff]
        %v631 = vld [vmem:[%s501 + $0x30] sm:$0xff]
        %v632 = vld [vmem:[%s501 + $0x38] sm:$0xff]
        %v633 = vld [vmem:[%s501 + $0x40] sm:$0xff]
        %v634 = vld [vmem:[%s501 + $0x48] sm:$0xff]
        %v635 = vld [vmem:[%s501 + $0x50] sm:$0xff]
        %v636 = vld [vmem:[%s501 + $0x58] sm:$0xff]
        %v637 = vld [vmem:[%s501 + $0x60] sm:$0xff]
        %v638 = vld [vmem:[%s501 + $0x68] sm:$0xff]
        %v639 = vpack.c.bf16 %v632, %v625
        %v640 = vpack.c.bf16 %v633, %v626
        %v641 = vpack.c.bf16 %v634, %v627
        %v642 = vpack.c.bf16 %v635, %v628
        %v643 = vpack.c.bf16 %v636, %v629
        %v644 = vpack.c.bf16 %v637, %v630
        %v645 = vpack.c.bf16 %v638, %v631
        %v646 = vld [vmem:[#allocation5] sm:$0xff]
        %v647 = vld [vmem:[#allocation5 + $0x8] sm:$0xff]
        %v648 = vld [vmem:[#allocation5 + $0x10] sm:$0xff]
        %v649 = vld [vmem:[#allocation5 + $0x18] sm:$0xff]
        %v650 = vld [vmem:[#allocation5 + $0x20] sm:$0xff]
        %v651 = vld [vmem:[#allocation5 + $0x28] sm:$0xff]
        %v652 = vld [vmem:[#allocation5 + $0x30] sm:$0xff]
        %v653 = vld [vmem:[#allocation5 + $0x38] sm:$0xff]
        %v654 = vld [vmem:[#allocation5 + $0x40] sm:$0xff]
        %v655 = vld [vmem:[#allocation5 + $0x48] sm:$0xff]
        %v656 = vld [vmem:[#allocation5 + $0x50] sm:$0xff]
        %v657 = vld [vmem:[#allocation5 + $0x58] sm:$0xff]
        %v658 = vld [vmem:[#allocation5 + $0x60] sm:$0xff]
        %v659 = vld [vmem:[#allocation5 + $0x68] sm:$0xff]
        %v660 = vld [vmem:[#allocation5 + $0x70] sm:$0xff]
        %v661 = vld [vmem:[#allocation5 + $0x78] sm:$0xff]
        %v662 = vld [vmem:[#allocation5 + $0x80] sm:$0xff]
        %v663 = vld [vmem:[#allocation5 + $0x88] sm:$0xff]
        %v664 = vld [vmem:[#allocation5 + $0x90] sm:$0xff]
        %v665 = vld [vmem:[#allocation5 + $0x98] sm:$0xff]
        %v666 = vld [vmem:[#allocation5 + $0xa0] sm:$0xff]
        %v667 = vld [vmem:[#allocation5 + $0xa8] sm:$0xff]
        %v668 = vld [vmem:[#allocation5 + $0xb0] sm:$0xff]
        %v669 = vld [vmem:[#allocation5 + $0xb8] sm:$0xff]
        %v670 = vld [vmem:[#allocation5 + $0xc0] sm:$0xff]
        %v671 = vld [vmem:[#allocation5 + $0xc8] sm:$0xff]
        %v672 = vld [vmem:[#allocation5 + $0xd0] sm:$0xff]
        %v673 = vld [vmem:[#allocation5 + $0xd8] sm:$0xff]
        %v674 = vld [vmem:[#allocation5 + $0xe0] sm:$0xff]
        %v675 = vld [vmem:[#allocation5 + $0xe8] sm:$0xff]
        %v676 = vld [vmem:[#allocation5 + $0xf0] sm:$0xff]
        %v677 = vld [vmem:[#allocation5 + $0xf8] sm:$0xff]
        %v678 = vld [vmem:[#allocation5 + $0x100] sm:$0xff]
        %v679 = vld [vmem:[#allocation5 + $0x108] sm:$0xff]
        %v680 = vld [vmem:[#allocation5 + $0x110] sm:$0xff]
        %v681 = vld [vmem:[#allocation5 + $0x118] sm:$0xff]
        %v682 = vld [vmem:[#allocation5 + $0x120] sm:$0xff]
        %v683 = vld [vmem:[#allocation5 + $0x128] sm:$0xff]
        %v684 = vld [vmem:[#allocation5 + $0x130] sm:$0xff]
        %v685 = vld [vmem:[#allocation5 + $0x138] sm:$0xff]
        %v686 = vld [vmem:[#allocation5 + $0x140] sm:$0xff]
        %v687 = vld [vmem:[#allocation5 + $0x148] sm:$0xff]
        %v688 = vld [vmem:[#allocation5 + $0x150] sm:$0xff]
        %v689 = vld [vmem:[#allocation5 + $0x158] sm:$0xff]
        %v690 = vld [vmem:[#allocation5 + $0x160] sm:$0xff]
        %v691 = vld [vmem:[#allocation5 + $0x168] sm:$0xff]
        %v692 = vld [vmem:[#allocation5 + $0x170] sm:$0xff]
        %v693 = vld [vmem:[#allocation5 + $0x178] sm:$0xff]
        %v694 = vld [vmem:[#allocation5 + $0x180] sm:$0xff]
        %v695 = vld [vmem:[#allocation5 + $0x188] sm:$0xff]
        %v696 = vld [vmem:[#allocation5 + $0x190] sm:$0xff]
        %v697 = vld [vmem:[#allocation5 + $0x198] sm:$0xff]
        %v698 = vld [vmem:[#allocation5 + $0x1a0] sm:$0xff]
        %v699 = vld [vmem:[#allocation5 + $0x1a8] sm:$0xff]
        %v700 = vld [vmem:[#allocation5 + $0x1b0] sm:$0xff]
        %v701 = vld [vmem:[#allocation5 + $0x1b8] sm:$0xff]
        %v702 = vld [vmem:[#allocation5 + $0x1c0] sm:$0xff]
        %v703 = vld [vmem:[#allocation5 + $0x1c8] sm:$0xff]
        %v704 = vld [vmem:[#allocation5 + $0x1d0] sm:$0xff]
        %v705 = vld [vmem:[#allocation5 + $0x1d8] sm:$0xff]
        %v706 = vld [vmem:[#allocation5 + $0x1e0] sm:$0xff]
        %v707 = vld [vmem:[#allocation5 + $0x1e8] sm:$0xff]
        %v708 = vld [vmem:[#allocation5 + $0x1f0] sm:$0xff]
        %v709 = vld [vmem:[#allocation5 + $0x1f8] sm:$0xff]
        %v710 = vld [vmem:[#allocation5 + $0x200] sm:$0xff]
        %v711 = vld [vmem:[#allocation5 + $0x208] sm:$0xff]
        %v712 = vld [vmem:[#allocation5 + $0x210] sm:$0xff]
        %v713 = vld [vmem:[#allocation5 + $0x218] sm:$0xff]
        %v714 = vld [vmem:[#allocation5 + $0x220] sm:$0xff]
        %v715 = vld [vmem:[#allocation5 + $0x228] sm:$0xff]
        %v716 = vld [vmem:[#allocation5 + $0x230] sm:$0xff]
        %v717 = vld [vmem:[#allocation5 + $0x238] sm:$0xff]
        %v718 = vld [vmem:[#allocation5 + $0x240] sm:$0xff]
        %v719 = vld [vmem:[#allocation5 + $0x248] sm:$0xff]
        %v720 = vld [vmem:[#allocation5 + $0x250] sm:$0xff]
        %v721 = vld [vmem:[#allocation5 + $0x258] sm:$0xff]
        %v722 = vld [vmem:[#allocation5 + $0x260] sm:$0xff]
        %v723 = vld [vmem:[#allocation5 + $0x268] sm:$0xff]
        %v724 = vld [vmem:[#allocation5 + $0x270] sm:$0xff]
        %v725 = vld [vmem:[#allocation5 + $0x278] sm:$0xff]
        %v726 = vld [vmem:[#allocation5 + $0x280] sm:$0xff]
        %v727 = vld [vmem:[#allocation5 + $0x288] sm:$0xff]
        %v728 = vld [vmem:[#allocation5 + $0x290] sm:$0xff]
        %v729 = vld [vmem:[#allocation5 + $0x298] sm:$0xff]
        %v730 = vld [vmem:[#allocation5 + $0x2a0] sm:$0xff]
        %v731 = vld [vmem:[#allocation5 + $0x2a8] sm:$0xff]
        %v732 = vld [vmem:[#allocation5 + $0x2b0] sm:$0xff]
        %v733 = vld [vmem:[#allocation5 + $0x2b8] sm:$0xff]
        %v734 = vld [vmem:[#allocation5 + $0x2c0] sm:$0xff]
        %v735 = vld [vmem:[#allocation5 + $0x2c8] sm:$0xff]
        %v736 = vld [vmem:[#allocation5 + $0x2d0] sm:$0xff]
        %v737 = vld [vmem:[#allocation5 + $0x2d8] sm:$0xff]
        %v738 = vld [vmem:[#allocation5 + $0x2e0] sm:$0xff]
        %v739 = vld [vmem:[#allocation5 + $0x2e8] sm:$0xff]
        %v740 = vld [vmem:[#allocation5 + $0x2f0] sm:$0xff]
        %v741 = vld [vmem:[#allocation5 + $0x2f8] sm:$0xff]
        %v742 = vld [vmem:[#allocation5 + $0x300] sm:$0xff]
        %v743 = vld [vmem:[#allocation5 + $0x308] sm:$0xff]
        %v744 = vld [vmem:[#allocation5 + $0x310] sm:$0xff]
        %v745 = vld [vmem:[#allocation5 + $0x318] sm:$0xff]
        %v746 = vld [vmem:[#allocation5 + $0x320] sm:$0xff]
        %v747 = vld [vmem:[#allocation5 + $0x328] sm:$0xff]
        %v748 = vld [vmem:[#allocation5 + $0x330] sm:$0xff]
        %v749 = vld [vmem:[#allocation5 + $0x338] sm:$0xff]
        %v750 = vld [vmem:[#allocation5 + $0x340] sm:$0xff]
        %v751 = vld [vmem:[#allocation5 + $0x348] sm:$0xff]
        %v752 = vld [vmem:[#allocation5 + $0x350] sm:$0xff]
        %v753 = vld [vmem:[#allocation5 + $0x358] sm:$0xff]
        %v754 = vld [vmem:[#allocation5 + $0x360] sm:$0xff]
        %v755 = vld [vmem:[#allocation5 + $0x368] sm:$0xff]
        %v756 = vld [vmem:[#allocation5 + $0x370] sm:$0xff]
        %v757 = vld [vmem:[#allocation5 + $0x378] sm:$0xff]
        %v758 = vld [vmem:[#allocation5 + $0x380] sm:$0xff]
        %v759 = vld [vmem:[#allocation5 + $0x388] sm:$0xff]
        %v760 = vld [vmem:[#allocation5 + $0x390] sm:$0xff]
        %v761 = vld [vmem:[#allocation5 + $0x398] sm:$0xff]
        %v762 = vld [vmem:[#allocation5 + $0x3a0] sm:$0xff]
        %v763 = vld [vmem:[#allocation5 + $0x3a8] sm:$0xff]
        %v764 = vld [vmem:[#allocation5 + $0x3b0] sm:$0xff]
        %v765 = vld [vmem:[#allocation5 + $0x3b8] sm:$0xff]
        %v766 = vld [vmem:[#allocation5 + $0x3c0] sm:$0xff]
        %v767 = vld [vmem:[#allocation5 + $0x3c8] sm:$0xff]
        %v768 = vld [vmem:[#allocation5 + $0x3d0] sm:$0xff]
        %v769 = vld [vmem:[#allocation5 + $0x3d8] sm:$0xff]
        %v770 = vld [vmem:[#allocation5 + $0x3e0] sm:$0xff]
        %v771 = vld [vmem:[#allocation5 + $0x3e8] sm:$0xff]
        %v772 = vld [vmem:[#allocation5 + $0x3f0] sm:$0xff]
        %v773 = vld [vmem:[#allocation5 + $0x3f8] sm:$0xff]
        %v774 = vld [vmem:[#allocation5 + $0x400] sm:$0xff]
        %v775 = vld [vmem:[#allocation5 + $0x408] sm:$0xff]
        %v776 = vld [vmem:[#allocation5 + $0x410] sm:$0xff]
        %v777 = vld [vmem:[#allocation5 + $0x418] sm:$0xff]
        %v778 = vld [vmem:[#allocation5 + $0x420] sm:$0xff]
        %v779 = vld [vmem:[#allocation5 + $0x428] sm:$0xff]
        %v780 = vld [vmem:[#allocation5 + $0x430] sm:$0xff]
        %v781 = vld [vmem:[#allocation5 + $0x438] sm:$0xff]
        %v782 = vld [vmem:[#allocation5 + $0x440] sm:$0xff]
        %v783 = vld [vmem:[#allocation5 + $0x448] sm:$0xff]
        %v784 = vld [vmem:[#allocation5 + $0x450] sm:$0xff]
        %v785 = vld [vmem:[#allocation5 + $0x458] sm:$0xff]
        %v786 = vld [vmem:[#allocation5 + $0x460] sm:$0xff]
        %v787 = vld [vmem:[#allocation5 + $0x468] sm:$0xff]
        %v788 = vld [vmem:[#allocation5 + $0x470] sm:$0xff]
        %v789 = vld [vmem:[#allocation5 + $0x478] sm:$0xff]
        %v790 = vld [vmem:[#allocation5 + $0x480] sm:$0xff]
        %v791 = vld [vmem:[#allocation5 + $0x488] sm:$0xff]
        %v792 = vld [vmem:[#allocation5 + $0x490] sm:$0xff]
        %v793 = vld [vmem:[#allocation5 + $0x498] sm:$0xff]
        %v794 = vld [vmem:[#allocation5 + $0x4a0] sm:$0xff]
        %v795 = vld [vmem:[#allocation5 + $0x4a8] sm:$0xff]
        %v796 = vld [vmem:[#allocation5 + $0x4b0] sm:$0xff]
        %v797 = vld [vmem:[#allocation5 + $0x4b8] sm:$0xff]
        %v798 = vld [vmem:[#allocation5 + $0x4c0] sm:$0xff]
        %v799 = vld [vmem:[#allocation5 + $0x4c8] sm:$0xff]
        %v800 = vld [vmem:[#allocation5 + $0x4d0] sm:$0xff]
        %v801 = vld [vmem:[#allocation5 + $0x4d8] sm:$0xff]
        %v802 = vld [vmem:[#allocation5 + $0x4e0] sm:$0xff]
        %v803 = vld [vmem:[#allocation5 + $0x4e8] sm:$0xff]
        %v804 = vld [vmem:[#allocation5 + $0x4f0] sm:$0xff]
        %v805 = vld [vmem:[#allocation5 + $0x4f8] sm:$0xff]
        %v806 = vld [vmem:[#allocation5 + $0x500] sm:$0xff]
        %v807 = vld [vmem:[#allocation5 + $0x508] sm:$0xff]
        %v808 = vld [vmem:[#allocation5 + $0x510] sm:$0xff]
        %v809 = vld [vmem:[#allocation5 + $0x518] sm:$0xff]
        %v810 = vld [vmem:[#allocation5 + $0x520] sm:$0xff]
        %v811 = vld [vmem:[#allocation5 + $0x528] sm:$0xff]
        %v812 = vld [vmem:[#allocation5 + $0x530] sm:$0xff]
        %v813 = vld [vmem:[#allocation5 + $0x538] sm:$0xff]
        %v814 = vld [vmem:[#allocation5 + $0x540] sm:$0xff]
        %v815 = vld [vmem:[#allocation5 + $0x548] sm:$0xff]
        %v816 = vld [vmem:[#allocation5 + $0x550] sm:$0xff]
        %v817 = vld [vmem:[#allocation5 + $0x558] sm:$0xff]
        %v818 = vld [vmem:[#allocation5 + $0x560] sm:$0xff]
        %v819 = vld [vmem:[#allocation5 + $0x568] sm:$0xff]
        %v820 = vld [vmem:[#allocation5 + $0x570] sm:$0xff]
        %v821 = vld [vmem:[#allocation5 + $0x578] sm:$0xff]
        %v822 = vld [vmem:[#allocation5 + $0x580] sm:$0xff]
        %v823 = vld [vmem:[#allocation5 + $0x588] sm:$0xff]
        %v824 = vld [vmem:[#allocation5 + $0x590] sm:$0xff]
        %v825 = vld [vmem:[#allocation5 + $0x598] sm:$0xff]
        %v826 = vld [vmem:[#allocation5 + $0x5a0] sm:$0xff]
        %v827 = vld [vmem:[#allocation5 + $0x5a8] sm:$0xff]
        %v828 = vld [vmem:[#allocation5 + $0x5b0] sm:$0xff]
        %v829 = vld [vmem:[#allocation5 + $0x5b8] sm:$0xff]
        %v830 = vld [vmem:[#allocation5 + $0x5c0] sm:$0xff]
        %v831 = vld [vmem:[#allocation5 + $0x5c8] sm:$0xff]
        %v832 = vld [vmem:[#allocation5 + $0x5d0] sm:$0xff]
        %v833 = vld [vmem:[#allocation5 + $0x5d8] sm:$0xff]
        %v834 = vld [vmem:[#allocation5 + $0x5e0] sm:$0xff]
        %v835 = vld [vmem:[#allocation5 + $0x5e8] sm:$0xff]
        %v836 = vld [vmem:[#allocation5 + $0x5f0] sm:$0xff]
        %v837 = vld [vmem:[#allocation5 + $0x5f8] sm:$0xff]
        %v838 = vld [vmem:[#allocation5 + $0x600] sm:$0xff]
        %v839 = vld [vmem:[#allocation5 + $0x608] sm:$0xff]
        %v840 = vld [vmem:[#allocation5 + $0x610] sm:$0xff]
        %v841 = vld [vmem:[#allocation5 + $0x618] sm:$0xff]
        %v842 = vld [vmem:[#allocation5 + $0x620] sm:$0xff]
        %v843 = vld [vmem:[#allocation5 + $0x628] sm:$0xff]
        %v844 = vld [vmem:[#allocation5 + $0x630] sm:$0xff]
        %v845 = vld [vmem:[#allocation5 + $0x638] sm:$0xff]
        %v846 = vld [vmem:[#allocation5 + $0x640] sm:$0xff]
        %v847 = vld [vmem:[#allocation5 + $0x648] sm:$0xff]
        %v848 = vld [vmem:[#allocation5 + $0x650] sm:$0xff]
        %v849 = vld [vmem:[#allocation5 + $0x658] sm:$0xff]
        %v850 = vld [vmem:[#allocation5 + $0x660] sm:$0xff]
        %v851 = vld [vmem:[#allocation5 + $0x668] sm:$0xff]
        %v852 = vld [vmem:[#allocation5 + $0x670] sm:$0xff]
        %v853 = vld [vmem:[#allocation5 + $0x678] sm:$0xff]
        %v854 = vld [vmem:[#allocation5 + $0x680] sm:$0xff]
        %v855 = vld [vmem:[#allocation5 + $0x688] sm:$0xff]
        %v856 = vld [vmem:[#allocation5 + $0x690] sm:$0xff]
        %v857 = vld [vmem:[#allocation5 + $0x698] sm:$0xff]
        %v858 = vld [vmem:[#allocation5 + $0x6a0] sm:$0xff]
        %v859 = vld [vmem:[#allocation5 + $0x6a8] sm:$0xff]
        %v860 = vld [vmem:[#allocation5 + $0x6b0] sm:$0xff]
        %v861 = vld [vmem:[#allocation5 + $0x6b8] sm:$0xff]
        %v862 = vld [vmem:[#allocation5 + $0x6c0] sm:$0xff]
        %v863 = vld [vmem:[#allocation5 + $0x6c8] sm:$0xff]
        %v864 = vld [vmem:[#allocation5 + $0x6d0] sm:$0xff]
        %v865 = vld [vmem:[#allocation5 + $0x6d8] sm:$0xff]
        %v866 = vld [vmem:[#allocation5 + $0x6e0] sm:$0xff]
        %v867 = vld [vmem:[#allocation5 + $0x6e8] sm:$0xff]
        %v868 = vld [vmem:[#allocation5 + $0x6f0] sm:$0xff]
        %v869 = vld [vmem:[#allocation5 + $0x6f8] sm:$0xff]
        %v870 = vld [vmem:[#allocation5 + $0x700] sm:$0xff]
        %v871 = vld [vmem:[#allocation5 + $0x708] sm:$0xff]
        %v872 = vld [vmem:[#allocation5 + $0x710] sm:$0xff]
        %v873 = vld [vmem:[#allocation5 + $0x718] sm:$0xff]
        %v874 = vld [vmem:[#allocation5 + $0x720] sm:$0xff]
        %v875 = vld [vmem:[#allocation5 + $0x728] sm:$0xff]
        %v876 = vld [vmem:[#allocation5 + $0x730] sm:$0xff]
        %v877 = vld [vmem:[#allocation5 + $0x738] sm:$0xff]
        %v878 = vld [vmem:[#allocation5 + $0x740] sm:$0xff]
        %v879 = vld [vmem:[#allocation5 + $0x748] sm:$0xff]
        %v880 = vld [vmem:[#allocation5 + $0x750] sm:$0xff]
        %v881 = vld [vmem:[#allocation5 + $0x758] sm:$0xff]
        %v882 = vld [vmem:[#allocation5 + $0x760] sm:$0xff]
        %v883 = vld [vmem:[#allocation5 + $0x768] sm:$0xff]
        %v884 = vld [vmem:[#allocation5 + $0x770] sm:$0xff]
        %v885 = vld [vmem:[#allocation5 + $0x778] sm:$0xff]
        %v886 = vld [vmem:[#allocation5 + $0x780] sm:$0xff]
        %v887 = vld [vmem:[#allocation5 + $0x788] sm:$0xff]
        %v888 = vld [vmem:[#allocation5 + $0x790] sm:$0xff]
        %v889 = vld [vmem:[#allocation5 + $0x798] sm:$0xff]
        %v890 = vld [vmem:[#allocation5 + $0x7a0] sm:$0xff]
        %v891 = vld [vmem:[#allocation5 + $0x7a8] sm:$0xff]
        %v892 = vld [vmem:[#allocation5 + $0x7b0] sm:$0xff]
        %v893 = vld [vmem:[#allocation5 + $0x7b8] sm:$0xff]
        %v894 = vld [vmem:[#allocation5 + $0x7c0] sm:$0xff]
        %v895 = vld [vmem:[#allocation5 + $0x7c8] sm:$0xff]
        %v896 = vld [vmem:[#allocation5 + $0x7d0] sm:$0xff]
        %v897 = vld [vmem:[#allocation5 + $0x7d8] sm:$0xff]
        %v898 = vld [vmem:[#allocation5 + $0x7e0] sm:$0xff]
        %v899 = vld [vmem:[#allocation5 + $0x7e8] sm:$0xff]
        %v900 = vld [vmem:[#allocation5 + $0x7f0] sm:$0xff]
        %v901 = vld [vmem:[#allocation5 + $0x7f8] sm:$0xff]
        %v902 = vld [vmem:[#allocation5 + $0x800] sm:$0xff]
        %v903 = vld [vmem:[#allocation5 + $0x808] sm:$0xff]
        %v904 = vld [vmem:[#allocation5 + $0x810] sm:$0xff]
        %v905 = vld [vmem:[#allocation5 + $0x818] sm:$0xff]
        %v906 = vld [vmem:[#allocation5 + $0x820] sm:$0xff]
        %v907 = vld [vmem:[#allocation5 + $0x828] sm:$0xff]
        %v908 = vld [vmem:[#allocation5 + $0x830] sm:$0xff]
        %v909 = vld [vmem:[#allocation5 + $0x838] sm:$0xff]
        %v910 = vld [vmem:[#allocation5 + $0x840] sm:$0xff]
        %v911 = vld [vmem:[#allocation5 + $0x848] sm:$0xff]
        %v912 = vld [vmem:[#allocation5 + $0x850] sm:$0xff]
        %v913 = vld [vmem:[#allocation5 + $0x858] sm:$0xff]
        %v914 = vld [vmem:[#allocation5 + $0x860] sm:$0xff]
        %v915 = vld [vmem:[#allocation5 + $0x868] sm:$0xff]
        %v916 = vld [vmem:[#allocation5 + $0x870] sm:$0xff]
        %v917 = vld [vmem:[#allocation5 + $0x878] sm:$0xff]
        %v918 = vld [vmem:[#allocation5 + $0x880] sm:$0xff]
        %v919 = vld [vmem:[#allocation5 + $0x888] sm:$0xff]
        %v920 = vld [vmem:[#allocation5 + $0x890] sm:$0xff]
        %v921 = vld [vmem:[#allocation5 + $0x898] sm:$0xff]
        %v922 = vld [vmem:[#allocation5 + $0x8a0] sm:$0xff]
        %v923 = vld [vmem:[#allocation5 + $0x8a8] sm:$0xff]
        %v924 = vld [vmem:[#allocation5 + $0x8b0] sm:$0xff]
        %v925 = vld [vmem:[#allocation5 + $0x8b8] sm:$0xff]
        %v926 = vld [vmem:[#allocation5 + $0x8c0] sm:$0xff]
        %v927 = vld [vmem:[#allocation5 + $0x8c8] sm:$0xff]
        %v928 = vld [vmem:[#allocation5 + $0x8d0] sm:$0xff]
        %v929 = vld [vmem:[#allocation5 + $0x8d8] sm:$0xff]
        %v930 = vld [vmem:[#allocation5 + $0x8e0] sm:$0xff]
        %v931 = vld [vmem:[#allocation5 + $0x8e8] sm:$0xff]
        %v932 = vld [vmem:[#allocation5 + $0x8f0] sm:$0xff]
        %v933 = vld [vmem:[#allocation5 + $0x8f8] sm:$0xff]
        %v934 = vld [vmem:[#allocation5 + $0x900] sm:$0xff]
        %v935 = vld [vmem:[#allocation5 + $0x908] sm:$0xff]
        %v936 = vld [vmem:[#allocation5 + $0x910] sm:$0xff]
        %v937 = vld [vmem:[#allocation5 + $0x918] sm:$0xff]
        %v938 = vld [vmem:[#allocation5 + $0x920] sm:$0xff]
        %v939 = vld [vmem:[#allocation5 + $0x928] sm:$0xff]
        %v940 = vld [vmem:[#allocation5 + $0x930] sm:$0xff]
        %v941 = vld [vmem:[#allocation5 + $0x938] sm:$0xff]
        %v942 = vld [vmem:[#allocation5 + $0x940] sm:$0xff]
        %v943 = vld [vmem:[#allocation5 + $0x948] sm:$0xff]
        %v944 = vld [vmem:[#allocation5 + $0x950] sm:$0xff]
        %v945 = vld [vmem:[#allocation5 + $0x958] sm:$0xff]
        %v946 = vld [vmem:[#allocation5 + $0x960] sm:$0xff]
        %v947 = vld [vmem:[#allocation5 + $0x968] sm:$0xff]
        %v948 = vld [vmem:[#allocation5 + $0x970] sm:$0xff]
        %v949 = vld [vmem:[#allocation5 + $0x978] sm:$0xff]
        %v950 = vld [vmem:[#allocation5 + $0x980] sm:$0xff]
        %v951 = vld [vmem:[#allocation5 + $0x988] sm:$0xff]
        %v952 = vld [vmem:[#allocation5 + $0x990] sm:$0xff]
        %v953 = vld [vmem:[#allocation5 + $0x998] sm:$0xff]
        %v954 = vld [vmem:[#allocation5 + $0x9a0] sm:$0xff]
        %v955 = vld [vmem:[#allocation5 + $0x9a8] sm:$0xff]
        %v956 = vld [vmem:[#allocation5 + $0x9b0] sm:$0xff]
        %v957 = vld [vmem:[#allocation5 + $0x9b8] sm:$0xff]
        %v958 = vld [vmem:[#allocation5 + $0x9c0] sm:$0xff]
        %v959 = vld [vmem:[#allocation5 + $0x9c8] sm:$0xff]
        %v960 = vld [vmem:[#allocation5 + $0x9d0] sm:$0xff]
        %v961 = vld [vmem:[#allocation5 + $0x9d8] sm:$0xff]
        %v962 = vld [vmem:[#allocation5 + $0x9e0] sm:$0xff]
        %v963 = vld [vmem:[#allocation5 + $0x9e8] sm:$0xff]
        %v964 = vld [vmem:[#allocation5 + $0x9f0] sm:$0xff]
        %v965 = vld [vmem:[#allocation5 + $0x9f8] sm:$0xff]
        %v966 = vld [vmem:[#allocation5 + $0xa00] sm:$0xff]
        %v967 = vld [vmem:[#allocation5 + $0xa08] sm:$0xff]
        %v968 = vld [vmem:[#allocation5 + $0xa10] sm:$0xff]
        %v969 = vld [vmem:[#allocation5 + $0xa18] sm:$0xff]
        %v970 = vld [vmem:[#allocation5 + $0xa20] sm:$0xff]
        %v971 = vld [vmem:[#allocation5 + $0xa28] sm:$0xff]
        %v972 = vld [vmem:[#allocation5 + $0xa30] sm:$0xff]
        %v973 = vld [vmem:[#allocation5 + $0xa38] sm:$0xff]
        %v974 = vld [vmem:[#allocation5 + $0xa40] sm:$0xff]
        %v975 = vld [vmem:[#allocation5 + $0xa48] sm:$0xff]
        %v976 = vld [vmem:[#allocation5 + $0xa50] sm:$0xff]
        %v977 = vld [vmem:[#allocation5 + $0xa58] sm:$0xff]
        %v978 = vld [vmem:[#allocation5 + $0xa60] sm:$0xff]
        %v979 = vld [vmem:[#allocation5 + $0xa68] sm:$0xff]
        %v980 = vld [vmem:[#allocation5 + $0xa70] sm:$0xff]
        %v981 = vld [vmem:[#allocation5 + $0xa78] sm:$0xff]
        %v982 = vld [vmem:[#allocation5 + $0xa80] sm:$0xff]
        %v983 = vld [vmem:[#allocation5 + $0xa88] sm:$0xff]
        %v984 = vld [vmem:[#allocation5 + $0xa90] sm:$0xff]
        %v985 = vld [vmem:[#allocation5 + $0xa98] sm:$0xff]
        %v986 = vld [vmem:[#allocation5 + $0xaa0] sm:$0xff]
        %v987 = vld [vmem:[#allocation5 + $0xaa8] sm:$0xff]
        %v988 = vld [vmem:[#allocation5 + $0xab0] sm:$0xff]
        %v989 = vld [vmem:[#allocation5 + $0xab8] sm:$0xff]
        %v990 = vld [vmem:[#allocation5 + $0xac0] sm:$0xff]
        %v991 = vld [vmem:[#allocation5 + $0xac8] sm:$0xff]
        %v992 = vld [vmem:[#allocation5 + $0xad0] sm:$0xff]
        %v993 = vld [vmem:[#allocation5 + $0xad8] sm:$0xff]
        %v994 = vld [vmem:[#allocation5 + $0xae0] sm:$0xff]
        %v995 = vld [vmem:[#allocation5 + $0xae8] sm:$0xff]
        %v996 = vld [vmem:[#allocation5 + $0xaf0] sm:$0xff]
        %v997 = vld [vmem:[#allocation5 + $0xaf8] sm:$0xff]
        %v998 = vld [vmem:[#allocation5 + $0xb00] sm:$0xff]
        %v999 = vld [vmem:[#allocation5 + $0xb08] sm:$0xff]
        %v1000 = vld [vmem:[#allocation5 + $0xb10] sm:$0xff]
        %v1001 = vld [vmem:[#allocation5 + $0xb18] sm:$0xff]
        %v1002 = vld [vmem:[#allocation5 + $0xb20] sm:$0xff]
        %v1003 = vld [vmem:[#allocation5 + $0xb28] sm:$0xff]
        %v1004 = vld [vmem:[#allocation5 + $0xb30] sm:$0xff]
        %v1005 = vld [vmem:[#allocation5 + $0xb38] sm:$0xff]
        %v1006 = vld [vmem:[#allocation5 + $0xb40] sm:$0xff]
        %v1007 = vld [vmem:[#allocation5 + $0xb48] sm:$0xff]
        %v1008 = vld [vmem:[#allocation5 + $0xb50] sm:$0xff]
        %v1009 = vld [vmem:[#allocation5 + $0xb58] sm:$0xff]
        %v1010 = vld [vmem:[#allocation5 + $0xb60] sm:$0xff]
        %v1011 = vld [vmem:[#allocation5 + $0xb68] sm:$0xff]
        %v1012 = vld [vmem:[#allocation5 + $0xb70] sm:$0xff]
        %v1013 = vld [vmem:[#allocation5 + $0xb78] sm:$0xff]
        %v1014 = vld [vmem:[#allocation5 + $0xb80] sm:$0xff]
        %v1015 = vld [vmem:[#allocation5 + $0xb88] sm:$0xff]
        %v1016 = vld [vmem:[#allocation5 + $0xb90] sm:$0xff]
        %v1017 = vld [vmem:[#allocation5 + $0xb98] sm:$0xff]
        %v1018 = vld [vmem:[#allocation5 + $0xba0] sm:$0xff]
        %v1019 = vld [vmem:[#allocation5 + $0xba8] sm:$0xff]
        %v1020 = vld [vmem:[#allocation5 + $0xbb0] sm:$0xff]
        %v1021 = vld [vmem:[#allocation5 + $0xbb8] sm:$0xff]
        %v1022 = vld [vmem:[#allocation5 + $0xbc0] sm:$0xff]
        %v1023 = vld [vmem:[#allocation5 + $0xbc8] sm:$0xff]
        %v1024 = vld [vmem:[#allocation5 + $0xbd0] sm:$0xff]
        %v1025 = vld [vmem:[#allocation5 + $0xbd8] sm:$0xff]
        %v1026 = vld [vmem:[#allocation5 + $0xbe0] sm:$0xff]
        %v1027 = vld [vmem:[#allocation5 + $0xbe8] sm:$0xff]
        %v1028 = vld [vmem:[#allocation5 + $0xbf0] sm:$0xff]
        %v1029 = vld [vmem:[#allocation5 + $0xbf8] sm:$0xff]
        %v1030 = vld [vmem:[#allocation5 + $0xc00] sm:$0xff]
        %v1031 = vld [vmem:[#allocation5 + $0xc08] sm:$0xff]
        %v1032 = vld [vmem:[#allocation5 + $0xc10] sm:$0xff]
        %v1033 = vld [vmem:[#allocation5 + $0xc18] sm:$0xff]
        %v1034 = vld [vmem:[#allocation5 + $0xc20] sm:$0xff]
        %v1035 = vld [vmem:[#allocation5 + $0xc28] sm:$0xff]
        %v1036 = vld [vmem:[#allocation5 + $0xc30] sm:$0xff]
        %v1037 = vld [vmem:[#allocation5 + $0xc38] sm:$0xff]
        %v1038 = vld [vmem:[#allocation7] sm:$0xff]
        %v1040 = vperm.slane %v1038, 0
        %v1041 = vperm.slane %v1038, 1
        %v1042 = vperm.slane %v1038, 2
        %v1043 = vperm.slane %v1038, 3
        %v1044 = vperm.slane %v1038, 4
        %v1045 = vperm.slane %v1038, 5
        %v1046 = vperm.slane %v1038, 6
        %v1047 = vperm.slane %v1038, 7
        %v1448 = vunpack.c.l.b16 %v646
        %v1449 = vunpack.c.h.b16 %v646
        %v1450 = vunpack.c.l.b16 %v647
        %v1451 = vunpack.c.h.b16 %v647
        %v1452 = vunpack.c.l.b16 %v648
        %v1453 = vunpack.c.h.b16 %v648
        %v1454 = vunpack.c.l.b16 %v649
        %v1455 = vunpack.c.h.b16 %v649
        %v1456 = vunpack.c.l.b16 %v650
        %v1457 = vunpack.c.h.b16 %v650
        %v1458 = vunpack.c.l.b16 %v651
        %v1459 = vunpack.c.h.b16 %v651
        %v1460 = vunpack.c.l.b16 %v652
        %v1461 = vunpack.c.h.b16 %v652
        %v1462 = vunpack.c.l.b16 %v653
        %v1463 = vunpack.c.h.b16 %v653
        %v1464 = vunpack.c.l.b16 %v654
        %v1465 = vunpack.c.h.b16 %v654
        %v1466 = vunpack.c.l.b16 %v655
        %v1467 = vunpack.c.h.b16 %v655
        %v1468 = vunpack.c.l.b16 %v656
        %v1469 = vunpack.c.h.b16 %v656
        %v1470 = vunpack.c.l.b16 %v657
        %v1471 = vunpack.c.h.b16 %v657
        %v1472 = vunpack.c.l.b16 %v658
        %v1473 = vunpack.c.h.b16 %v658
        %v1474 = vunpack.c.l.b16 %v659
        %v1475 = vunpack.c.h.b16 %v659
        %v1476 = vunpack.c.l.b16 %v660
        %v1477 = vunpack.c.h.b16 %v660
        %v1478 = vunpack.c.l.b16 %v661
        %v1479 = vunpack.c.h.b16 %v661
        %v1480 = vunpack.c.l.b16 %v662
        %v1481 = vunpack.c.h.b16 %v662
        %v1482 = vunpack.c.l.b16 %v663
        %v1483 = vunpack.c.h.b16 %v663
        %v1484 = vunpack.c.l.b16 %v664
        %v1485 = vunpack.c.h.b16 %v664
        %v1486 = vunpack.c.l.b16 %v665
        %v1487 = vunpack.c.h.b16 %v665
        %v1488 = vunpack.c.l.b16 %v666
        %v1489 = vunpack.c.h.b16 %v666
        %v1490 = vunpack.c.l.b16 %v667
        %v1491 = vunpack.c.h.b16 %v667
        %v1492 = vunpack.c.l.b16 %v668
        %v1493 = vunpack.c.h.b16 %v668
        %v1494 = vunpack.c.l.b16 %v669
        %v1495 = vunpack.c.h.b16 %v669
        %v1496 = vunpack.c.l.b16 %v670
        %v1497 = vunpack.c.h.b16 %v670
        %v1498 = vunpack.c.l.b16 %v671
        %v1499 = vunpack.c.h.b16 %v671
        %v1500 = vunpack.c.l.b16 %v672
        %v1501 = vunpack.c.h.b16 %v672
        %v1502 = vunpack.c.l.b16 %v673
        %v1503 = vunpack.c.h.b16 %v673
        %v1504 = vunpack.c.l.b16 %v674
        %v1505 = vunpack.c.h.b16 %v674
        %v1506 = vunpack.c.l.b16 %v675
        %v1507 = vunpack.c.h.b16 %v675
        %v1508 = vunpack.c.l.b16 %v676
        %v1509 = vunpack.c.h.b16 %v676
        %v1510 = vunpack.c.l.b16 %v677
        %v1511 = vunpack.c.h.b16 %v677
        %v1512 = vunpack.c.l.b16 %v678
        %v1513 = vunpack.c.h.b16 %v678
        %v1514 = vunpack.c.l.b16 %v679
        %v1515 = vunpack.c.h.b16 %v679
        %v1516 = vunpack.c.l.b16 %v680
        %v1517 = vunpack.c.h.b16 %v680
        %v1518 = vunpack.c.l.b16 %v681
        %v1519 = vunpack.c.h.b16 %v681
        %v1520 = vunpack.c.l.b16 %v682
        %v1521 = vunpack.c.h.b16 %v682
        %v1522 = vunpack.c.l.b16 %v683
        %v1523 = vunpack.c.h.b16 %v683
        %v1524 = vunpack.c.l.b16 %v684
        %v1525 = vunpack.c.h.b16 %v684
        %v1526 = vunpack.c.l.b16 %v685
        %v1527 = vunpack.c.h.b16 %v685
        %v1528 = vunpack.c.l.b16 %v686
        %v1529 = vunpack.c.h.b16 %v686
        %v1530 = vunpack.c.l.b16 %v687
        %v1531 = vunpack.c.h.b16 %v687
        %v1532 = vunpack.c.l.b16 %v688
        %v1533 = vunpack.c.h.b16 %v688
        %v1534 = vunpack.c.l.b16 %v689
        %v1535 = vunpack.c.h.b16 %v689
        %v1536 = vunpack.c.l.b16 %v690
        %v1537 = vunpack.c.h.b16 %v690
        %v1538 = vunpack.c.l.b16 %v691
        %v1539 = vunpack.c.h.b16 %v691
        %v1540 = vunpack.c.l.b16 %v692
        %v1541 = vunpack.c.h.b16 %v692
        %v1542 = vunpack.c.l.b16 %v693
        %v1543 = vunpack.c.h.b16 %v693
        %v1544 = vunpack.c.l.b16 %v694
        %v1545 = vunpack.c.h.b16 %v694
        %v1546 = vunpack.c.l.b16 %v695
        %v1547 = vunpack.c.h.b16 %v695
        %v1548 = vunpack.c.l.b16 %v696
        %v1549 = vunpack.c.h.b16 %v696
        %v1550 = vunpack.c.l.b16 %v697
        %v1551 = vunpack.c.h.b16 %v697
        %v1552 = vunpack.c.l.b16 %v698
        %v1553 = vunpack.c.h.b16 %v698
        %v1554 = vunpack.c.l.b16 %v699
        %v1555 = vunpack.c.h.b16 %v699
        %v1556 = vunpack.c.l.b16 %v700
        %v1557 = vunpack.c.h.b16 %v700
        %v1558 = vunpack.c.l.b16 %v701
        %v1559 = vunpack.c.h.b16 %v701
        %v1560 = vunpack.c.l.b16 %v702
        %v1561 = vunpack.c.h.b16 %v702
        %v1562 = vunpack.c.l.b16 %v703
        %v1563 = vunpack.c.h.b16 %v703
        %v1564 = vunpack.c.l.b16 %v704
        %v1565 = vunpack.c.h.b16 %v704
        %v1566 = vunpack.c.l.b16 %v705
        %v1567 = vunpack.c.h.b16 %v705
        %v1568 = vunpack.c.l.b16 %v706
        %v1569 = vunpack.c.h.b16 %v706
        %v1570 = vunpack.c.l.b16 %v707
        %v1571 = vunpack.c.h.b16 %v707
        %v1572 = vunpack.c.l.b16 %v708
        %v1573 = vunpack.c.h.b16 %v708
        %v1574 = vunpack.c.l.b16 %v709
        %v1575 = vunpack.c.h.b16 %v709
        %v1576 = vunpack.c.l.b16 %v710
        %v1577 = vunpack.c.h.b16 %v710
        %v1578 = vunpack.c.l.b16 %v711
        %v1579 = vunpack.c.h.b16 %v711
        %v1580 = vunpack.c.l.b16 %v712
        %v1581 = vunpack.c.h.b16 %v712
        %v1582 = vunpack.c.l.b16 %v713
        %v1583 = vunpack.c.h.b16 %v713
        %v1584 = vunpack.c.l.b16 %v714
        %v1585 = vunpack.c.h.b16 %v714
        %v1586 = vunpack.c.l.b16 %v715
        %v1587 = vunpack.c.h.b16 %v715
        %v1588 = vunpack.c.l.b16 %v716
        %v1589 = vunpack.c.h.b16 %v716
        %v1590 = vunpack.c.l.b16 %v717
        %v1591 = vunpack.c.h.b16 %v717
        %v1592 = vunpack.c.l.b16 %v718
        %v1593 = vunpack.c.h.b16 %v718
        %v1594 = vunpack.c.l.b16 %v719
        %v1595 = vunpack.c.h.b16 %v719
        %v1596 = vunpack.c.l.b16 %v720
        %v1597 = vunpack.c.h.b16 %v720
        %v1598 = vunpack.c.l.b16 %v721
        %v1599 = vunpack.c.h.b16 %v721
        %v1600 = vunpack.c.l.b16 %v722
        %v1601 = vunpack.c.h.b16 %v722
        %v1602 = vunpack.c.l.b16 %v723
        %v1603 = vunpack.c.h.b16 %v723
        %v1604 = vunpack.c.l.b16 %v724
        %v1605 = vunpack.c.h.b16 %v724
        %v1606 = vunpack.c.l.b16 %v725
        %v1607 = vunpack.c.h.b16 %v725
        %v1608 = vunpack.c.l.b16 %v726
        %v1609 = vunpack.c.h.b16 %v726
        %v1610 = vunpack.c.l.b16 %v727
        %v1611 = vunpack.c.h.b16 %v727
        %v1612 = vunpack.c.l.b16 %v728
        %v1613 = vunpack.c.h.b16 %v728
        %v1614 = vunpack.c.l.b16 %v729
        %v1615 = vunpack.c.h.b16 %v729
        %v1616 = vunpack.c.l.b16 %v730
        %v1617 = vunpack.c.h.b16 %v730
        %v1618 = vunpack.c.l.b16 %v731
        %v1619 = vunpack.c.h.b16 %v731
        %v1620 = vunpack.c.l.b16 %v732
        %v1621 = vunpack.c.h.b16 %v732
        %v1622 = vunpack.c.l.b16 %v733
        %v1623 = vunpack.c.h.b16 %v733
        %v1624 = vunpack.c.l.b16 %v734
        %v1625 = vunpack.c.h.b16 %v734
        %v1626 = vunpack.c.l.b16 %v735
        %v1627 = vunpack.c.h.b16 %v735
        %v1628 = vunpack.c.l.b16 %v736
        %v1629 = vunpack.c.h.b16 %v736
        %v1630 = vunpack.c.l.b16 %v737
        %v1631 = vunpack.c.h.b16 %v737
        %v1632 = vunpack.c.l.b16 %v738
        %v1633 = vunpack.c.h.b16 %v738
        %v1634 = vunpack.c.l.b16 %v739
        %v1635 = vunpack.c.h.b16 %v739
        %v1636 = vunpack.c.l.b16 %v740
        %v1637 = vunpack.c.h.b16 %v740
        %v1638 = vunpack.c.l.b16 %v741
        %v1639 = vunpack.c.h.b16 %v741
        %v1640 = vunpack.c.l.b16 %v742
        %v1641 = vunpack.c.h.b16 %v742
        %v1642 = vunpack.c.l.b16 %v743
        %v1643 = vunpack.c.h.b16 %v743
        %v1644 = vunpack.c.l.b16 %v744
        %v1645 = vunpack.c.h.b16 %v744
        %v1646 = vunpack.c.l.b16 %v745
        %v1647 = vunpack.c.h.b16 %v745
        %v1648 = vunpack.c.l.b16 %v746
        %v1649 = vunpack.c.h.b16 %v746
        %v1650 = vunpack.c.l.b16 %v747
        %v1651 = vunpack.c.h.b16 %v747
        %v1652 = vunpack.c.l.b16 %v748
        %v1653 = vunpack.c.h.b16 %v748
        %v1654 = vunpack.c.l.b16 %v749
        %v1655 = vunpack.c.h.b16 %v749
        %v1656 = vunpack.c.l.b16 %v750
        %v1657 = vunpack.c.h.b16 %v750
        %v1658 = vunpack.c.l.b16 %v751
        %v1659 = vunpack.c.h.b16 %v751
        %v1660 = vunpack.c.l.b16 %v752
        %v1661 = vunpack.c.h.b16 %v752
        %v1662 = vunpack.c.l.b16 %v753
        %v1663 = vunpack.c.h.b16 %v753
        %v1664 = vunpack.c.l.b16 %v754
        %v1665 = vunpack.c.h.b16 %v754
        %v1666 = vunpack.c.l.b16 %v755
        %v1667 = vunpack.c.h.b16 %v755
        %v1668 = vunpack.c.l.b16 %v756
        %v1669 = vunpack.c.h.b16 %v756
        %v1670 = vunpack.c.l.b16 %v757
        %v1671 = vunpack.c.h.b16 %v757
        %v1672 = vunpack.c.l.b16 %v758
        %v1673 = vunpack.c.h.b16 %v758
        %v1674 = vunpack.c.l.b16 %v759
        %v1675 = vunpack.c.h.b16 %v759
        %v1676 = vunpack.c.l.b16 %v760
        %v1677 = vunpack.c.h.b16 %v760
        %v1678 = vunpack.c.l.b16 %v761
        %v1679 = vunpack.c.h.b16 %v761
        %v1680 = vunpack.c.l.b16 %v762
        %v1681 = vunpack.c.h.b16 %v762
        %v1682 = vunpack.c.l.b16 %v763
        %v1683 = vunpack.c.h.b16 %v763
        %v1684 = vunpack.c.l.b16 %v764
        %v1685 = vunpack.c.h.b16 %v764
        %v1686 = vunpack.c.l.b16 %v765
        %v1687 = vunpack.c.h.b16 %v765
        %v1688 = vunpack.c.l.b16 %v766
        %v1689 = vunpack.c.h.b16 %v766
        %v1690 = vunpack.c.l.b16 %v767
        %v1691 = vunpack.c.h.b16 %v767
        %v1692 = vunpack.c.l.b16 %v768
        %v1693 = vunpack.c.h.b16 %v768
        %v1694 = vunpack.c.l.b16 %v769
        %v1695 = vunpack.c.h.b16 %v769
        %v1696 = vunpack.c.l.b16 %v770
        %v1697 = vunpack.c.h.b16 %v770
        %v1698 = vunpack.c.l.b16 %v771
        %v1699 = vunpack.c.h.b16 %v771
        %v1700 = vunpack.c.l.b16 %v772
        %v1701 = vunpack.c.h.b16 %v772
        %v1702 = vunpack.c.l.b16 %v773
        %v1703 = vunpack.c.h.b16 %v773
        %v1704 = vunpack.c.l.b16 %v774
        %v1705 = vunpack.c.h.b16 %v774
        %v1706 = vunpack.c.l.b16 %v775
        %v1707 = vunpack.c.h.b16 %v775
        %v1708 = vunpack.c.l.b16 %v776
        %v1709 = vunpack.c.h.b16 %v776
        %v1710 = vunpack.c.l.b16 %v777
        %v1711 = vunpack.c.h.b16 %v777
        %v1712 = vunpack.c.l.b16 %v778
        %v1713 = vunpack.c.h.b16 %v778
        %v1714 = vunpack.c.l.b16 %v779
        %v1715 = vunpack.c.h.b16 %v779
        %v1716 = vunpack.c.l.b16 %v780
        %v1717 = vunpack.c.h.b16 %v780
        %v1718 = vunpack.c.l.b16 %v781
        %v1719 = vunpack.c.h.b16 %v781
        %v1720 = vunpack.c.l.b16 %v782
        %v1721 = vunpack.c.h.b16 %v782
        %v1722 = vunpack.c.l.b16 %v783
        %v1723 = vunpack.c.h.b16 %v783
        %v1724 = vunpack.c.l.b16 %v784
        %v1725 = vunpack.c.h.b16 %v784
        %v1726 = vunpack.c.l.b16 %v785
        %v1727 = vunpack.c.h.b16 %v785
        %v1728 = vunpack.c.l.b16 %v786
        %v1729 = vunpack.c.h.b16 %v786
        %v1730 = vunpack.c.l.b16 %v787
        %v1731 = vunpack.c.h.b16 %v787
        %v1732 = vunpack.c.l.b16 %v788
        %v1733 = vunpack.c.h.b16 %v788
        %v1734 = vunpack.c.l.b16 %v789
        %v1735 = vunpack.c.h.b16 %v789
        %v1736 = vunpack.c.l.b16 %v790
        %v1737 = vunpack.c.h.b16 %v790
        %v1738 = vunpack.c.l.b16 %v791
        %v1739 = vunpack.c.h.b16 %v791
        %v1740 = vunpack.c.l.b16 %v792
        %v1741 = vunpack.c.h.b16 %v792
        %v1742 = vunpack.c.l.b16 %v793
        %v1743 = vunpack.c.h.b16 %v793
        %v1744 = vunpack.c.l.b16 %v794
        %v1745 = vunpack.c.h.b16 %v794
        %v1746 = vunpack.c.l.b16 %v795
        %v1747 = vunpack.c.h.b16 %v795
        %v1748 = vunpack.c.l.b16 %v796
        %v1749 = vunpack.c.h.b16 %v796
        %v1750 = vunpack.c.l.b16 %v797
        %v1751 = vunpack.c.h.b16 %v797
        %v1752 = vunpack.c.l.b16 %v798
        %v1753 = vunpack.c.h.b16 %v798
        %v1754 = vunpack.c.l.b16 %v799
        %v1755 = vunpack.c.h.b16 %v799
        %v1756 = vunpack.c.l.b16 %v800
        %v1757 = vunpack.c.h.b16 %v800
        %v1758 = vunpack.c.l.b16 %v801
        %v1759 = vunpack.c.h.b16 %v801
        %v1760 = vunpack.c.l.b16 %v802
        %v1761 = vunpack.c.h.b16 %v802
        %v1762 = vunpack.c.l.b16 %v803
        %v1763 = vunpack.c.h.b16 %v803
        %v1764 = vunpack.c.l.b16 %v804
        %v1765 = vunpack.c.h.b16 %v804
        %v1766 = vunpack.c.l.b16 %v805
        %v1767 = vunpack.c.h.b16 %v805
        %v1768 = vunpack.c.l.b16 %v806
        %v1769 = vunpack.c.h.b16 %v806
        %v1770 = vunpack.c.l.b16 %v807
        %v1771 = vunpack.c.h.b16 %v807
        %v1772 = vunpack.c.l.b16 %v808
        %v1773 = vunpack.c.h.b16 %v808
        %v1774 = vunpack.c.l.b16 %v809
        %v1775 = vunpack.c.h.b16 %v809
        %v1776 = vunpack.c.l.b16 %v810
        %v1777 = vunpack.c.h.b16 %v810
        %v1778 = vunpack.c.l.b16 %v811
        %v1779 = vunpack.c.h.b16 %v811
        %v1780 = vunpack.c.l.b16 %v812
        %v1781 = vunpack.c.h.b16 %v812
        %v1782 = vunpack.c.l.b16 %v813
        %v1783 = vunpack.c.h.b16 %v813
        %v1784 = vunpack.c.l.b16 %v814
        %v1785 = vunpack.c.h.b16 %v814
        %v1786 = vunpack.c.l.b16 %v815
        %v1787 = vunpack.c.h.b16 %v815
        %v1788 = vunpack.c.l.b16 %v816
        %v1789 = vunpack.c.h.b16 %v816
        %v1790 = vunpack.c.l.b16 %v817
        %v1791 = vunpack.c.h.b16 %v817
        %v1792 = vunpack.c.l.b16 %v818
        %v1793 = vunpack.c.h.b16 %v818
        %v1794 = vunpack.c.l.b16 %v819
        %v1795 = vunpack.c.h.b16 %v819
        %v1796 = vunpack.c.l.b16 %v820
        %v1797 = vunpack.c.h.b16 %v820
        %v1798 = vunpack.c.l.b16 %v821
        %v1799 = vunpack.c.h.b16 %v821
        %v1800 = vunpack.c.l.b16 %v822
        %v1801 = vunpack.c.h.b16 %v822
        %v1802 = vunpack.c.l.b16 %v823
        %v1803 = vunpack.c.h.b16 %v823
        %v1804 = vunpack.c.l.b16 %v824
        %v1805 = vunpack.c.h.b16 %v824
        %v1806 = vunpack.c.l.b16 %v825
        %v1807 = vunpack.c.h.b16 %v825
        %v1808 = vunpack.c.l.b16 %v826
        %v1809 = vunpack.c.h.b16 %v826
        %v1810 = vunpack.c.l.b16 %v827
        %v1811 = vunpack.c.h.b16 %v827
        %v1812 = vunpack.c.l.b16 %v828
        %v1813 = vunpack.c.h.b16 %v828
        %v1814 = vunpack.c.l.b16 %v829
        %v1815 = vunpack.c.h.b16 %v829
        %v1816 = vunpack.c.l.b16 %v830
        %v1817 = vunpack.c.h.b16 %v830
        %v1818 = vunpack.c.l.b16 %v831
        %v1819 = vunpack.c.h.b16 %v831
        %v1820 = vunpack.c.l.b16 %v832
        %v1821 = vunpack.c.h.b16 %v832
        %v1822 = vunpack.c.l.b16 %v833
        %v1823 = vunpack.c.h.b16 %v833
        %v1824 = vunpack.c.l.b16 %v834
        %v1825 = vunpack.c.h.b16 %v834
        %v1826 = vunpack.c.l.b16 %v835
        %v1827 = vunpack.c.h.b16 %v835
        %v1828 = vunpack.c.l.b16 %v836
        %v1829 = vunpack.c.h.b16 %v836
        %v1830 = vunpack.c.l.b16 %v837
        %v1831 = vunpack.c.h.b16 %v837
        %v1832 = vunpack.c.l.b16 %v838
        %v1833 = vunpack.c.h.b16 %v838
        %v1834 = vunpack.c.l.b16 %v839
        %v1835 = vunpack.c.h.b16 %v839
        %v1836 = vunpack.c.l.b16 %v840
        %v1837 = vunpack.c.h.b16 %v840
        %v1838 = vunpack.c.l.b16 %v841
        %v1839 = vunpack.c.h.b16 %v841
        %v1840 = vunpack.c.l.b16 %v842
        %v1841 = vunpack.c.h.b16 %v842
        %v1842 = vunpack.c.l.b16 %v843
        %v1843 = vunpack.c.h.b16 %v843
        %v1844 = vunpack.c.l.b16 %v844
        %v1845 = vunpack.c.h.b16 %v844
        %v1846 = vunpack.c.l.b16 %v845
        %v1847 = vunpack.c.h.b16 %v845
        %v1848 = vunpack.c.l.b16 %v846
        %v1849 = vunpack.c.h.b16 %v846
        %v1850 = vunpack.c.l.b16 %v847
        %v1851 = vunpack.c.h.b16 %v847
        %v1852 = vunpack.c.l.b16 %v848
        %v1853 = vunpack.c.h.b16 %v848
        %v1854 = vunpack.c.l.b16 %v849
        %v1855 = vunpack.c.h.b16 %v849
        %v1856 = vunpack.c.l.b16 %v850
        %v1857 = vunpack.c.h.b16 %v850
        %v1858 = vunpack.c.l.b16 %v851
        %v1859 = vunpack.c.h.b16 %v851
        %v1860 = vunpack.c.l.b16 %v852
        %v1861 = vunpack.c.h.b16 %v852
        %v1862 = vunpack.c.l.b16 %v853
        %v1863 = vunpack.c.h.b16 %v853
        %v1864 = vunpack.c.l.b16 %v854
        %v1865 = vunpack.c.h.b16 %v854
        %v1866 = vunpack.c.l.b16 %v855
        %v1867 = vunpack.c.h.b16 %v855
        %v1868 = vunpack.c.l.b16 %v856
        %v1869 = vunpack.c.h.b16 %v856
        %v1870 = vunpack.c.l.b16 %v857
        %v1871 = vunpack.c.h.b16 %v857
        %v1872 = vunpack.c.l.b16 %v858
        %v1873 = vunpack.c.h.b16 %v858
        %v1874 = vunpack.c.l.b16 %v859
        %v1875 = vunpack.c.h.b16 %v859
        %v1876 = vunpack.c.l.b16 %v860
        %v1877 = vunpack.c.h.b16 %v860
        %v1878 = vunpack.c.l.b16 %v861
        %v1879 = vunpack.c.h.b16 %v861
        %v1880 = vunpack.c.l.b16 %v862
        %v1881 = vunpack.c.h.b16 %v862
        %v1882 = vunpack.c.l.b16 %v863
        %v1883 = vunpack.c.h.b16 %v863
        %v1884 = vunpack.c.l.b16 %v864
        %v1885 = vunpack.c.h.b16 %v864
        %v1886 = vunpack.c.l.b16 %v865
        %v1887 = vunpack.c.h.b16 %v865
        %v1888 = vunpack.c.l.b16 %v866
        %v1889 = vunpack.c.h.b16 %v866
        %v1890 = vunpack.c.l.b16 %v867
        %v1891 = vunpack.c.h.b16 %v867
        %v1892 = vunpack.c.l.b16 %v868
        %v1893 = vunpack.c.h.b16 %v868
        %v1894 = vunpack.c.l.b16 %v869
        %v1895 = vunpack.c.h.b16 %v869
        %v1896 = vunpack.c.l.b16 %v870
        %v1897 = vunpack.c.h.b16 %v870
        %v1898 = vunpack.c.l.b16 %v871
        %v1899 = vunpack.c.h.b16 %v871
        %v1900 = vunpack.c.l.b16 %v872
        %v1901 = vunpack.c.h.b16 %v872
        %v1902 = vunpack.c.l.b16 %v873
        %v1903 = vunpack.c.h.b16 %v873
        %v1904 = vunpack.c.l.b16 %v874
        %v1905 = vunpack.c.h.b16 %v874
        %v1906 = vunpack.c.l.b16 %v875
        %v1907 = vunpack.c.h.b16 %v875
        %v1908 = vunpack.c.l.b16 %v876
        %v1909 = vunpack.c.h.b16 %v876
        %v1910 = vunpack.c.l.b16 %v877
        %v1911 = vunpack.c.h.b16 %v877
        %v1912 = vunpack.c.l.b16 %v878
        %v1913 = vunpack.c.h.b16 %v878
        %v1914 = vunpack.c.l.b16 %v879
        %v1915 = vunpack.c.h.b16 %v879
        %v1916 = vunpack.c.l.b16 %v880
        %v1917 = vunpack.c.h.b16 %v880
        %v1918 = vunpack.c.l.b16 %v881
        %v1919 = vunpack.c.h.b16 %v881
        %v1920 = vunpack.c.l.b16 %v882
        %v1921 = vunpack.c.h.b16 %v882
        %v1922 = vunpack.c.l.b16 %v883
        %v1923 = vunpack.c.h.b16 %v883
        %v1924 = vunpack.c.l.b16 %v884
        %v1925 = vunpack.c.h.b16 %v884
        %v1926 = vunpack.c.l.b16 %v885
        %v1927 = vunpack.c.h.b16 %v885
        %v1928 = vunpack.c.l.b16 %v886
        %v1929 = vunpack.c.h.b16 %v886
        %v1930 = vunpack.c.l.b16 %v887
        %v1931 = vunpack.c.h.b16 %v887
        %v1932 = vunpack.c.l.b16 %v888
        %v1933 = vunpack.c.h.b16 %v888
        %v1934 = vunpack.c.l.b16 %v889
        %v1935 = vunpack.c.h.b16 %v889
        %v1936 = vunpack.c.l.b16 %v890
        %v1937 = vunpack.c.h.b16 %v890
        %v1938 = vunpack.c.l.b16 %v891
        %v1939 = vunpack.c.h.b16 %v891
        %v1940 = vunpack.c.l.b16 %v892
        %v1941 = vunpack.c.h.b16 %v892
        %v1942 = vunpack.c.l.b16 %v893
        %v1943 = vunpack.c.h.b16 %v893
        %v1944 = vunpack.c.l.b16 %v894
        %v1945 = vunpack.c.h.b16 %v894
        %v1946 = vunpack.c.l.b16 %v895
        %v1947 = vunpack.c.h.b16 %v895
        %v1948 = vunpack.c.l.b16 %v896
        %v1949 = vunpack.c.h.b16 %v896
        %v1950 = vunpack.c.l.b16 %v897
        %v1951 = vunpack.c.h.b16 %v897
        %v1952 = vunpack.c.l.b16 %v898
        %v1953 = vunpack.c.h.b16 %v898
        %v1954 = vunpack.c.l.b16 %v899
        %v1955 = vunpack.c.h.b16 %v899
        %v1956 = vunpack.c.l.b16 %v900
        %v1957 = vunpack.c.h.b16 %v900
        %v1958 = vunpack.c.l.b16 %v901
        %v1959 = vunpack.c.h.b16 %v901
        %v1960 = vunpack.c.l.b16 %v902
        %v1961 = vunpack.c.h.b16 %v902
        %v1962 = vunpack.c.l.b16 %v903
        %v1963 = vunpack.c.h.b16 %v903
        %v1964 = vunpack.c.l.b16 %v904
        %v1965 = vunpack.c.h.b16 %v904
        %v1966 = vunpack.c.l.b16 %v905
        %v1967 = vunpack.c.h.b16 %v905
        %v1968 = vunpack.c.l.b16 %v906
        %v1969 = vunpack.c.h.b16 %v906
        %v1970 = vunpack.c.l.b16 %v907
        %v1971 = vunpack.c.h.b16 %v907
        %v1972 = vunpack.c.l.b16 %v908
        %v1973 = vunpack.c.h.b16 %v908
        %v1974 = vunpack.c.l.b16 %v909
        %v1975 = vunpack.c.h.b16 %v909
        %v1976 = vunpack.c.l.b16 %v910
        %v1977 = vunpack.c.h.b16 %v910
        %v1978 = vunpack.c.l.b16 %v911
        %v1979 = vunpack.c.h.b16 %v911
        %v1980 = vunpack.c.l.b16 %v912
        %v1981 = vunpack.c.h.b16 %v912
        %v1982 = vunpack.c.l.b16 %v913
        %v1983 = vunpack.c.h.b16 %v913
        %v1984 = vunpack.c.l.b16 %v914
        %v1985 = vunpack.c.h.b16 %v914
        %v1986 = vunpack.c.l.b16 %v915
        %v1987 = vunpack.c.h.b16 %v915
        %v1988 = vunpack.c.l.b16 %v916
        %v1989 = vunpack.c.h.b16 %v916
        %v1990 = vunpack.c.l.b16 %v917
        %v1991 = vunpack.c.h.b16 %v917
        %v1992 = vunpack.c.l.b16 %v918
        %v1993 = vunpack.c.h.b16 %v918
        %v1994 = vunpack.c.l.b16 %v919
        %v1995 = vunpack.c.h.b16 %v919
        %v1996 = vunpack.c.l.b16 %v920
        %v1997 = vunpack.c.h.b16 %v920
        %v1998 = vunpack.c.l.b16 %v921
        %v1999 = vunpack.c.h.b16 %v921
        %v2000 = vunpack.c.l.b16 %v922
        %v2001 = vunpack.c.h.b16 %v922
        %v2002 = vunpack.c.l.b16 %v923
        %v2003 = vunpack.c.h.b16 %v923
        %v2004 = vunpack.c.l.b16 %v924
        %v2005 = vunpack.c.h.b16 %v924
        %v2006 = vunpack.c.l.b16 %v925
        %v2007 = vunpack.c.h.b16 %v925
        %v2008 = vunpack.c.l.b16 %v926
        %v2009 = vunpack.c.h.b16 %v926
        %v2010 = vunpack.c.l.b16 %v927
        %v2011 = vunpack.c.h.b16 %v927
        %v2012 = vunpack.c.l.b16 %v928
        %v2013 = vunpack.c.h.b16 %v928
        %v2014 = vunpack.c.l.b16 %v929
        %v2015 = vunpack.c.h.b16 %v929
        %v2016 = vunpack.c.l.b16 %v930
        %v2017 = vunpack.c.h.b16 %v930
        %v2018 = vunpack.c.l.b16 %v931
        %v2019 = vunpack.c.h.b16 %v931
        %v2020 = vunpack.c.l.b16 %v932
        %v2021 = vunpack.c.h.b16 %v932
        %v2022 = vunpack.c.l.b16 %v933
        %v2023 = vunpack.c.h.b16 %v933
        %v2024 = vunpack.c.l.b16 %v934
        %v2025 = vunpack.c.h.b16 %v934
        %v2026 = vunpack.c.l.b16 %v935
        %v2027 = vunpack.c.h.b16 %v935
        %v2028 = vunpack.c.l.b16 %v936
        %v2029 = vunpack.c.h.b16 %v936
        %v2030 = vunpack.c.l.b16 %v937
        %v2031 = vunpack.c.h.b16 %v937
        %v2032 = vunpack.c.l.b16 %v938
        %v2033 = vunpack.c.h.b16 %v938
        %v2034 = vunpack.c.l.b16 %v939
        %v2035 = vunpack.c.h.b16 %v939
        %v2036 = vunpack.c.l.b16 %v940
        %v2037 = vunpack.c.h.b16 %v940
        %v2038 = vunpack.c.l.b16 %v941
        %v2039 = vunpack.c.h.b16 %v941
        %v2040 = vunpack.c.l.b16 %v942
        %v2041 = vunpack.c.h.b16 %v942
        %v2042 = vunpack.c.l.b16 %v943
        %v2043 = vunpack.c.h.b16 %v943
        %v2044 = vunpack.c.l.b16 %v944
        %v2045 = vunpack.c.h.b16 %v944
        %v2046 = vunpack.c.l.b16 %v945
        %v2047 = vunpack.c.h.b16 %v945
        %v2048 = vunpack.c.l.b16 %v946
        %v2049 = vunpack.c.h.b16 %v946
        %v2050 = vunpack.c.l.b16 %v947
        %v2051 = vunpack.c.h.b16 %v947
        %v2052 = vunpack.c.l.b16 %v948
        %v2053 = vunpack.c.h.b16 %v948
        %v2054 = vunpack.c.l.b16 %v949
        %v2055 = vunpack.c.h.b16 %v949
        %v2056 = vunpack.c.l.b16 %v950
        %v2057 = vunpack.c.h.b16 %v950
        %v2058 = vunpack.c.l.b16 %v951
        %v2059 = vunpack.c.h.b16 %v951
        %v2060 = vunpack.c.l.b16 %v952
        %v2061 = vunpack.c.h.b16 %v952
        %v2062 = vunpack.c.l.b16 %v953
        %v2063 = vunpack.c.h.b16 %v953
        %v2064 = vunpack.c.l.b16 %v954
        %v2065 = vunpack.c.h.b16 %v954
        %v2066 = vunpack.c.l.b16 %v955
        %v2067 = vunpack.c.h.b16 %v955
        %v2068 = vunpack.c.l.b16 %v956
        %v2069 = vunpack.c.h.b16 %v956
        %v2070 = vunpack.c.l.b16 %v957
        %v2071 = vunpack.c.h.b16 %v957
        %v2072 = vunpack.c.l.b16 %v958
        %v2073 = vunpack.c.h.b16 %v958
        %v2074 = vunpack.c.l.b16 %v959
        %v2075 = vunpack.c.h.b16 %v959
        %v2076 = vunpack.c.l.b16 %v960
        %v2077 = vunpack.c.h.b16 %v960
        %v2078 = vunpack.c.l.b16 %v961
        %v2079 = vunpack.c.h.b16 %v961
        %v2080 = vunpack.c.l.b16 %v962
        %v2081 = vunpack.c.h.b16 %v962
        %v2082 = vunpack.c.l.b16 %v963
        %v2083 = vunpack.c.h.b16 %v963
        %v2084 = vunpack.c.l.b16 %v964
        %v2085 = vunpack.c.h.b16 %v964
        %v2086 = vunpack.c.l.b16 %v965
        %v2087 = vunpack.c.h.b16 %v965
        %v2088 = vunpack.c.l.b16 %v966
        %v2089 = vunpack.c.h.b16 %v966
        %v2090 = vunpack.c.l.b16 %v967
        %v2091 = vunpack.c.h.b16 %v967
        %v2092 = vunpack.c.l.b16 %v968
        %v2093 = vunpack.c.h.b16 %v968
        %v2094 = vunpack.c.l.b16 %v969
        %v2095 = vunpack.c.h.b16 %v969
        %v2096 = vunpack.c.l.b16 %v970
        %v2097 = vunpack.c.h.b16 %v970
        %v2098 = vunpack.c.l.b16 %v971
        %v2099 = vunpack.c.h.b16 %v971
        %v2100 = vunpack.c.l.b16 %v972
        %v2101 = vunpack.c.h.b16 %v972
        %v2102 = vunpack.c.l.b16 %v973
        %v2103 = vunpack.c.h.b16 %v973
        %v2104 = vunpack.c.l.b16 %v974
        %v2105 = vunpack.c.h.b16 %v974
        %v2106 = vunpack.c.l.b16 %v975
        %v2107 = vunpack.c.h.b16 %v975
        %v2108 = vunpack.c.l.b16 %v976
        %v2109 = vunpack.c.h.b16 %v976
        %v2110 = vunpack.c.l.b16 %v977
        %v2111 = vunpack.c.h.b16 %v977
        %v2112 = vunpack.c.l.b16 %v978
        %v2113 = vunpack.c.h.b16 %v978
        %v2114 = vunpack.c.l.b16 %v979
        %v2115 = vunpack.c.h.b16 %v979
        %v2116 = vunpack.c.l.b16 %v980
        %v2117 = vunpack.c.h.b16 %v980
        %v2118 = vunpack.c.l.b16 %v981
        %v2119 = vunpack.c.h.b16 %v981
        %v2120 = vunpack.c.l.b16 %v982
        %v2121 = vunpack.c.h.b16 %v982
        %v2122 = vunpack.c.l.b16 %v983
        %v2123 = vunpack.c.h.b16 %v983
        %v2124 = vunpack.c.l.b16 %v984
        %v2125 = vunpack.c.h.b16 %v984
        %v2126 = vunpack.c.l.b16 %v985
        %v2127 = vunpack.c.h.b16 %v985
        %v2128 = vunpack.c.l.b16 %v986
        %v2129 = vunpack.c.h.b16 %v986
        %v2130 = vunpack.c.l.b16 %v987
        %v2131 = vunpack.c.h.b16 %v987
        %v2132 = vunpack.c.l.b16 %v988
        %v2133 = vunpack.c.h.b16 %v988
        %v2134 = vunpack.c.l.b16 %v989
        %v2135 = vunpack.c.h.b16 %v989
        %v2136 = vunpack.c.l.b16 %v990
        %v2137 = vunpack.c.h.b16 %v990
        %v2138 = vunpack.c.l.b16 %v991
        %v2139 = vunpack.c.h.b16 %v991
        %v2140 = vunpack.c.l.b16 %v992
        %v2141 = vunpack.c.h.b16 %v992
        %v2142 = vunpack.c.l.b16 %v993
        %v2143 = vunpack.c.h.b16 %v993
        %v2144 = vunpack.c.l.b16 %v994
        %v2145 = vunpack.c.h.b16 %v994
        %v2146 = vunpack.c.l.b16 %v995
        %v2147 = vunpack.c.h.b16 %v995
        %v2148 = vunpack.c.l.b16 %v996
        %v2149 = vunpack.c.h.b16 %v996
        %v2150 = vunpack.c.l.b16 %v997
        %v2151 = vunpack.c.h.b16 %v997
        %v2152 = vunpack.c.l.b16 %v998
        %v2153 = vunpack.c.h.b16 %v998
        %v2154 = vunpack.c.l.b16 %v999
        %v2155 = vunpack.c.h.b16 %v999
        %v2156 = vunpack.c.l.b16 %v1000
        %v2157 = vunpack.c.h.b16 %v1000
        %v2158 = vunpack.c.l.b16 %v1001
        %v2159 = vunpack.c.h.b16 %v1001
        %v2160 = vunpack.c.l.b16 %v1002
        %v2161 = vunpack.c.h.b16 %v1002
        %v2162 = vunpack.c.l.b16 %v1003
        %v2163 = vunpack.c.h.b16 %v1003
        %v2164 = vunpack.c.l.b16 %v1004
        %v2165 = vunpack.c.h.b16 %v1004
        %v2166 = vunpack.c.l.b16 %v1005
        %v2167 = vunpack.c.h.b16 %v1005
        %v2168 = vunpack.c.l.b16 %v1006
        %v2169 = vunpack.c.h.b16 %v1006
        %v2170 = vunpack.c.l.b16 %v1007
        %v2171 = vunpack.c.h.b16 %v1007
        %v2172 = vunpack.c.l.b16 %v1008
        %v2173 = vunpack.c.h.b16 %v1008
        %v2174 = vunpack.c.l.b16 %v1009
        %v2175 = vunpack.c.h.b16 %v1009
        %v2176 = vunpack.c.l.b16 %v1010
        %v2177 = vunpack.c.h.b16 %v1010
        %v2178 = vunpack.c.l.b16 %v1011
        %v2179 = vunpack.c.h.b16 %v1011
        %v2180 = vunpack.c.l.b16 %v1012
        %v2181 = vunpack.c.h.b16 %v1012
        %v2182 = vunpack.c.l.b16 %v1013
        %v2183 = vunpack.c.h.b16 %v1013
        %v2184 = vunpack.c.l.b16 %v1014
        %v2185 = vunpack.c.h.b16 %v1014
        %v2186 = vunpack.c.l.b16 %v1015
        %v2187 = vunpack.c.h.b16 %v1015
        %v2188 = vunpack.c.l.b16 %v1016
        %v2189 = vunpack.c.h.b16 %v1016
        %v2190 = vunpack.c.l.b16 %v1017
        %v2191 = vunpack.c.h.b16 %v1017
        %v2192 = vunpack.c.l.b16 %v1018
        %v2193 = vunpack.c.h.b16 %v1018
        %v2194 = vunpack.c.l.b16 %v1019
        %v2195 = vunpack.c.h.b16 %v1019
        %v2196 = vunpack.c.l.b16 %v1020
        %v2197 = vunpack.c.h.b16 %v1020
        %v2198 = vunpack.c.l.b16 %v1021
        %v2199 = vunpack.c.h.b16 %v1021
        %v2200 = vunpack.c.l.b16 %v1022
        %v2201 = vunpack.c.h.b16 %v1022
        %v2202 = vunpack.c.l.b16 %v1023
        %v2203 = vunpack.c.h.b16 %v1023
        %v2204 = vunpack.c.l.b16 %v1024
        %v2205 = vunpack.c.h.b16 %v1024
        %v2206 = vunpack.c.l.b16 %v1025
        %v2207 = vunpack.c.h.b16 %v1025
        %v2208 = vunpack.c.l.b16 %v1026
        %v2209 = vunpack.c.h.b16 %v1026
        %v2210 = vunpack.c.l.b16 %v1027
        %v2211 = vunpack.c.h.b16 %v1027
        %v2212 = vunpack.c.l.b16 %v1028
        %v2213 = vunpack.c.h.b16 %v1028
        %v2214 = vunpack.c.l.b16 %v1029
        %v2215 = vunpack.c.h.b16 %v1029
        %v2216 = vunpack.c.l.b16 %v1030
        %v2217 = vunpack.c.h.b16 %v1030
        %v2218 = vunpack.c.l.b16 %v1031
        %v2219 = vunpack.c.h.b16 %v1031
        %v2220 = vunpack.c.l.b16 %v1032
        %v2221 = vunpack.c.h.b16 %v1032
        %v2222 = vunpack.c.l.b16 %v1033
        %v2223 = vunpack.c.h.b16 %v1033
        %v2224 = vunpack.c.l.b16 %v1034
        %v2225 = vunpack.c.h.b16 %v1034
        %v2226 = vunpack.c.l.b16 %v1035
        %v2227 = vunpack.c.h.b16 %v1035
        %v2228 = vunpack.c.l.b16 %v1036
        %v2229 = vunpack.c.h.b16 %v1036
        %v2230 = vunpack.c.l.b16 %v1037
        %v2231 = vunpack.c.h.b16 %v1037
        %v2232 = vpack.c.b16 %v1456, %v1448
        %v2233 = vpack.c.b16 %v1457, %v1449
        %v2234 = vpack.c.b16 %v1458, %v1450
        %v2235 = vpack.c.b16 %v1459, %v1451
        %v2236 = vpack.c.b16 %v1460, %v1452
        %v2237 = vpack.c.b16 %v1461, %v1453
        %v2238 = vpack.c.b16 %v1462, %v1454
        %v2239 = vpack.c.b16 %v1463, %v1455
        %v2240 = vpack.c.b16 %v1472, %v1464
        %v2241 = vpack.c.b16 %v1473, %v1465
        %v2242 = vpack.c.b16 %v1474, %v1466
        %v2243 = vpack.c.b16 %v1475, %v1467
        %v2244 = vpack.c.b16 %v1476, %v1468
        %v2245 = vpack.c.b16 %v1477, %v1469
        %v2246 = vpack.c.b16 %v1478, %v1470
        %v2247 = vpack.c.b16 %v1479, %v1471
        %v2248 = vpack.c.b16 %v1488, %v1480
        %v2249 = vpack.c.b16 %v1489, %v1481
        %v2250 = vpack.c.b16 %v1490, %v1482
        %v2251 = vpack.c.b16 %v1491, %v1483
        %v2252 = vpack.c.b16 %v1492, %v1484
        %v2253 = vpack.c.b16 %v1493, %v1485
        %v2254 = vpack.c.b16 %v1494, %v1486
        %v2255 = vpack.c.b16 %v1495, %v1487
        %v2256 = vpack.c.b16 %v1504, %v1496
        %v2257 = vpack.c.b16 %v1505, %v1497
        %v2258 = vpack.c.b16 %v1506, %v1498
        %v2259 = vpack.c.b16 %v1507, %v1499
        %v2260 = vpack.c.b16 %v1508, %v1500
        %v2261 = vpack.c.b16 %v1509, %v1501
        %v2262 = vpack.c.b16 %v1510, %v1502
        %v2263 = vpack.c.b16 %v1511, %v1503
        %v2264 = vpack.c.b16 %v1520, %v1512
        %v2265 = vpack.c.b16 %v1521, %v1513
        %v2266 = vpack.c.b16 %v1522, %v1514
        %v2267 = vpack.c.b16 %v1523, %v1515
        %v2268 = vpack.c.b16 %v1524, %v1516
        %v2269 = vpack.c.b16 %v1525, %v1517
        %v2270 = vpack.c.b16 %v1526, %v1518
        %v2271 = vpack.c.b16 %v1527, %v1519
        %v2272 = vpack.c.b16 %v1536, %v1528
        %v2273 = vpack.c.b16 %v1537, %v1529
        %v2274 = vpack.c.b16 %v1538, %v1530
        %v2275 = vpack.c.b16 %v1539, %v1531
        %v2276 = vpack.c.b16 %v1540, %v1532
        %v2277 = vpack.c.b16 %v1541, %v1533
        %v2278 = vpack.c.b16 %v1542, %v1534
        %v2279 = vpack.c.b16 %v1543, %v1535
        %v2280 = vpack.c.b16 %v1552, %v1544
        %v2281 = vpack.c.b16 %v1553, %v1545
        %v2282 = vpack.c.b16 %v1554, %v1546
        %v2283 = vpack.c.b16 %v1555, %v1547
        %v2284 = vpack.c.b16 %v1556, %v1548
        %v2285 = vpack.c.b16 %v1557, %v1549
        %v2286 = vpack.c.b16 %v1558, %v1550
        %v2287 = vpack.c.b16 %v1559, %v1551
        %v2288 = vpack.c.b16 %v1568, %v1560
        %v2289 = vpack.c.b16 %v1569, %v1561
        %v2290 = vpack.c.b16 %v1570, %v1562
        %v2291 = vpack.c.b16 %v1571, %v1563
        %v2292 = vpack.c.b16 %v1572, %v1564
        %v2293 = vpack.c.b16 %v1573, %v1565
        %v2294 = vpack.c.b16 %v1574, %v1566
        %v2295 = vpack.c.b16 %v1575, %v1567
        %v2296 = vpack.c.b16 %v1584, %v1576
        %v2297 = vpack.c.b16 %v1585, %v1577
        %v2298 = vpack.c.b16 %v1586, %v1578
        %v2299 = vpack.c.b16 %v1587, %v1579
        %v2300 = vpack.c.b16 %v1588, %v1580
        %v2301 = vpack.c.b16 %v1589, %v1581
        %v2302 = vpack.c.b16 %v1590, %v1582
        %v2303 = vpack.c.b16 %v1591, %v1583
        %v2304 = vpack.c.b16 %v1600, %v1592
        %v2305 = vpack.c.b16 %v1601, %v1593
        %v2306 = vpack.c.b16 %v1602, %v1594
        %v2307 = vpack.c.b16 %v1603, %v1595
        %v2308 = vpack.c.b16 %v1604, %v1596
        %v2309 = vpack.c.b16 %v1605, %v1597
        %v2310 = vpack.c.b16 %v1606, %v1598
        %v2311 = vpack.c.b16 %v1607, %v1599
        %v2312 = vpack.c.b16 %v1616, %v1608
        %v2313 = vpack.c.b16 %v1617, %v1609
        %v2314 = vpack.c.b16 %v1618, %v1610
        %v2315 = vpack.c.b16 %v1619, %v1611
        %v2316 = vpack.c.b16 %v1620, %v1612
        %v2317 = vpack.c.b16 %v1621, %v1613
        %v2318 = vpack.c.b16 %v1622, %v1614
        %v2319 = vpack.c.b16 %v1623, %v1615
        %v2320 = vpack.c.b16 %v1632, %v1624
        %v2321 = vpack.c.b16 %v1633, %v1625
        %v2322 = vpack.c.b16 %v1634, %v1626
        %v2323 = vpack.c.b16 %v1635, %v1627
        %v2324 = vpack.c.b16 %v1636, %v1628
        %v2325 = vpack.c.b16 %v1637, %v1629
        %v2326 = vpack.c.b16 %v1638, %v1630
        %v2327 = vpack.c.b16 %v1639, %v1631
        %v2328 = vpack.c.b16 %v1648, %v1640
        %v2329 = vpack.c.b16 %v1649, %v1641
        %v2330 = vpack.c.b16 %v1650, %v1642
        %v2331 = vpack.c.b16 %v1651, %v1643
        %v2332 = vpack.c.b16 %v1652, %v1644
        %v2333 = vpack.c.b16 %v1653, %v1645
        %v2334 = vpack.c.b16 %v1654, %v1646
        %v2335 = vpack.c.b16 %v1655, %v1647
        %v2336 = vpack.c.b16 %v1664, %v1656
        %v2337 = vpack.c.b16 %v1665, %v1657
        %v2338 = vpack.c.b16 %v1666, %v1658
        %v2339 = vpack.c.b16 %v1667, %v1659
        %v2340 = vpack.c.b16 %v1668, %v1660
        %v2341 = vpack.c.b16 %v1669, %v1661
        %v2342 = vpack.c.b16 %v1670, %v1662
        %v2343 = vpack.c.b16 %v1671, %v1663
        %v2344 = vpack.c.b16 %v1680, %v1672
        %v2345 = vpack.c.b16 %v1681, %v1673
        %v2346 = vpack.c.b16 %v1682, %v1674
        %v2347 = vpack.c.b16 %v1683, %v1675
        %v2348 = vpack.c.b16 %v1684, %v1676
        %v2349 = vpack.c.b16 %v1685, %v1677
        %v2350 = vpack.c.b16 %v1686, %v1678
        %v2351 = vpack.c.b16 %v1687, %v1679
        %v2352 = vpack.c.b16 %v1696, %v1688
        %v2353 = vpack.c.b16 %v1697, %v1689
        %v2354 = vpack.c.b16 %v1698, %v1690
        %v2355 = vpack.c.b16 %v1699, %v1691
        %v2356 = vpack.c.b16 %v1700, %v1692
        %v2357 = vpack.c.b16 %v1701, %v1693
        %v2358 = vpack.c.b16 %v1702, %v1694
        %v2359 = vpack.c.b16 %v1703, %v1695
        %v2360 = vpack.c.b16 %v1712, %v1704
        %v2361 = vpack.c.b16 %v1713, %v1705
        %v2362 = vpack.c.b16 %v1714, %v1706
        %v2363 = vpack.c.b16 %v1715, %v1707
        %v2364 = vpack.c.b16 %v1716, %v1708
        %v2365 = vpack.c.b16 %v1717, %v1709
        %v2366 = vpack.c.b16 %v1718, %v1710
        %v2367 = vpack.c.b16 %v1719, %v1711
        %v2368 = vpack.c.b16 %v1728, %v1720
        %v2369 = vpack.c.b16 %v1729, %v1721
        %v2370 = vpack.c.b16 %v1730, %v1722
        %v2371 = vpack.c.b16 %v1731, %v1723
        %v2372 = vpack.c.b16 %v1732, %v1724
        %v2373 = vpack.c.b16 %v1733, %v1725
        %v2374 = vpack.c.b16 %v1734, %v1726
        %v2375 = vpack.c.b16 %v1735, %v1727
        %v2376 = vpack.c.b16 %v1744, %v1736
        %v2377 = vpack.c.b16 %v1745, %v1737
        %v2378 = vpack.c.b16 %v1746, %v1738
        %v2379 = vpack.c.b16 %v1747, %v1739
        %v2380 = vpack.c.b16 %v1748, %v1740
        %v2381 = vpack.c.b16 %v1749, %v1741
        %v2382 = vpack.c.b16 %v1750, %v1742
        %v2383 = vpack.c.b16 %v1751, %v1743
        %v2384 = vpack.c.b16 %v1760, %v1752
        %v2385 = vpack.c.b16 %v1761, %v1753
        %v2386 = vpack.c.b16 %v1762, %v1754
        %v2387 = vpack.c.b16 %v1763, %v1755
        %v2388 = vpack.c.b16 %v1764, %v1756
        %v2389 = vpack.c.b16 %v1765, %v1757
        %v2390 = vpack.c.b16 %v1766, %v1758
        %v2391 = vpack.c.b16 %v1767, %v1759
        %v2392 = vpack.c.b16 %v1776, %v1768
        %v2393 = vpack.c.b16 %v1777, %v1769
        %v2394 = vpack.c.b16 %v1778, %v1770
        %v2395 = vpack.c.b16 %v1779, %v1771
        %v2396 = vpack.c.b16 %v1780, %v1772
        %v2397 = vpack.c.b16 %v1781, %v1773
        %v2398 = vpack.c.b16 %v1782, %v1774
        %v2399 = vpack.c.b16 %v1783, %v1775
        %v2400 = vpack.c.b16 %v1792, %v1784
        %v2401 = vpack.c.b16 %v1793, %v1785
        %v2402 = vpack.c.b16 %v1794, %v1786
        %v2403 = vpack.c.b16 %v1795, %v1787
        %v2404 = vpack.c.b16 %v1796, %v1788
        %v2405 = vpack.c.b16 %v1797, %v1789
        %v2406 = vpack.c.b16 %v1798, %v1790
        %v2407 = vpack.c.b16 %v1799, %v1791
        %v2408 = vpack.c.b16 %v1808, %v1800
        %v2409 = vpack.c.b16 %v1809, %v1801
        %v2410 = vpack.c.b16 %v1810, %v1802
        %v2411 = vpack.c.b16 %v1811, %v1803
        %v2412 = vpack.c.b16 %v1812, %v1804
        %v2413 = vpack.c.b16 %v1813, %v1805
        %v2414 = vpack.c.b16 %v1814, %v1806
        %v2415 = vpack.c.b16 %v1815, %v1807
        %v2416 = vpack.c.b16 %v1824, %v1816
        %v2417 = vpack.c.b16 %v1825, %v1817
        %v2418 = vpack.c.b16 %v1826, %v1818
        %v2419 = vpack.c.b16 %v1827, %v1819
        %v2420 = vpack.c.b16 %v1828, %v1820
        %v2421 = vpack.c.b16 %v1829, %v1821
        %v2422 = vpack.c.b16 %v1830, %v1822
        %v2423 = vpack.c.b16 %v1831, %v1823
        %v2424 = vpack.c.b16 %v1840, %v1832
        %v2425 = vpack.c.b16 %v1841, %v1833
        %v2426 = vpack.c.b16 %v1842, %v1834
        %v2427 = vpack.c.b16 %v1843, %v1835
        %v2428 = vpack.c.b16 %v1844, %v1836
        %v2429 = vpack.c.b16 %v1845, %v1837
        %v2430 = vpack.c.b16 %v1846, %v1838
        %v2431 = vpack.c.b16 %v1847, %v1839
        %v2432 = vpack.c.b16 %v1856, %v1848
        %v2433 = vpack.c.b16 %v1857, %v1849
        %v2434 = vpack.c.b16 %v1858, %v1850
        %v2435 = vpack.c.b16 %v1859, %v1851
        %v2436 = vpack.c.b16 %v1860, %v1852
        %v2437 = vpack.c.b16 %v1861, %v1853
        %v2438 = vpack.c.b16 %v1862, %v1854
        %v2439 = vpack.c.b16 %v1863, %v1855
        %v2440 = vpack.c.b16 %v1872, %v1864
        %v2441 = vpack.c.b16 %v1873, %v1865
        %v2442 = vpack.c.b16 %v1874, %v1866
        %v2443 = vpack.c.b16 %v1875, %v1867
        %v2444 = vpack.c.b16 %v1876, %v1868
        %v2445 = vpack.c.b16 %v1877, %v1869
        %v2446 = vpack.c.b16 %v1878, %v1870
        %v2447 = vpack.c.b16 %v1879, %v1871
        %v2448 = vpack.c.b16 %v1888, %v1880
        %v2449 = vpack.c.b16 %v1889, %v1881
        %v2450 = vpack.c.b16 %v1890, %v1882
        %v2451 = vpack.c.b16 %v1891, %v1883
        %v2452 = vpack.c.b16 %v1892, %v1884
        %v2453 = vpack.c.b16 %v1893, %v1885
        %v2454 = vpack.c.b16 %v1894, %v1886
        %v2455 = vpack.c.b16 %v1895, %v1887
        %v2456 = vpack.c.b16 %v1904, %v1896
        %v2457 = vpack.c.b16 %v1905, %v1897
        %v2458 = vpack.c.b16 %v1906, %v1898
        %v2459 = vpack.c.b16 %v1907, %v1899
        %v2460 = vpack.c.b16 %v1908, %v1900
        %v2461 = vpack.c.b16 %v1909, %v1901
        %v2462 = vpack.c.b16 %v1910, %v1902
        %v2463 = vpack.c.b16 %v1911, %v1903
        %v2464 = vpack.c.b16 %v1920, %v1912
        %v2465 = vpack.c.b16 %v1921, %v1913
        %v2466 = vpack.c.b16 %v1922, %v1914
        %v2467 = vpack.c.b16 %v1923, %v1915
        %v2468 = vpack.c.b16 %v1924, %v1916
        %v2469 = vpack.c.b16 %v1925, %v1917
        %v2470 = vpack.c.b16 %v1926, %v1918
        %v2471 = vpack.c.b16 %v1927, %v1919
        %v2472 = vpack.c.b16 %v1936, %v1928
        %v2473 = vpack.c.b16 %v1937, %v1929
        %v2474 = vpack.c.b16 %v1938, %v1930
        %v2475 = vpack.c.b16 %v1939, %v1931
        %v2476 = vpack.c.b16 %v1940, %v1932
        %v2477 = vpack.c.b16 %v1941, %v1933
        %v2478 = vpack.c.b16 %v1942, %v1934
        %v2479 = vpack.c.b16 %v1943, %v1935
        %v2480 = vpack.c.b16 %v1952, %v1944
        %v2481 = vpack.c.b16 %v1953, %v1945
        %v2482 = vpack.c.b16 %v1954, %v1946
        %v2483 = vpack.c.b16 %v1955, %v1947
        %v2484 = vpack.c.b16 %v1956, %v1948
        %v2485 = vpack.c.b16 %v1957, %v1949
        %v2486 = vpack.c.b16 %v1958, %v1950
        %v2487 = vpack.c.b16 %v1959, %v1951
        %v2488 = vpack.c.b16 %v1968, %v1960
        %v2489 = vpack.c.b16 %v1969, %v1961
        %v2490 = vpack.c.b16 %v1970, %v1962
        %v2491 = vpack.c.b16 %v1971, %v1963
        %v2492 = vpack.c.b16 %v1972, %v1964
        %v2493 = vpack.c.b16 %v1973, %v1965
        %v2494 = vpack.c.b16 %v1974, %v1966
        %v2495 = vpack.c.b16 %v1975, %v1967
        %v2496 = vpack.c.b16 %v1984, %v1976
        %v2497 = vpack.c.b16 %v1985, %v1977
        %v2498 = vpack.c.b16 %v1986, %v1978
        %v2499 = vpack.c.b16 %v1987, %v1979
        %v2500 = vpack.c.b16 %v1988, %v1980
        %v2501 = vpack.c.b16 %v1989, %v1981
        %v2502 = vpack.c.b16 %v1990, %v1982
        %v2503 = vpack.c.b16 %v1991, %v1983
        %v2504 = vpack.c.b16 %v2000, %v1992
        %v2505 = vpack.c.b16 %v2001, %v1993
        %v2506 = vpack.c.b16 %v2002, %v1994
        %v2507 = vpack.c.b16 %v2003, %v1995
        %v2508 = vpack.c.b16 %v2004, %v1996
        %v2509 = vpack.c.b16 %v2005, %v1997
        %v2510 = vpack.c.b16 %v2006, %v1998
        %v2511 = vpack.c.b16 %v2007, %v1999
        %v2512 = vpack.c.b16 %v2016, %v2008
        %v2513 = vpack.c.b16 %v2017, %v2009
        %v2514 = vpack.c.b16 %v2018, %v2010
        %v2515 = vpack.c.b16 %v2019, %v2011
        %v2516 = vpack.c.b16 %v2020, %v2012
        %v2517 = vpack.c.b16 %v2021, %v2013
        %v2518 = vpack.c.b16 %v2022, %v2014
        %v2519 = vpack.c.b16 %v2023, %v2015
        %v2520 = vpack.c.b16 %v2032, %v2024
        %v2521 = vpack.c.b16 %v2033, %v2025
        %v2522 = vpack.c.b16 %v2034, %v2026
        %v2523 = vpack.c.b16 %v2035, %v2027
        %v2524 = vpack.c.b16 %v2036, %v2028
        %v2525 = vpack.c.b16 %v2037, %v2029
        %v2526 = vpack.c.b16 %v2038, %v2030
        %v2527 = vpack.c.b16 %v2039, %v2031
        %v2528 = vpack.c.b16 %v2048, %v2040
        %v2529 = vpack.c.b16 %v2049, %v2041
        %v2530 = vpack.c.b16 %v2050, %v2042
        %v2531 = vpack.c.b16 %v2051, %v2043
        %v2532 = vpack.c.b16 %v2052, %v2044
        %v2533 = vpack.c.b16 %v2053, %v2045
        %v2534 = vpack.c.b16 %v2054, %v2046
        %v2535 = vpack.c.b16 %v2055, %v2047
        %v2536 = vpack.c.b16 %v2064, %v2056
        %v2537 = vpack.c.b16 %v2065, %v2057
        %v2538 = vpack.c.b16 %v2066, %v2058
        %v2539 = vpack.c.b16 %v2067, %v2059
        %v2540 = vpack.c.b16 %v2068, %v2060
        %v2541 = vpack.c.b16 %v2069, %v2061
        %v2542 = vpack.c.b16 %v2070, %v2062
        %v2543 = vpack.c.b16 %v2071, %v2063
        %v2544 = vpack.c.b16 %v2080, %v2072
        %v2545 = vpack.c.b16 %v2081, %v2073
        %v2546 = vpack.c.b16 %v2082, %v2074
        %v2547 = vpack.c.b16 %v2083, %v2075
        %v2548 = vpack.c.b16 %v2084, %v2076
        %v2549 = vpack.c.b16 %v2085, %v2077
        %v2550 = vpack.c.b16 %v2086, %v2078
        %v2551 = vpack.c.b16 %v2087, %v2079
        %v2552 = vpack.c.b16 %v2096, %v2088
        %v2553 = vpack.c.b16 %v2097, %v2089
        %v2554 = vpack.c.b16 %v2098, %v2090
        %v2555 = vpack.c.b16 %v2099, %v2091
        %v2556 = vpack.c.b16 %v2100, %v2092
        %v2557 = vpack.c.b16 %v2101, %v2093
        %v2558 = vpack.c.b16 %v2102, %v2094
        %v2559 = vpack.c.b16 %v2103, %v2095
        %v2560 = vpack.c.b16 %v2112, %v2104
        %v2561 = vpack.c.b16 %v2113, %v2105
        %v2562 = vpack.c.b16 %v2114, %v2106
        %v2563 = vpack.c.b16 %v2115, %v2107
        %v2564 = vpack.c.b16 %v2116, %v2108
        %v2565 = vpack.c.b16 %v2117, %v2109
        %v2566 = vpack.c.b16 %v2118, %v2110
        %v2567 = vpack.c.b16 %v2119, %v2111
        %v2568 = vpack.c.b16 %v2128, %v2120
        %v2569 = vpack.c.b16 %v2129, %v2121
        %v2570 = vpack.c.b16 %v2130, %v2122
        %v2571 = vpack.c.b16 %v2131, %v2123
        %v2572 = vpack.c.b16 %v2132, %v2124
        %v2573 = vpack.c.b16 %v2133, %v2125
        %v2574 = vpack.c.b16 %v2134, %v2126
        %v2575 = vpack.c.b16 %v2135, %v2127
        %v2576 = vpack.c.b16 %v2144, %v2136
        %v2577 = vpack.c.b16 %v2145, %v2137
        %v2578 = vpack.c.b16 %v2146, %v2138
        %v2579 = vpack.c.b16 %v2147, %v2139
        %v2580 = vpack.c.b16 %v2148, %v2140
        %v2581 = vpack.c.b16 %v2149, %v2141
        %v2582 = vpack.c.b16 %v2150, %v2142
        %v2583 = vpack.c.b16 %v2151, %v2143
        %v2584 = vpack.c.b16 %v2160, %v2152
        %v2585 = vpack.c.b16 %v2161, %v2153
        %v2586 = vpack.c.b16 %v2162, %v2154
        %v2587 = vpack.c.b16 %v2163, %v2155
        %v2588 = vpack.c.b16 %v2164, %v2156
        %v2589 = vpack.c.b16 %v2165, %v2157
        %v2590 = vpack.c.b16 %v2166, %v2158
        %v2591 = vpack.c.b16 %v2167, %v2159
        %v2592 = vpack.c.b16 %v2176, %v2168
        %v2593 = vpack.c.b16 %v2177, %v2169
        %v2594 = vpack.c.b16 %v2178, %v2170
        %v2595 = vpack.c.b16 %v2179, %v2171
        %v2596 = vpack.c.b16 %v2180, %v2172
        %v2597 = vpack.c.b16 %v2181, %v2173
        %v2598 = vpack.c.b16 %v2182, %v2174
        %v2599 = vpack.c.b16 %v2183, %v2175
        %v2600 = vpack.c.b16 %v2192, %v2184
        %v2601 = vpack.c.b16 %v2193, %v2185
        %v2602 = vpack.c.b16 %v2194, %v2186
        %v2603 = vpack.c.b16 %v2195, %v2187
        %v2604 = vpack.c.b16 %v2196, %v2188
        %v2605 = vpack.c.b16 %v2197, %v2189
        %v2606 = vpack.c.b16 %v2198, %v2190
        %v2607 = vpack.c.b16 %v2199, %v2191
        %v2608 = vpack.c.b16 %v2208, %v2200
        %v2609 = vpack.c.b16 %v2209, %v2201
        %v2610 = vpack.c.b16 %v2210, %v2202
        %v2611 = vpack.c.b16 %v2211, %v2203
        %v2612 = vpack.c.b16 %v2212, %v2204
        %v2613 = vpack.c.b16 %v2213, %v2205
        %v2614 = vpack.c.b16 %v2214, %v2206
        %v2615 = vpack.c.b16 %v2215, %v2207
        %v2616 = vpack.c.b16 %v2224, %v2216
        %v2617 = vpack.c.b16 %v2225, %v2217
        %v2618 = vpack.c.b16 %v2226, %v2218
        %v2619 = vpack.c.b16 %v2227, %v2219
        %v2620 = vpack.c.b16 %v2228, %v2220
        %v2621 = vpack.c.b16 %v2229, %v2221
        %v2622 = vpack.c.b16 %v2230, %v2222
        %v2623 = vpack.c.b16 %v2231, %v2223
        %vm3016 = vcmask 130048
        %v3018 = vsel %vm3016, %v645, 0
        %3020 = vmatpush.bf16.msra.mxu0 %v2288
        %3021 = vmatpush.bf16.msra.mxu0 %v2280
        %3022 = vmatpush.bf16.msra.mxu0 %v2272
        %3023 = vmatpush.bf16.msra.mxu0 %v2264
        %3024 = vmatpush.bf16.msra.mxu0 %v2256
        %3025 = vmatpush.bf16.msra.mxu0 %v2248
        %3026 = vmatpush.bf16.msra.mxu0 %v2240
        %3027 = vmatpush.bf16.msra.mxu0 %v2232
        %3028 = vmatmul.bf16.gmra.mxu0 %v639
        %v3029 = vpop.f32.mrf.mxu0
        %v3030 = vadd.f32 %v1040, %v3029
        %v3031 = vpop.f32.mrf.mxu0
        %v3032 = vadd.f32 %v1040, %v3031
        %3033 = vdwg.mxu0
        %3034 = vmatpush.bf16.msra.mxu0 %v2352
        %3035 = vmatpush.bf16.msra.mxu0 %v2344
        %3036 = vmatpush.bf16.msra.mxu0 %v2336
        %3037 = vmatpush.bf16.msra.mxu0 %v2328
        %3038 = vmatpush.bf16.msra.mxu0 %v2320
        %3039 = vmatpush.bf16.msra.mxu0 %v2312
        %3040 = vmatpush.bf16.msra.mxu0 %v2304
        %3041 = vmatpush.bf16.msra.mxu0 %v2296
        %3042 = vmatmul.bf16.gmra.mxu0 %v640
        %v3043 = vpop.f32.mrf.mxu0
        %v3044 = vadd.f32 %v3030, %v3043
        %v3045 = vpop.f32.mrf.mxu0
        %v3046 = vadd.f32 %v3032, %v3045
        %3047 = vdwg.mxu0
        %3048 = vmatpush.bf16.msra.mxu0 %v2416
        %3049 = vmatpush.bf16.msra.mxu0 %v2408
        %3050 = vmatpush.bf16.msra.mxu0 %v2400
        %3051 = vmatpush.bf16.msra.mxu0 %v2392
        %3052 = vmatpush.bf16.msra.mxu0 %v2384
        %3053 = vmatpush.bf16.msra.mxu0 %v2376
        %3054 = vmatpush.bf16.msra.mxu0 %v2368
        %3055 = vmatpush.bf16.msra.mxu0 %v2360
        %3056 = vmatmul.bf16.gmra.mxu0 %v641
        %v3057 = vpop.f32.mrf.mxu0
        %v3058 = vadd.f32 %v3044, %v3057
        %v3059 = vpop.f32.mrf.mxu0
        %v3060 = vadd.f32 %v3046, %v3059
        %3061 = vdwg.mxu0
        %3062 = vmatpush.bf16.msra.mxu0 %v2480
        %3063 = vmatpush.bf16.msra.mxu0 %v2472
        %3064 = vmatpush.bf16.msra.mxu0 %v2464
        %3065 = vmatpush.bf16.msra.mxu0 %v2456
        %3066 = vmatpush.bf16.msra.mxu0 %v2448
        %3067 = vmatpush.bf16.msra.mxu0 %v2440
        %3068 = vmatpush.bf16.msra.mxu0 %v2432
        %3069 = vmatpush.bf16.msra.mxu0 %v2424
        %3070 = vmatmul.bf16.gmra.mxu0 %v642
        %v3071 = vpop.f32.mrf.mxu0
        %v3072 = vadd.f32 %v3058, %v3071
        %v3073 = vpop.f32.mrf.mxu0
        %v3074 = vadd.f32 %v3060, %v3073
        %3075 = vdwg.mxu0
        %3076 = vmatpush.bf16.msra.mxu0 %v2544
        %3077 = vmatpush.bf16.msra.mxu0 %v2536
        %3078 = vmatpush.bf16.msra.mxu0 %v2528
        %3079 = vmatpush.bf16.msra.mxu0 %v2520
        %3080 = vmatpush.bf16.msra.mxu0 %v2512
        %3081 = vmatpush.bf16.msra.mxu0 %v2504
        %3082 = vmatpush.bf16.msra.mxu0 %v2496
        %3083 = vmatpush.bf16.msra.mxu0 %v2488
        %3084 = vmatmul.bf16.gmra.mxu0 %v643
        %v3085 = vpop.f32.mrf.mxu0
        %v3086 = vadd.f32 %v3072, %v3085
        %v3087 = vpop.f32.mrf.mxu0
        %v3088 = vadd.f32 %v3074, %v3087
        %3089 = vdwg.mxu0
        %3090 = vmatpush.bf16.msra.mxu0 %v2608
        %3091 = vmatpush.bf16.msra.mxu0 %v2600
        %3092 = vmatpush.bf16.msra.mxu0 %v2592
        %3093 = vmatpush.bf16.msra.mxu0 %v2584
        %3094 = vmatpush.bf16.msra.mxu0 %v2576
        %3095 = vmatpush.bf16.msra.mxu0 %v2568
        %3096 = vmatpush.bf16.msra.mxu0 %v2560
        %3097 = vmatpush.bf16.msra.mxu0 %v2552
        %3098 = vmatmul.bf16.gmra.mxu0 %v644
        %v3099 = vpop.f32.mrf.mxu0
        %v3100 = vadd.f32 %v3086, %v3099
        %v3101 = vpop.f32.mrf.mxu0
        %v3102 = vadd.f32 %v3088, %v3101
        %3103 = vdwg.mxu0
        %3104 = vmatpush.bf16.msra.mxu0 0
        %3105 = vmatpush.bf16.msra.mxu0 0
        %3106 = vmatpush.bf16.msra.mxu0 0
        %3107 = vmatpush.bf16.msra.mxu0 0
        %3108 = vmatpush.bf16.msra.mxu0 0
        %3109 = vmatpush.bf16.msra.mxu0 0
        %3110 = vmatpush.bf16.msra.mxu0 0
        %3111 = vmatpush.bf16.msra.mxu0 %v2616
        %3112 = vmatmul.bf16.gmra.mxu0 %v3018
        %v3113 = vpop.f32.mrf.mxu0
        %v3114 = vadd.f32 %v3100, %v3113
        %v3115 = vpop.f32.mrf.mxu0
        %v3116 = vadd.f32 %v3102, %v3115
        %3117 = vdwg.mxu0
        %3118 = vmatpush.bf16.msra.mxu0 %v2289
        %3119 = vmatpush.bf16.msra.mxu0 %v2281
        %3120 = vmatpush.bf16.msra.mxu0 %v2273
        %3121 = vmatpush.bf16.msra.mxu0 %v2265
        %3122 = vmatpush.bf16.msra.mxu0 %v2257
        %3123 = vmatpush.bf16.msra.mxu0 %v2249
        %3124 = vmatpush.bf16.msra.mxu0 %v2241
        %3125 = vmatpush.bf16.msra.mxu0 %v2233
        %3126 = vmatmul.bf16.gmra.mxu0 %v639
        %v3127 = vpop.f32.mrf.mxu0
        %v3128 = vadd.f32 %v1041, %v3127
        %v3129 = vpop.f32.mrf.mxu0
        %v3130 = vadd.f32 %v1041, %v3129
        %3131 = vdwg.mxu0
        %3132 = vmatpush.bf16.msra.mxu0 %v2353
        %3133 = vmatpush.bf16.msra.mxu0 %v2345
        %3134 = vmatpush.bf16.msra.mxu0 %v2337
        %3135 = vmatpush.bf16.msra.mxu0 %v2329
        %3136 = vmatpush.bf16.msra.mxu0 %v2321
        %3137 = vmatpush.bf16.msra.mxu0 %v2313
        %3138 = vmatpush.bf16.msra.mxu0 %v2305
        %3139 = vmatpush.bf16.msra.mxu0 %v2297
        %3140 = vmatmul.bf16.gmra.mxu0 %v640
        %v3141 = vpop.f32.mrf.mxu0
        %v3142 = vadd.f32 %v3128, %v3141
        %v3143 = vpop.f32.mrf.mxu0
        %v3144 = vadd.f32 %v3130, %v3143
        %3145 = vdwg.mxu0
        %3146 = vmatpush.bf16.msra.mxu0 %v2417
        %3147 = vmatpush.bf16.msra.mxu0 %v2409
        %3148 = vmatpush.bf16.msra.mxu0 %v2401
        %3149 = vmatpush.bf16.msra.mxu0 %v2393
        %3150 = vmatpush.bf16.msra.mxu0 %v2385
        %3151 = vmatpush.bf16.msra.mxu0 %v2377
        %3152 = vmatpush.bf16.msra.mxu0 %v2369
        %3153 = vmatpush.bf16.msra.mxu0 %v2361
        %3154 = vmatmul.bf16.gmra.mxu0 %v641
        %v3155 = vpop.f32.mrf.mxu0
        %v3156 = vadd.f32 %v3142, %v3155
        %v3157 = vpop.f32.mrf.mxu0
        %v3158 = vadd.f32 %v3144, %v3157
        %3159 = vdwg.mxu0
        %3160 = vmatpush.bf16.msra.mxu0 %v2481
        %3161 = vmatpush.bf16.msra.mxu0 %v2473
        %3162 = vmatpush.bf16.msra.mxu0 %v2465
        %3163 = vmatpush.bf16.msra.mxu0 %v2457
        %3164 = vmatpush.bf16.msra.mxu0 %v2449
        %3165 = vmatpush.bf16.msra.mxu0 %v2441
        %3166 = vmatpush.bf16.msra.mxu0 %v2433
        %3167 = vmatpush.bf16.msra.mxu0 %v2425
        %3168 = vmatmul.bf16.gmra.mxu0 %v642
        %v3169 = vpop.f32.mrf.mxu0
        %v3170 = vadd.f32 %v3156, %v3169
        %v3171 = vpop.f32.mrf.mxu0
        %v3172 = vadd.f32 %v3158, %v3171
        %3173 = vdwg.mxu0
        %3174 = vmatpush.bf16.msra.mxu0 %v2545
        %3175 = vmatpush.bf16.msra.mxu0 %v2537
        %3176 = vmatpush.bf16.msra.mxu0 %v2529
        %3177 = vmatpush.bf16.msra.mxu0 %v2521
        %3178 = vmatpush.bf16.msra.mxu0 %v2513
        %3179 = vmatpush.bf16.msra.mxu0 %v2505
        %3180 = vmatpush.bf16.msra.mxu0 %v2497
        %3181 = vmatpush.bf16.msra.mxu0 %v2489
        %3182 = vmatmul.bf16.gmra.mxu0 %v643
        %v3183 = vpop.f32.mrf.mxu0
        %v3184 = vadd.f32 %v3170, %v3183
        %v3185 = vpop.f32.mrf.mxu0
        %v3186 = vadd.f32 %v3172, %v3185
        %3187 = vdwg.mxu0
        %3188 = vmatpush.bf16.msra.mxu0 %v2609
        %3189 = vmatpush.bf16.msra.mxu0 %v2601
        %3190 = vmatpush.bf16.msra.mxu0 %v2593
        %3191 = vmatpush.bf16.msra.mxu0 %v2585
        %3192 = vmatpush.bf16.msra.mxu0 %v2577
        %3193 = vmatpush.bf16.msra.mxu0 %v2569
        %3194 = vmatpush.bf16.msra.mxu0 %v2561
        %3195 = vmatpush.bf16.msra.mxu0 %v2553
        %3196 = vmatmul.bf16.gmra.mxu0 %v644
        %v3197 = vpop.f32.mrf.mxu0
        %v3198 = vadd.f32 %v3184, %v3197
        %v3199 = vpop.f32.mrf.mxu0
        %v3200 = vadd.f32 %v3186, %v3199
        %3201 = vdwg.mxu0
        %3202 = vmatpush.bf16.msra.mxu0 0
        %3203 = vmatpush.bf16.msra.mxu0 0
        %3204 = vmatpush.bf16.msra.mxu0 0
        %3205 = vmatpush.bf16.msra.mxu0 0
        %3206 = vmatpush.bf16.msra.mxu0 0
        %3207 = vmatpush.bf16.msra.mxu0 0
        %3208 = vmatpush.bf16.msra.mxu0 0
        %3209 = vmatpush.bf16.msra.mxu0 %v2617
        %3210 = vmatmul.bf16.gmra.mxu0 %v3018
        %v3211 = vpop.f32.mrf.mxu0
        %v3212 = vadd.f32 %v3198, %v3211
        %v3213 = vpop.f32.mrf.mxu0
        %v3214 = vadd.f32 %v3200, %v3213
        %3215 = vdwg.mxu0
        %3216 = vmatpush.bf16.msra.mxu0 %v2290
        %3217 = vmatpush.bf16.msra.mxu0 %v2282
        %3218 = vmatpush.bf16.msra.mxu0 %v2274
        %3219 = vmatpush.bf16.msra.mxu0 %v2266
        %3220 = vmatpush.bf16.msra.mxu0 %v2258
        %3221 = vmatpush.bf16.msra.mxu0 %v2250
        %3222 = vmatpush.bf16.msra.mxu0 %v2242
        %3223 = vmatpush.bf16.msra.mxu0 %v2234
        %3224 = vmatmul.bf16.gmra.mxu0 %v639
        %v3225 = vpop.f32.mrf.mxu0
        %v3226 = vadd.f32 %v1042, %v3225
        %v3227 = vpop.f32.mrf.mxu0
        %v3228 = vadd.f32 %v1042, %v3227
        %3229 = vdwg.mxu0
        %3230 = vmatpush.bf16.msra.mxu0 %v2354
        %3231 = vmatpush.bf16.msra.mxu0 %v2346
        %3232 = vmatpush.bf16.msra.mxu0 %v2338
        %3233 = vmatpush.bf16.msra.mxu0 %v2330
        %3234 = vmatpush.bf16.msra.mxu0 %v2322
        %3235 = vmatpush.bf16.msra.mxu0 %v2314
        %3236 = vmatpush.bf16.msra.mxu0 %v2306
        %3237 = vmatpush.bf16.msra.mxu0 %v2298
        %3238 = vmatmul.bf16.gmra.mxu0 %v640
        %v3239 = vpop.f32.mrf.mxu0
        %v3240 = vadd.f32 %v3226, %v3239
        %v3241 = vpop.f32.mrf.mxu0
        %v3242 = vadd.f32 %v3228, %v3241
        %3243 = vdwg.mxu0
        %3244 = vmatpush.bf16.msra.mxu0 %v2418
        %3245 = vmatpush.bf16.msra.mxu0 %v2410
        %3246 = vmatpush.bf16.msra.mxu0 %v2402
        %3247 = vmatpush.bf16.msra.mxu0 %v2394
        %3248 = vmatpush.bf16.msra.mxu0 %v2386
        %3249 = vmatpush.bf16.msra.mxu0 %v2378
        %3250 = vmatpush.bf16.msra.mxu0 %v2370
        %3251 = vmatpush.bf16.msra.mxu0 %v2362
        %3252 = vmatmul.bf16.gmra.mxu0 %v641
        %v3253 = vpop.f32.mrf.mxu0
        %v3254 = vadd.f32 %v3240, %v3253
        %v3255 = vpop.f32.mrf.mxu0
        %v3256 = vadd.f32 %v3242, %v3255
        %3257 = vdwg.mxu0
        %3258 = vmatpush.bf16.msra.mxu0 %v2482
        %3259 = vmatpush.bf16.msra.mxu0 %v2474
        %3260 = vmatpush.bf16.msra.mxu0 %v2466
        %3261 = vmatpush.bf16.msra.mxu0 %v2458
        %3262 = vmatpush.bf16.msra.mxu0 %v2450
        %3263 = vmatpush.bf16.msra.mxu0 %v2442
        %3264 = vmatpush.bf16.msra.mxu0 %v2434
        %3265 = vmatpush.bf16.msra.mxu0 %v2426
        %3266 = vmatmul.bf16.gmra.mxu0 %v642
        %v3267 = vpop.f32.mrf.mxu0
        %v3268 = vadd.f32 %v3254, %v3267
        %v3269 = vpop.f32.mrf.mxu0
        %v3270 = vadd.f32 %v3256, %v3269
        %3271 = vdwg.mxu0
        %3272 = vmatpush.bf16.msra.mxu0 %v2546
        %3273 = vmatpush.bf16.msra.mxu0 %v2538
        %3274 = vmatpush.bf16.msra.mxu0 %v2530
        %3275 = vmatpush.bf16.msra.mxu0 %v2522
        %3276 = vmatpush.bf16.msra.mxu0 %v2514
        %3277 = vmatpush.bf16.msra.mxu0 %v2506
        %3278 = vmatpush.bf16.msra.mxu0 %v2498
        %3279 = vmatpush.bf16.msra.mxu0 %v2490
        %3280 = vmatmul.bf16.gmra.mxu0 %v643
        %v3281 = vpop.f32.mrf.mxu0
        %v3282 = vadd.f32 %v3268, %v3281
        %v3283 = vpop.f32.mrf.mxu0
        %v3284 = vadd.f32 %v3270, %v3283
        %3285 = vdwg.mxu0
        %3286 = vmatpush.bf16.msra.mxu0 %v2610
        %3287 = vmatpush.bf16.msra.mxu0 %v2602
        %3288 = vmatpush.bf16.msra.mxu0 %v2594
        %3289 = vmatpush.bf16.msra.mxu0 %v2586
        %3290 = vmatpush.bf16.msra.mxu0 %v2578
        %3291 = vmatpush.bf16.msra.mxu0 %v2570
        %3292 = vmatpush.bf16.msra.mxu0 %v2562
        %3293 = vmatpush.bf16.msra.mxu0 %v2554
        %3294 = vmatmul.bf16.gmra.mxu0 %v644
        %v3295 = vpop.f32.mrf.mxu0
        %v3296 = vadd.f32 %v3282, %v3295
        %v3297 = vpop.f32.mrf.mxu0
        %v3298 = vadd.f32 %v3284, %v3297
        %3299 = vdwg.mxu0
        %3300 = vmatpush.bf16.msra.mxu0 0
        %3301 = vmatpush.bf16.msra.mxu0 0
        %3302 = vmatpush.bf16.msra.mxu0 0
        %3303 = vmatpush.bf16.msra.mxu0 0
        %3304 = vmatpush.bf16.msra.mxu0 0
        %3305 = vmatpush.bf16.msra.mxu0 0
        %3306 = vmatpush.bf16.msra.mxu0 0
        %3307 = vmatpush.bf16.msra.mxu0 %v2618
        %3308 = vmatmul.bf16.gmra.mxu0 %v3018
        %v3309 = vpop.f32.mrf.mxu0
        %v3310 = vadd.f32 %v3296, %v3309
        %v3311 = vpop.f32.mrf.mxu0
        %v3312 = vadd.f32 %v3298, %v3311
        %3313 = vdwg.mxu0
        %3314 = vmatpush.bf16.msra.mxu0 %v2291
        %3315 = vmatpush.bf16.msra.mxu0 %v2283
        %3316 = vmatpush.bf16.msra.mxu0 %v2275
        %3317 = vmatpush.bf16.msra.mxu0 %v2267
        %3318 = vmatpush.bf16.msra.mxu0 %v2259
        %3319 = vmatpush.bf16.msra.mxu0 %v2251
        %3320 = vmatpush.bf16.msra.mxu0 %v2243
        %3321 = vmatpush.bf16.msra.mxu0 %v2235
        %3322 = vmatmul.bf16.gmra.mxu0 %v639
        %v3323 = vpop.f32.mrf.mxu0
        %v3324 = vadd.f32 %v1043, %v3323
        %v3325 = vpop.f32.mrf.mxu0
        %v3326 = vadd.f32 %v1043, %v3325
        %3327 = vdwg.mxu0
        %3328 = vmatpush.bf16.msra.mxu0 %v2355
        %3329 = vmatpush.bf16.msra.mxu0 %v2347
        %3330 = vmatpush.bf16.msra.mxu0 %v2339
        %3331 = vmatpush.bf16.msra.mxu0 %v2331
        %3332 = vmatpush.bf16.msra.mxu0 %v2323
        %3333 = vmatpush.bf16.msra.mxu0 %v2315
        %3334 = vmatpush.bf16.msra.mxu0 %v2307
        %3335 = vmatpush.bf16.msra.mxu0 %v2299
        %3336 = vmatmul.bf16.gmra.mxu0 %v640
        %v3337 = vpop.f32.mrf.mxu0
        %v3338 = vadd.f32 %v3324, %v3337
        %v3339 = vpop.f32.mrf.mxu0
        %v3340 = vadd.f32 %v3326, %v3339
        %3341 = vdwg.mxu0
        %3342 = vmatpush.bf16.msra.mxu0 %v2419
        %3343 = vmatpush.bf16.msra.mxu0 %v2411
        %3344 = vmatpush.bf16.msra.mxu0 %v2403
        %3345 = vmatpush.bf16.msra.mxu0 %v2395
        %3346 = vmatpush.bf16.msra.mxu0 %v2387
        %3347 = vmatpush.bf16.msra.mxu0 %v2379
        %3348 = vmatpush.bf16.msra.mxu0 %v2371
        %3349 = vmatpush.bf16.msra.mxu0 %v2363
        %3350 = vmatmul.bf16.gmra.mxu0 %v641
        %v3351 = vpop.f32.mrf.mxu0
        %v3352 = vadd.f32 %v3338, %v3351
        %v3353 = vpop.f32.mrf.mxu0
        %v3354 = vadd.f32 %v3340, %v3353
        %3355 = vdwg.mxu0
        %3356 = vmatpush.bf16.msra.mxu0 %v2483
        %3357 = vmatpush.bf16.msra.mxu0 %v2475
        %3358 = vmatpush.bf16.msra.mxu0 %v2467
        %3359 = vmatpush.bf16.msra.mxu0 %v2459
        %3360 = vmatpush.bf16.msra.mxu0 %v2451
        %3361 = vmatpush.bf16.msra.mxu0 %v2443
        %3362 = vmatpush.bf16.msra.mxu0 %v2435
        %3363 = vmatpush.bf16.msra.mxu0 %v2427
        %3364 = vmatmul.bf16.gmra.mxu0 %v642
        %v3365 = vpop.f32.mrf.mxu0
        %v3366 = vadd.f32 %v3352, %v3365
        %v3367 = vpop.f32.mrf.mxu0
        %v3368 = vadd.f32 %v3354, %v3367
        %3369 = vdwg.mxu0
        %3370 = vmatpush.bf16.msra.mxu0 %v2547
        %3371 = vmatpush.bf16.msra.mxu0 %v2539
        %3372 = vmatpush.bf16.msra.mxu0 %v2531
        %3373 = vmatpush.bf16.msra.mxu0 %v2523
        %3374 = vmatpush.bf16.msra.mxu0 %v2515
        %3375 = vmatpush.bf16.msra.mxu0 %v2507
        %3376 = vmatpush.bf16.msra.mxu0 %v2499
        %3377 = vmatpush.bf16.msra.mxu0 %v2491
        %3378 = vmatmul.bf16.gmra.mxu0 %v643
        %v3379 = vpop.f32.mrf.mxu0
        %v3380 = vadd.f32 %v3366, %v3379
        %v3381 = vpop.f32.mrf.mxu0
        %v3382 = vadd.f32 %v3368, %v3381
        %3383 = vdwg.mxu0
        %3384 = vmatpush.bf16.msra.mxu0 %v2611
        %3385 = vmatpush.bf16.msra.mxu0 %v2603
        %3386 = vmatpush.bf16.msra.mxu0 %v2595
        %3387 = vmatpush.bf16.msra.mxu0 %v2587
        %3388 = vmatpush.bf16.msra.mxu0 %v2579
        %3389 = vmatpush.bf16.msra.mxu0 %v2571
        %3390 = vmatpush.bf16.msra.mxu0 %v2563
        %3391 = vmatpush.bf16.msra.mxu0 %v2555
        %3392 = vmatmul.bf16.gmra.mxu0 %v644
        %v3393 = vpop.f32.mrf.mxu0
        %v3394 = vadd.f32 %v3380, %v3393
        %v3395 = vpop.f32.mrf.mxu0
        %v3396 = vadd.f32 %v3382, %v3395
        %3397 = vdwg.mxu0
        %3398 = vmatpush.bf16.msra.mxu0 0
        %3399 = vmatpush.bf16.msra.mxu0 0
        %3400 = vmatpush.bf16.msra.mxu0 0
        %3401 = vmatpush.bf16.msra.mxu0 0
        %3402 = vmatpush.bf16.msra.mxu0 0
        %3403 = vmatpush.bf16.msra.mxu0 0
        %3404 = vmatpush.bf16.msra.mxu0 0
        %3405 = vmatpush.bf16.msra.mxu0 %v2619
        %3406 = vmatmul.bf16.gmra.mxu0 %v3018
        %v3407 = vpop.f32.mrf.mxu0
        %v3408 = vadd.f32 %v3394, %v3407
        %v3409 = vpop.f32.mrf.mxu0
        %v3410 = vadd.f32 %v3396, %v3409
        %3411 = vdwg.mxu0
        %3412 = vmatpush.bf16.msra.mxu0 %v2292
        %3413 = vmatpush.bf16.msra.mxu0 %v2284
        %3414 = vmatpush.bf16.msra.mxu0 %v2276
        %3415 = vmatpush.bf16.msra.mxu0 %v2268
        %3416 = vmatpush.bf16.msra.mxu0 %v2260
        %3417 = vmatpush.bf16.msra.mxu0 %v2252
        %3418 = vmatpush.bf16.msra.mxu0 %v2244
        %3419 = vmatpush.bf16.msra.mxu0 %v2236
        %3420 = vmatmul.bf16.gmra.mxu0 %v639
        %v3421 = vpop.f32.mrf.mxu0
        %v3422 = vadd.f32 %v1044, %v3421
        %v3423 = vpop.f32.mrf.mxu0
        %v3424 = vadd.f32 %v1044, %v3423
        %3425 = vdwg.mxu0
        %3426 = vmatpush.bf16.msra.mxu0 %v2356
        %3427 = vmatpush.bf16.msra.mxu0 %v2348
        %3428 = vmatpush.bf16.msra.mxu0 %v2340
        %3429 = vmatpush.bf16.msra.mxu0 %v2332
        %3430 = vmatpush.bf16.msra.mxu0 %v2324
        %3431 = vmatpush.bf16.msra.mxu0 %v2316
        %3432 = vmatpush.bf16.msra.mxu0 %v2308
        %3433 = vmatpush.bf16.msra.mxu0 %v2300
        %3434 = vmatmul.bf16.gmra.mxu0 %v640
        %v3435 = vpop.f32.mrf.mxu0
        %v3436 = vadd.f32 %v3422, %v3435
        %v3437 = vpop.f32.mrf.mxu0
        %v3438 = vadd.f32 %v3424, %v3437
        %3439 = vdwg.mxu0
        %3440 = vmatpush.bf16.msra.mxu0 %v2420
        %3441 = vmatpush.bf16.msra.mxu0 %v2412
        %3442 = vmatpush.bf16.msra.mxu0 %v2404
        %3443 = vmatpush.bf16.msra.mxu0 %v2396
        %3444 = vmatpush.bf16.msra.mxu0 %v2388
        %3445 = vmatpush.bf16.msra.mxu0 %v2380
        %3446 = vmatpush.bf16.msra.mxu0 %v2372
        %3447 = vmatpush.bf16.msra.mxu0 %v2364
        %3448 = vmatmul.bf16.gmra.mxu0 %v641
        %v3449 = vpop.f32.mrf.mxu0
        %v3450 = vadd.f32 %v3436, %v3449
        %v3451 = vpop.f32.mrf.mxu0
        %v3452 = vadd.f32 %v3438, %v3451
        %3453 = vdwg.mxu0
        %3454 = vmatpush.bf16.msra.mxu0 %v2484
        %3455 = vmatpush.bf16.msra.mxu0 %v2476
        %3456 = vmatpush.bf16.msra.mxu0 %v2468
        %3457 = vmatpush.bf16.msra.mxu0 %v2460
        %3458 = vmatpush.bf16.msra.mxu0 %v2452
        %3459 = vmatpush.bf16.msra.mxu0 %v2444
        %3460 = vmatpush.bf16.msra.mxu0 %v2436
        %3461 = vmatpush.bf16.msra.mxu0 %v2428
        %3462 = vmatmul.bf16.gmra.mxu0 %v642
        %v3463 = vpop.f32.mrf.mxu0
        %v3464 = vadd.f32 %v3450, %v3463
        %v3465 = vpop.f32.mrf.mxu0
        %v3466 = vadd.f32 %v3452, %v3465
        %3467 = vdwg.mxu0
        %3468 = vmatpush.bf16.msra.mxu0 %v2548
        %3469 = vmatpush.bf16.msra.mxu0 %v2540
        %3470 = vmatpush.bf16.msra.mxu0 %v2532
        %3471 = vmatpush.bf16.msra.mxu0 %v2524
        %3472 = vmatpush.bf16.msra.mxu0 %v2516
        %3473 = vmatpush.bf16.msra.mxu0 %v2508
        %3474 = vmatpush.bf16.msra.mxu0 %v2500
        %3475 = vmatpush.bf16.msra.mxu0 %v2492
        %3476 = vmatmul.bf16.gmra.mxu0 %v643
        %v3477 = vpop.f32.mrf.mxu0
        %v3478 = vadd.f32 %v3464, %v3477
        %v3479 = vpop.f32.mrf.mxu0
        %v3480 = vadd.f32 %v3466, %v3479
        %3481 = vdwg.mxu0
        %3482 = vmatpush.bf16.msra.mxu0 %v2612
        %3483 = vmatpush.bf16.msra.mxu0 %v2604
        %3484 = vmatpush.bf16.msra.mxu0 %v2596
        %3485 = vmatpush.bf16.msra.mxu0 %v2588
        %3486 = vmatpush.bf16.msra.mxu0 %v2580
        %3487 = vmatpush.bf16.msra.mxu0 %v2572
        %3488 = vmatpush.bf16.msra.mxu0 %v2564
        %3489 = vmatpush.bf16.msra.mxu0 %v2556
        %3490 = vmatmul.bf16.gmra.mxu0 %v644
        %v3491 = vpop.f32.mrf.mxu0
        %v3492 = vadd.f32 %v3478, %v3491
        %v3493 = vpop.f32.mrf.mxu0
        %v3494 = vadd.f32 %v3480, %v3493
        %3495 = vdwg.mxu0
        %3496 = vmatpush.bf16.msra.mxu0 0
        %3497 = vmatpush.bf16.msra.mxu0 0
        %3498 = vmatpush.bf16.msra.mxu0 0
        %3499 = vmatpush.bf16.msra.mxu0 0
        %3500 = vmatpush.bf16.msra.mxu0 0
        %3501 = vmatpush.bf16.msra.mxu0 0
        %3502 = vmatpush.bf16.msra.mxu0 0
        %3503 = vmatpush.bf16.msra.mxu0 %v2620
        %3504 = vmatmul.bf16.gmra.mxu0 %v3018
        %v3505 = vpop.f32.mrf.mxu0
        %v3506 = vadd.f32 %v3492, %v3505
        %v3507 = vpop.f32.mrf.mxu0
        %v3508 = vadd.f32 %v3494, %v3507
        %3509 = vdwg.mxu0
        %3510 = vmatpush.bf16.msra.mxu0 %v2293
        %3511 = vmatpush.bf16.msra.mxu0 %v2285
        %3512 = vmatpush.bf16.msra.mxu0 %v2277
        %3513 = vmatpush.bf16.msra.mxu0 %v2269
        %3514 = vmatpush.bf16.msra.mxu0 %v2261
        %3515 = vmatpush.bf16.msra.mxu0 %v2253
        %3516 = vmatpush.bf16.msra.mxu0 %v2245
        %3517 = vmatpush.bf16.msra.mxu0 %v2237
        %3518 = vmatmul.bf16.gmra.mxu0 %v639
        %v3519 = vpop.f32.mrf.mxu0
        %v3520 = vadd.f32 %v1045, %v3519
        %v3521 = vpop.f32.mrf.mxu0
        %v3522 = vadd.f32 %v1045, %v3521
        %3523 = vdwg.mxu0
        %3524 = vmatpush.bf16.msra.mxu0 %v2357
        %3525 = vmatpush.bf16.msra.mxu0 %v2349
        %3526 = vmatpush.bf16.msra.mxu0 %v2341
        %3527 = vmatpush.bf16.msra.mxu0 %v2333
        %3528 = vmatpush.bf16.msra.mxu0 %v2325
        %3529 = vmatpush.bf16.msra.mxu0 %v2317
        %3530 = vmatpush.bf16.msra.mxu0 %v2309
        %3531 = vmatpush.bf16.msra.mxu0 %v2301
        %3532 = vmatmul.bf16.gmra.mxu0 %v640
        %v3533 = vpop.f32.mrf.mxu0
        %v3534 = vadd.f32 %v3520, %v3533
        %v3535 = vpop.f32.mrf.mxu0
        %v3536 = vadd.f32 %v3522, %v3535
        %3537 = vdwg.mxu0
        %3538 = vmatpush.bf16.msra.mxu0 %v2421
        %3539 = vmatpush.bf16.msra.mxu0 %v2413
        %3540 = vmatpush.bf16.msra.mxu0 %v2405
        %3541 = vmatpush.bf16.msra.mxu0 %v2397
        %3542 = vmatpush.bf16.msra.mxu0 %v2389
        %3543 = vmatpush.bf16.msra.mxu0 %v2381
        %3544 = vmatpush.bf16.msra.mxu0 %v2373
        %3545 = vmatpush.bf16.msra.mxu0 %v2365
        %3546 = vmatmul.bf16.gmra.mxu0 %v641
        %v3547 = vpop.f32.mrf.mxu0
        %v3548 = vadd.f32 %v3534, %v3547
        %v3549 = vpop.f32.mrf.mxu0
        %v3550 = vadd.f32 %v3536, %v3549
        %3551 = vdwg.mxu0
        %3552 = vmatpush.bf16.msra.mxu0 %v2485
        %3553 = vmatpush.bf16.msra.mxu0 %v2477
        %3554 = vmatpush.bf16.msra.mxu0 %v2469
        %3555 = vmatpush.bf16.msra.mxu0 %v2461
        %3556 = vmatpush.bf16.msra.mxu0 %v2453
        %3557 = vmatpush.bf16.msra.mxu0 %v2445
        %3558 = vmatpush.bf16.msra.mxu0 %v2437
        %3559 = vmatpush.bf16.msra.mxu0 %v2429
        %3560 = vmatmul.bf16.gmra.mxu0 %v642
        %v3561 = vpop.f32.mrf.mxu0
        %v3562 = vadd.f32 %v3548, %v3561
        %v3563 = vpop.f32.mrf.mxu0
        %v3564 = vadd.f32 %v3550, %v3563
        %3565 = vdwg.mxu0
        %3566 = vmatpush.bf16.msra.mxu0 %v2549
        %3567 = vmatpush.bf16.msra.mxu0 %v2541
        %3568 = vmatpush.bf16.msra.mxu0 %v2533
        %3569 = vmatpush.bf16.msra.mxu0 %v2525
        %3570 = vmatpush.bf16.msra.mxu0 %v2517
        %3571 = vmatpush.bf16.msra.mxu0 %v2509
        %3572 = vmatpush.bf16.msra.mxu0 %v2501
        %3573 = vmatpush.bf16.msra.mxu0 %v2493
        %3574 = vmatmul.bf16.gmra.mxu0 %v643
        %v3575 = vpop.f32.mrf.mxu0
        %v3576 = vadd.f32 %v3562, %v3575
        %v3577 = vpop.f32.mrf.mxu0
        %v3578 = vadd.f32 %v3564, %v3577
        %3579 = vdwg.mxu0
        %3580 = vmatpush.bf16.msra.mxu0 %v2613
        %3581 = vmatpush.bf16.msra.mxu0 %v2605
        %3582 = vmatpush.bf16.msra.mxu0 %v2597
        %3583 = vmatpush.bf16.msra.mxu0 %v2589
        %3584 = vmatpush.bf16.msra.mxu0 %v2581
        %3585 = vmatpush.bf16.msra.mxu0 %v2573
        %3586 = vmatpush.bf16.msra.mxu0 %v2565
        %3587 = vmatpush.bf16.msra.mxu0 %v2557
        %3588 = vmatmul.bf16.gmra.mxu0 %v644
        %v3589 = vpop.f32.mrf.mxu0
        %v3590 = vadd.f32 %v3576, %v3589
        %v3591 = vpop.f32.mrf.mxu0
        %v3592 = vadd.f32 %v3578, %v3591
        %3593 = vdwg.mxu0
        %3594 = vmatpush.bf16.msra.mxu0 0
        %3595 = vmatpush.bf16.msra.mxu0 0
        %3596 = vmatpush.bf16.msra.mxu0 0
        %3597 = vmatpush.bf16.msra.mxu0 0
        %3598 = vmatpush.bf16.msra.mxu0 0
        %3599 = vmatpush.bf16.msra.mxu0 0
        %3600 = vmatpush.bf16.msra.mxu0 0
        %3601 = vmatpush.bf16.msra.mxu0 %v2621
        %3602 = vmatmul.bf16.gmra.mxu0 %v3018
        %v3603 = vpop.f32.mrf.mxu0
        %v3604 = vadd.f32 %v3590, %v3603
        %v3605 = vpop.f32.mrf.mxu0
        %v3606 = vadd.f32 %v3592, %v3605
        %3607 = vdwg.mxu0
        %3608 = vmatpush.bf16.msra.mxu0 %v2294
        %3609 = vmatpush.bf16.msra.mxu0 %v2286
        %3610 = vmatpush.bf16.msra.mxu0 %v2278
        %3611 = vmatpush.bf16.msra.mxu0 %v2270
        %3612 = vmatpush.bf16.msra.mxu0 %v2262
        %3613 = vmatpush.bf16.msra.mxu0 %v2254
        %3614 = vmatpush.bf16.msra.mxu0 %v2246
        %3615 = vmatpush.bf16.msra.mxu0 %v2238
        %3616 = vmatmul.bf16.gmra.mxu0 %v639
        %v3617 = vpop.f32.mrf.mxu0
        %v3618 = vadd.f32 %v1046, %v3617
        %v3619 = vpop.f32.mrf.mxu0
        %v3620 = vadd.f32 %v1046, %v3619
        %3621 = vdwg.mxu0
        %3622 = vmatpush.bf16.msra.mxu0 %v2358
        %3623 = vmatpush.bf16.msra.mxu0 %v2350
        %3624 = vmatpush.bf16.msra.mxu0 %v2342
        %3625 = vmatpush.bf16.msra.mxu0 %v2334
        %3626 = vmatpush.bf16.msra.mxu0 %v2326
        %3627 = vmatpush.bf16.msra.mxu0 %v2318
        %3628 = vmatpush.bf16.msra.mxu0 %v2310
        %3629 = vmatpush.bf16.msra.mxu0 %v2302
        %3630 = vmatmul.bf16.gmra.mxu0 %v640
        %v3631 = vpop.f32.mrf.mxu0
        %v3632 = vadd.f32 %v3618, %v3631
        %v3633 = vpop.f32.mrf.mxu0
        %v3634 = vadd.f32 %v3620, %v3633
        %3635 = vdwg.mxu0
        %3636 = vmatpush.bf16.msra.mxu0 %v2422
        %3637 = vmatpush.bf16.msra.mxu0 %v2414
        %3638 = vmatpush.bf16.msra.mxu0 %v2406
        %3639 = vmatpush.bf16.msra.mxu0 %v2398
        %3640 = vmatpush.bf16.msra.mxu0 %v2390
        %3641 = vmatpush.bf16.msra.mxu0 %v2382
        %3642 = vmatpush.bf16.msra.mxu0 %v2374
        %3643 = vmatpush.bf16.msra.mxu0 %v2366
        %3644 = vmatmul.bf16.gmra.mxu0 %v641
        %v3645 = vpop.f32.mrf.mxu0
        %v3646 = vadd.f32 %v3632, %v3645
        %v3647 = vpop.f32.mrf.mxu0
        %v3648 = vadd.f32 %v3634, %v3647
        %3649 = vdwg.mxu0
        %3650 = vmatpush.bf16.msra.mxu0 %v2486
        %3651 = vmatpush.bf16.msra.mxu0 %v2478
        %3652 = vmatpush.bf16.msra.mxu0 %v2470
        %3653 = vmatpush.bf16.msra.mxu0 %v2462
        %3654 = vmatpush.bf16.msra.mxu0 %v2454
        %3655 = vmatpush.bf16.msra.mxu0 %v2446
        %3656 = vmatpush.bf16.msra.mxu0 %v2438
        %3657 = vmatpush.bf16.msra.mxu0 %v2430
        %3658 = vmatmul.bf16.gmra.mxu0 %v642
        %v3659 = vpop.f32.mrf.mxu0
        %v3660 = vadd.f32 %v3646, %v3659
        %v3661 = vpop.f32.mrf.mxu0
        %v3662 = vadd.f32 %v3648, %v3661
        %3663 = vdwg.mxu0
        %3664 = vmatpush.bf16.msra.mxu0 %v2550
        %3665 = vmatpush.bf16.msra.mxu0 %v2542
        %3666 = vmatpush.bf16.msra.mxu0 %v2534
        %3667 = vmatpush.bf16.msra.mxu0 %v2526
        %3668 = vmatpush.bf16.msra.mxu0 %v2518
        %3669 = vmatpush.bf16.msra.mxu0 %v2510
        %3670 = vmatpush.bf16.msra.mxu0 %v2502
        %3671 = vmatpush.bf16.msra.mxu0 %v2494
        %3672 = vmatmul.bf16.gmra.mxu0 %v643
        %v3673 = vpop.f32.mrf.mxu0
        %v3674 = vadd.f32 %v3660, %v3673
        %v3675 = vpop.f32.mrf.mxu0
        %v3676 = vadd.f32 %v3662, %v3675
        %3677 = vdwg.mxu0
        %3678 = vmatpush.bf16.msra.mxu0 %v2614
        %3679 = vmatpush.bf16.msra.mxu0 %v2606
        %3680 = vmatpush.bf16.msra.mxu0 %v2598
        %3681 = vmatpush.bf16.msra.mxu0 %v2590
        %3682 = vmatpush.bf16.msra.mxu0 %v2582
        %3683 = vmatpush.bf16.msra.mxu0 %v2574
        %3684 = vmatpush.bf16.msra.mxu0 %v2566
        %3685 = vmatpush.bf16.msra.mxu0 %v2558
        %3686 = vmatmul.bf16.gmra.mxu0 %v644
        %v3687 = vpop.f32.mrf.mxu0
        %v3688 = vadd.f32 %v3674, %v3687
        %v3689 = vpop.f32.mrf.mxu0
        %v3690 = vadd.f32 %v3676, %v3689
        %3691 = vdwg.mxu0
        %3692 = vmatpush.bf16.msra.mxu0 0
        %3693 = vmatpush.bf16.msra.mxu0 0
        %3694 = vmatpush.bf16.msra.mxu0 0
        %3695 = vmatpush.bf16.msra.mxu0 0
        %3696 = vmatpush.bf16.msra.mxu0 0
        %3697 = vmatpush.bf16.msra.mxu0 0
        %3698 = vmatpush.bf16.msra.mxu0 0
        %3699 = vmatpush.bf16.msra.mxu0 %v2622
        %3700 = vmatmul.bf16.gmra.mxu0 %v3018
        %v3701 = vpop.f32.mrf.mxu0
        %v3702 = vadd.f32 %v3688, %v3701
        %v3703 = vpop.f32.mrf.mxu0
        %v3704 = vadd.f32 %v3690, %v3703
        %3705 = vdwg.mxu0
        %3706 = vmatpush.bf16.msra.mxu0 %v2295
        %3707 = vmatpush.bf16.msra.mxu0 %v2287
        %3708 = vmatpush.bf16.msra.mxu0 %v2279
        %3709 = vmatpush.bf16.msra.mxu0 %v2271
        %3710 = vmatpush.bf16.msra.mxu0 %v2263
        %3711 = vmatpush.bf16.msra.mxu0 %v2255
        %3712 = vmatpush.bf16.msra.mxu0 %v2247
        %3713 = vmatpush.bf16.msra.mxu0 %v2239
        %3714 = vmatmul.bf16.gmra.mxu0 %v639
        %v3715 = vpop.f32.mrf.mxu0
        %v3716 = vadd.f32 %v1047, %v3715
        %v3717 = vpop.f32.mrf.mxu0
        %v3718 = vadd.f32 %v1047, %v3717
        %3719 = vdwg.mxu0
        %3720 = vmatpush.bf16.msra.mxu0 %v2359
        %3721 = vmatpush.bf16.msra.mxu0 %v2351
        %3722 = vmatpush.bf16.msra.mxu0 %v2343
        %3723 = vmatpush.bf16.msra.mxu0 %v2335
        %3724 = vmatpush.bf16.msra.mxu0 %v2327
        %3725 = vmatpush.bf16.msra.mxu0 %v2319
        %3726 = vmatpush.bf16.msra.mxu0 %v2311
        %3727 = vmatpush.bf16.msra.mxu0 %v2303
        %3728 = vmatmul.bf16.gmra.mxu0 %v640
        %v3729 = vpop.f32.mrf.mxu0
        %v3730 = vadd.f32 %v3716, %v3729
        %v3731 = vpop.f32.mrf.mxu0
        %v3732 = vadd.f32 %v3718, %v3731
        %3733 = vdwg.mxu0
        %3734 = vmatpush.bf16.msra.mxu0 %v2423
        %3735 = vmatpush.bf16.msra.mxu0 %v2415
        %3736 = vmatpush.bf16.msra.mxu0 %v2407
        %3737 = vmatpush.bf16.msra.mxu0 %v2399
        %3738 = vmatpush.bf16.msra.mxu0 %v2391
        %3739 = vmatpush.bf16.msra.mxu0 %v2383
        %3740 = vmatpush.bf16.msra.mxu0 %v2375
        %3741 = vmatpush.bf16.msra.mxu0 %v2367
        %3742 = vmatmul.bf16.gmra.mxu0 %v641
        %v3743 = vpop.f32.mrf.mxu0
        %v3744 = vadd.f32 %v3730, %v3743
        %v3745 = vpop.f32.mrf.mxu0
        %v3746 = vadd.f32 %v3732, %v3745
        %3747 = vdwg.mxu0
        %3748 = vmatpush.bf16.msra.mxu0 %v2487
        %3749 = vmatpush.bf16.msra.mxu0 %v2479
        %3750 = vmatpush.bf16.msra.mxu0 %v2471
        %3751 = vmatpush.bf16.msra.mxu0 %v2463
        %3752 = vmatpush.bf16.msra.mxu0 %v2455
        %3753 = vmatpush.bf16.msra.mxu0 %v2447
        %3754 = vmatpush.bf16.msra.mxu0 %v2439
        %3755 = vmatpush.bf16.msra.mxu0 %v2431
        %3756 = vmatmul.bf16.gmra.mxu0 %v642
        %v3757 = vpop.f32.mrf.mxu0
        %v3758 = vadd.f32 %v3744, %v3757
        %v3759 = vpop.f32.mrf.mxu0
        %v3760 = vadd.f32 %v3746, %v3759
        %3761 = vdwg.mxu0
        %3762 = vmatpush.bf16.msra.mxu0 %v2551
        %3763 = vmatpush.bf16.msra.mxu0 %v2543
        %3764 = vmatpush.bf16.msra.mxu0 %v2535
        %3765 = vmatpush.bf16.msra.mxu0 %v2527
        %3766 = vmatpush.bf16.msra.mxu0 %v2519
        %3767 = vmatpush.bf16.msra.mxu0 %v2511
        %3768 = vmatpush.bf16.msra.mxu0 %v2503
        %3769 = vmatpush.bf16.msra.mxu0 %v2495
        %3770 = vmatmul.bf16.gmra.mxu0 %v643
        %v3771 = vpop.f32.mrf.mxu0
        %v3772 = vadd.f32 %v3758, %v3771
        %v3773 = vpop.f32.mrf.mxu0
        %v3774 = vadd.f32 %v3760, %v3773
        %3775 = vdwg.mxu0
        %3776 = vmatpush.bf16.msra.mxu0 %v2615
        %3777 = vmatpush.bf16.msra.mxu0 %v2607
        %3778 = vmatpush.bf16.msra.mxu0 %v2599
        %3779 = vmatpush.bf16.msra.mxu0 %v2591
        %3780 = vmatpush.bf16.msra.mxu0 %v2583
        %3781 = vmatpush.bf16.msra.mxu0 %v2575
        %3782 = vmatpush.bf16.msra.mxu0 %v2567
        %3783 = vmatpush.bf16.msra.mxu0 %v2559
        %3784 = vmatmul.bf16.gmra.mxu0 %v644
        %v3785 = vpop.f32.mrf.mxu0
        %v3786 = vadd.f32 %v3772, %v3785
        %v3787 = vpop.f32.mrf.mxu0
        %v3788 = vadd.f32 %v3774, %v3787
        %3789 = vdwg.mxu0
        %3790 = vmatpush.bf16.msra.mxu0 0
        %3791 = vmatpush.bf16.msra.mxu0 0
        %3792 = vmatpush.bf16.msra.mxu0 0
        %3793 = vmatpush.bf16.msra.mxu0 0
        %3794 = vmatpush.bf16.msra.mxu0 0
        %3795 = vmatpush.bf16.msra.mxu0 0
        %3796 = vmatpush.bf16.msra.mxu0 0
        %3797 = vmatpush.bf16.msra.mxu0 %v2623
        %3798 = vmatmul.bf16.gmra.mxu0 %v3018
        %v3799 = vpop.f32.mrf.mxu0
        %v3800 = vadd.f32 %v3786, %v3799
        %v3801 = vpop.f32.mrf.mxu0
        %v3802 = vadd.f32 %v3788, %v3801
        %3803 = vdwg.mxu0
        %vm3804 = vcmp.gt.f32.partialorder %v3114, 0.0
        %vm3805 = vcmp.gt.f32.partialorder %v3212, 0.0
        %vm3806 = vcmp.gt.f32.partialorder %v3310, 0.0
        %vm3807 = vcmp.gt.f32.partialorder %v3408, 0.0
        %vm3808 = vcmp.gt.f32.partialorder %v3506, 0.0
        %vm3809 = vcmp.gt.f32.partialorder %v3604, 0.0
        %vm3810 = vcmp.gt.f32.partialorder %v3702, 0.0
        %vm3811 = vcmp.gt.f32.partialorder %v3800, 0.0
        %vm3812 = vcmp.gt.f32.partialorder %v3116, 0.0
        %vm3813 = vcmp.gt.f32.partialorder %v3214, 0.0
        %vm3814 = vcmp.gt.f32.partialorder %v3312, 0.0
        %vm3815 = vcmp.gt.f32.partialorder %v3410, 0.0
        %vm3816 = vcmp.gt.f32.partialorder %v3508, 0.0
        %vm3817 = vcmp.gt.f32.partialorder %v3606, 0.0
        %vm3818 = vcmp.gt.f32.partialorder %v3704, 0.0
        %vm3819 = vcmp.gt.f32.partialorder %v3802, 0.0
        %v3820 = vmul.f32 %v3114, 0.2
        %v3821 = vmul.f32 %v3212, 0.2
        %v3822 = vmul.f32 %v3310, 0.2
        %v3823 = vmul.f32 %v3408, 0.2
        %v3824 = vmul.f32 %v3506, 0.2
        %v3825 = vmul.f32 %v3604, 0.2
        %v3826 = vmul.f32 %v3702, 0.2
        %v3827 = vmul.f32 %v3800, 0.2
        %v3828 = vmul.f32 %v3116, 0.2
        %v3829 = vmul.f32 %v3214, 0.2
        %v3830 = vmul.f32 %v3312, 0.2
        %v3831 = vmul.f32 %v3410, 0.2
        %v3832 = vmul.f32 %v3508, 0.2
        %v3833 = vmul.f32 %v3606, 0.2
        %v3834 = vmul.f32 %v3704, 0.2
        %v3835 = vmul.f32 %v3802, 0.2
        %v3836 = vsel %vm3804, %v3114, %v3820
        %v3837 = vsel %vm3805, %v3212, %v3821
        %v3838 = vsel %vm3806, %v3310, %v3822
        %v3839 = vsel %vm3807, %v3408, %v3823
        %v3840 = vsel %vm3808, %v3506, %v3824
        %v3841 = vsel %vm3809, %v3604, %v3825
        %v3842 = vsel %vm3810, %v3702, %v3826
        %v3843 = vsel %vm3811, %v3800, %v3827
        %v3844 = vsel %vm3812, %v3116, %v3828
        %v3845 = vsel %vm3813, %v3214, %v3829
        %v3846 = vsel %vm3814, %v3312, %v3830
        %v3847 = vsel %vm3815, %v3410, %v3831
        %v3848 = vsel %vm3816, %v3508, %v3832
        %v3849 = vsel %vm3817, %v3606, %v3833
        %v3850 = vsel %vm3818, %v3704, %v3834
        %v3851 = vsel %vm3819, %v3802, %v3835
        %v3852 = vld [vmem:[%s602] sm:$0xff]
        %v3853 = vld [vmem:[%s602 + $0x8] sm:$0xff]
        %v3854 = vld [vmem:[%s602 + $0x10] sm:$0xff]
        %v3855 = vld [vmem:[%s602 + $0x18] sm:$0xff]
        %v3856 = vld [vmem:[%s602 + $0x20] sm:$0xff]
        %v3857 = vld [vmem:[%s602 + $0x28] sm:$0xff]
        %v3858 = vld [vmem:[%s602 + $0x30] sm:$0xff]
        %v3859 = vld [vmem:[%s602 + $0x38] sm:$0xff]
        %v3860 = vunpack.c.l.bf16 %v3852
        %v3861 = vunpack.c.h.bf16 %v3852
        %v3862 = vunpack.c.l.bf16 %v3853
        %v3863 = vunpack.c.h.bf16 %v3853
        %v3864 = vunpack.c.l.bf16 %v3854
        %v3865 = vunpack.c.h.bf16 %v3854
        %v3866 = vunpack.c.l.bf16 %v3855
        %v3867 = vunpack.c.h.bf16 %v3855
        %v3868 = vunpack.c.l.bf16 %v3856
        %v3869 = vunpack.c.h.bf16 %v3856
        %v3870 = vunpack.c.l.bf16 %v3857
        %v3871 = vunpack.c.h.bf16 %v3857
        %v3872 = vunpack.c.l.bf16 %v3858
        %v3873 = vunpack.c.h.bf16 %v3858
        %v3874 = vunpack.c.l.bf16 %v3859
        %v3875 = vunpack.c.h.bf16 %v3859
        %v3876 = vmul.f32 %v3836, %v3860
        %v3877 = vmul.f32 %v3837, %v3861
        %v3878 = vmul.f32 %v3838, %v3862
        %v3879 = vmul.f32 %v3839, %v3863
        %v3880 = vmul.f32 %v3840, %v3864
        %v3881 = vmul.f32 %v3841, %v3865
        %v3882 = vmul.f32 %v3842, %v3866
        %v3883 = vmul.f32 %v3843, %v3867
        %v3884 = vmul.f32 %v3844, %v3868
        %v3885 = vmul.f32 %v3845, %v3869
        %v3886 = vmul.f32 %v3846, %v3870
        %v3887 = vmul.f32 %v3847, %v3871
        %v3888 = vmul.f32 %v3848, %v3872
        %v3889 = vmul.f32 %v3849, %v3873
        %v3890 = vmul.f32 %v3850, %v3874
        %v3891 = vmul.f32 %v3851, %v3875
        %v3892 = vpack.c.bf16 %v3884, %v3876
        %v3893 = vpack.c.bf16 %v3885, %v3877
        %v3894 = vpack.c.bf16 %v3886, %v3878
        %v3895 = vpack.c.bf16 %v3887, %v3879
        %v3896 = vpack.c.bf16 %v3888, %v3880
        %v3897 = vpack.c.bf16 %v3889, %v3881
        %v3898 = vpack.c.bf16 %v3890, %v3882
        %v3899 = vpack.c.bf16 %v3891, %v3883
        %v3900 = vld [vmem:[#allocation8] sm:$0xff]
        %v3901 = vld [vmem:[#allocation8 + $0x8] sm:$0xff]
        %v3902 = vld [vmem:[#allocation8 + $0x10] sm:$0xff]
        %v3903 = vld [vmem:[#allocation8 + $0x18] sm:$0xff]
        %v3904 = vld [vmem:[#allocation8 + $0x20] sm:$0xff]
        %v3905 = vld [vmem:[#allocation8 + $0x28] sm:$0xff]
        %v3906 = vld [vmem:[#allocation8 + $0x30] sm:$0xff]
        %v3907 = vld [vmem:[#allocation8 + $0x38] sm:$0xff]
        %v3908 = vld [vmem:[#allocation8 + $0x40] sm:$0xff]
        %v3909 = vld [vmem:[#allocation8 + $0x48] sm:$0xff]
        %v3910 = vld [vmem:[#allocation8 + $0x50] sm:$0xff]
        %v3911 = vld [vmem:[#allocation8 + $0x58] sm:$0xff]
        %v3912 = vld [vmem:[#allocation8 + $0x60] sm:$0xff]
        %v3913 = vld [vmem:[#allocation8 + $0x68] sm:$0xff]
        %v3914 = vld [vmem:[#allocation8 + $0x70] sm:$0xff]
        %v3915 = vld [vmem:[#allocation8 + $0x78] sm:$0xff]
        %v3916 = vld [vmem:[#allocation8 + $0x80] sm:$0xff]
        %v3917 = vld [vmem:[#allocation8 + $0x88] sm:$0xff]
        %v3918 = vld [vmem:[#allocation8 + $0x90] sm:$0xff]
        %v3919 = vld [vmem:[#allocation8 + $0x98] sm:$0xff]
        %v3920 = vld [vmem:[#allocation8 + $0xa0] sm:$0xff]
        %v3921 = vld [vmem:[#allocation8 + $0xa8] sm:$0xff]
        %v3922 = vld [vmem:[#allocation8 + $0xb0] sm:$0xff]
        %v3923 = vld [vmem:[#allocation8 + $0xb8] sm:$0xff]
        %v3924 = vld [vmem:[#allocation8 + $0xc0] sm:$0xff]
        %v3925 = vld [vmem:[#allocation8 + $0xc8] sm:$0xff]
        %v3926 = vld [vmem:[#allocation8 + $0xd0] sm:$0xff]
        %v3927 = vld [vmem:[#allocation8 + $0xd8] sm:$0xff]
        %v3928 = vld [vmem:[#allocation8 + $0xe0] sm:$0xff]
        %v3929 = vld [vmem:[#allocation8 + $0xe8] sm:$0xff]
        %v3930 = vld [vmem:[#allocation8 + $0xf0] sm:$0xff]
        %v3931 = vld [vmem:[#allocation8 + $0xf8] sm:$0xff]
        %v3932 = vld [vmem:[#allocation8 + $0x100] sm:$0xff]
        %v3933 = vld [vmem:[#allocation8 + $0x108] sm:$0xff]
        %v3934 = vld [vmem:[#allocation8 + $0x110] sm:$0xff]
        %v3935 = vld [vmem:[#allocation8 + $0x118] sm:$0xff]
        %v3936 = vld [vmem:[#allocation8 + $0x120] sm:$0xff]
        %v3937 = vld [vmem:[#allocation8 + $0x128] sm:$0xff]
        %v3938 = vld [vmem:[#allocation8 + $0x130] sm:$0xff]
        %v3939 = vld [vmem:[#allocation8 + $0x138] sm:$0xff]
        %v3940 = vld [vmem:[#allocation8 + $0x140] sm:$0xff]
        %v3941 = vld [vmem:[#allocation8 + $0x148] sm:$0xff]
        %v3942 = vld [vmem:[#allocation8 + $0x150] sm:$0xff]
        %v3943 = vld [vmem:[#allocation8 + $0x158] sm:$0xff]
        %v3944 = vld [vmem:[#allocation8 + $0x160] sm:$0xff]
        %v3945 = vld [vmem:[#allocation8 + $0x168] sm:$0xff]
        %v3946 = vld [vmem:[#allocation8 + $0x170] sm:$0xff]
        %v3947 = vld [vmem:[#allocation8 + $0x178] sm:$0xff]
        %v3948 = vld [vmem:[#allocation8 + $0x180] sm:$0xff]
        %v3949 = vld [vmem:[#allocation8 + $0x188] sm:$0xff]
        %v3950 = vld [vmem:[#allocation8 + $0x190] sm:$0xff]
        %v3951 = vld [vmem:[#allocation8 + $0x198] sm:$0xff]
        %v3952 = vld [vmem:[#allocation8 + $0x1a0] sm:$0xff]
        %v3953 = vld [vmem:[#allocation8 + $0x1a8] sm:$0xff]
        %v3954 = vld [vmem:[#allocation8 + $0x1b0] sm:$0xff]
        %v3955 = vld [vmem:[#allocation8 + $0x1b8] sm:$0xff]
        %v3956 = vld [vmem:[#allocation8 + $0x1c0] sm:$0xff]
        %v3957 = vld [vmem:[#allocation8 + $0x1c8] sm:$0xff]
        %v3958 = vld [vmem:[#allocation8 + $0x1d0] sm:$0xff]
        %v3959 = vld [vmem:[#allocation8 + $0x1d8] sm:$0xff]
        %v3960 = vld [vmem:[#allocation8 + $0x1e0] sm:$0xff]
        %v3961 = vld [vmem:[#allocation8 + $0x1e8] sm:$0xff]
        %v3962 = vld [vmem:[#allocation8 + $0x1f0] sm:$0xff]
        %v3963 = vld [vmem:[#allocation8 + $0x1f8] sm:$0xff]
        %v3964 = vld [vmem:[#allocation8 + $0x200] sm:$0xff]
        %v3965 = vld [vmem:[#allocation8 + $0x208] sm:$0xff]
        %v3966 = vld [vmem:[#allocation8 + $0x210] sm:$0xff]
        %v3967 = vld [vmem:[#allocation8 + $0x218] sm:$0xff]
        %v3968 = vld [vmem:[#allocation8 + $0x220] sm:$0xff]
        %v3969 = vld [vmem:[#allocation8 + $0x228] sm:$0xff]
        %v3970 = vld [vmem:[#allocation8 + $0x230] sm:$0xff]
        %v3971 = vld [vmem:[#allocation8 + $0x238] sm:$0xff]
        %v3972 = vld [vmem:[#allocation8 + $0x240] sm:$0xff]
        %v3973 = vld [vmem:[#allocation8 + $0x248] sm:$0xff]
        %v3974 = vld [vmem:[#allocation8 + $0x250] sm:$0xff]
        %v3975 = vld [vmem:[#allocation8 + $0x258] sm:$0xff]
        %v3976 = vld [vmem:[#allocation8 + $0x260] sm:$0xff]
        %v3977 = vld [vmem:[#allocation8 + $0x268] sm:$0xff]
        %v3978 = vld [vmem:[#allocation8 + $0x270] sm:$0xff]
        %v3979 = vld [vmem:[#allocation8 + $0x278] sm:$0xff]
        %v3980 = vld [vmem:[#allocation8 + $0x280] sm:$0xff]
        %v3981 = vld [vmem:[#allocation8 + $0x288] sm:$0xff]
        %v3982 = vld [vmem:[#allocation8 + $0x290] sm:$0xff]
        %v3983 = vld [vmem:[#allocation8 + $0x298] sm:$0xff]
        %v3984 = vld [vmem:[#allocation8 + $0x2a0] sm:$0xff]
        %v3985 = vld [vmem:[#allocation8 + $0x2a8] sm:$0xff]
        %v3986 = vld [vmem:[#allocation8 + $0x2b0] sm:$0xff]
        %v3987 = vld [vmem:[#allocation8 + $0x2b8] sm:$0xff]
        %v3988 = vld [vmem:[#allocation8 + $0x2c0] sm:$0xff]
        %v3989 = vld [vmem:[#allocation8 + $0x2c8] sm:$0xff]
        %v3990 = vld [vmem:[#allocation8 + $0x2d0] sm:$0xff]
        %v3991 = vld [vmem:[#allocation8 + $0x2d8] sm:$0xff]
        %v3992 = vld [vmem:[#allocation8 + $0x2e0] sm:$0xff]
        %v3993 = vld [vmem:[#allocation8 + $0x2e8] sm:$0xff]
        %v3994 = vld [vmem:[#allocation8 + $0x2f0] sm:$0xff]
        %v3995 = vld [vmem:[#allocation8 + $0x2f8] sm:$0xff]
        %v3996 = vld [vmem:[#allocation8 + $0x300] sm:$0xff]
        %v3997 = vld [vmem:[#allocation8 + $0x308] sm:$0xff]
        %v3998 = vld [vmem:[#allocation8 + $0x310] sm:$0xff]
        %v3999 = vld [vmem:[#allocation8 + $0x318] sm:$0xff]
        %v4000 = vld [vmem:[#allocation8 + $0x320] sm:$0xff]
        %v4001 = vld [vmem:[#allocation8 + $0x328] sm:$0xff]
        %v4002 = vld [vmem:[#allocation8 + $0x330] sm:$0xff]
        %v4003 = vld [vmem:[#allocation8 + $0x338] sm:$0xff]
        %v4004 = vld [vmem:[#allocation8 + $0x340] sm:$0xff]
        %v4005 = vld [vmem:[#allocation8 + $0x348] sm:$0xff]
        %v4006 = vld [vmem:[#allocation8 + $0x350] sm:$0xff]
        %v4007 = vld [vmem:[#allocation8 + $0x358] sm:$0xff]
        %v4008 = vld [vmem:[#allocation8 + $0x360] sm:$0xff]
        %v4009 = vld [vmem:[#allocation8 + $0x368] sm:$0xff]
        %v4010 = vld [vmem:[#allocation8 + $0x370] sm:$0xff]
        %v4011 = vld [vmem:[#allocation8 + $0x378] sm:$0xff]
        %v4012 = vld [vmem:[#allocation8 + $0x380] sm:$0xff]
        %v4013 = vld [vmem:[#allocation8 + $0x388] sm:$0xff]
        %v4014 = vld [vmem:[#allocation8 + $0x390] sm:$0xff]
        %v4015 = vld [vmem:[#allocation8 + $0x398] sm:$0xff]
        %v4016 = vld [vmem:[#allocation8 + $0x3a0] sm:$0xff]
        %v4017 = vld [vmem:[#allocation8 + $0x3a8] sm:$0xff]
        %v4018 = vld [vmem:[#allocation8 + $0x3b0] sm:$0xff]
        %v4019 = vld [vmem:[#allocation8 + $0x3b8] sm:$0xff]
        %v4020 = vld [vmem:[#allocation8 + $0x3c0] sm:$0xff]
        %v4021 = vld [vmem:[#allocation8 + $0x3c8] sm:$0xff]
        %v4022 = vld [vmem:[#allocation8 + $0x3d0] sm:$0xff]
        %v4023 = vld [vmem:[#allocation8 + $0x3d8] sm:$0xff]
        %v4024 = vld [vmem:[#allocation8 + $0x3e0] sm:$0xff]
        %v4025 = vld [vmem:[#allocation8 + $0x3e8] sm:$0xff]
        %v4026 = vld [vmem:[#allocation8 + $0x3f0] sm:$0xff]
        %v4027 = vld [vmem:[#allocation8 + $0x3f8] sm:$0xff]
        %v4028 = vld [vmem:[#allocation8 + $0x400] sm:$0xff]
        %v4029 = vld [vmem:[#allocation8 + $0x408] sm:$0xff]
        %v4030 = vld [vmem:[#allocation8 + $0x410] sm:$0xff]
        %v4031 = vld [vmem:[#allocation8 + $0x418] sm:$0xff]
        %v4032 = vld [vmem:[#allocation8 + $0x420] sm:$0xff]
        %v4033 = vld [vmem:[#allocation8 + $0x428] sm:$0xff]
        %v4034 = vld [vmem:[#allocation8 + $0x430] sm:$0xff]
        %v4035 = vld [vmem:[#allocation8 + $0x438] sm:$0xff]
        %v4036 = vld [vmem:[#allocation8 + $0x440] sm:$0xff]
        %v4037 = vld [vmem:[#allocation8 + $0x448] sm:$0xff]
        %v4038 = vld [vmem:[#allocation8 + $0x450] sm:$0xff]
        %v4039 = vld [vmem:[#allocation8 + $0x458] sm:$0xff]
        %v4040 = vld [vmem:[#allocation8 + $0x460] sm:$0xff]
        %v4041 = vld [vmem:[#allocation8 + $0x468] sm:$0xff]
        %v4042 = vld [vmem:[#allocation8 + $0x470] sm:$0xff]
        %v4043 = vld [vmem:[#allocation8 + $0x478] sm:$0xff]
        %v4044 = vld [vmem:[#allocation8 + $0x480] sm:$0xff]
        %v4045 = vld [vmem:[#allocation8 + $0x488] sm:$0xff]
        %v4046 = vld [vmem:[#allocation8 + $0x490] sm:$0xff]
        %v4047 = vld [vmem:[#allocation8 + $0x498] sm:$0xff]
        %v4048 = vld [vmem:[#allocation8 + $0x4a0] sm:$0xff]
        %v4049 = vld [vmem:[#allocation8 + $0x4a8] sm:$0xff]
        %v4050 = vld [vmem:[#allocation8 + $0x4b0] sm:$0xff]
        %v4051 = vld [vmem:[#allocation8 + $0x4b8] sm:$0xff]
        %v4052 = vld [vmem:[#allocation8 + $0x4c0] sm:$0xff]
        %v4053 = vld [vmem:[#allocation8 + $0x4c8] sm:$0xff]
        %v4054 = vld [vmem:[#allocation8 + $0x4d0] sm:$0xff]
        %v4055 = vld [vmem:[#allocation8 + $0x4d8] sm:$0xff]
        %v4056 = vld [vmem:[#allocation8 + $0x4e0] sm:$0xff]
        %v4057 = vld [vmem:[#allocation8 + $0x4e8] sm:$0xff]
        %v4058 = vld [vmem:[#allocation8 + $0x4f0] sm:$0xff]
        %v4059 = vld [vmem:[#allocation8 + $0x4f8] sm:$0xff]
        %v4060 = vld [vmem:[#allocation8 + $0x500] sm:$0xff]
        %v4061 = vld [vmem:[#allocation8 + $0x508] sm:$0xff]
        %v4062 = vld [vmem:[#allocation8 + $0x510] sm:$0xff]
        %v4063 = vld [vmem:[#allocation8 + $0x518] sm:$0xff]
        %v4064 = vld [vmem:[#allocation8 + $0x520] sm:$0xff]
        %v4065 = vld [vmem:[#allocation8 + $0x528] sm:$0xff]
        %v4066 = vld [vmem:[#allocation8 + $0x530] sm:$0xff]
        %v4067 = vld [vmem:[#allocation8 + $0x538] sm:$0xff]
        %v4068 = vld [vmem:[#allocation8 + $0x540] sm:$0xff]
        %v4069 = vld [vmem:[#allocation8 + $0x548] sm:$0xff]
        %v4070 = vld [vmem:[#allocation8 + $0x550] sm:$0xff]
        %v4071 = vld [vmem:[#allocation8 + $0x558] sm:$0xff]
        %v4072 = vld [vmem:[#allocation8 + $0x560] sm:$0xff]
        %v4073 = vld [vmem:[#allocation8 + $0x568] sm:$0xff]
        %v4074 = vld [vmem:[#allocation8 + $0x570] sm:$0xff]
        %v4075 = vld [vmem:[#allocation8 + $0x578] sm:$0xff]
        %v4076 = vld [vmem:[#allocation8 + $0x580] sm:$0xff]
        %v4077 = vld [vmem:[#allocation8 + $0x588] sm:$0xff]
        %v4078 = vld [vmem:[#allocation8 + $0x590] sm:$0xff]
        %v4079 = vld [vmem:[#allocation8 + $0x598] sm:$0xff]
        %v4080 = vld [vmem:[#allocation8 + $0x5a0] sm:$0xff]
        %v4081 = vld [vmem:[#allocation8 + $0x5a8] sm:$0xff]
        %v4082 = vld [vmem:[#allocation8 + $0x5b0] sm:$0xff]
        %v4083 = vld [vmem:[#allocation8 + $0x5b8] sm:$0xff]
        %v4084 = vld [vmem:[#allocation8 + $0x5c0] sm:$0xff]
        %v4085 = vld [vmem:[#allocation8 + $0x5c8] sm:$0xff]
        %v4086 = vld [vmem:[#allocation8 + $0x5d0] sm:$0xff]
        %v4087 = vld [vmem:[#allocation8 + $0x5d8] sm:$0xff]
        %v4088 = vld [vmem:[#allocation8 + $0x5e0] sm:$0xff]
        %v4089 = vld [vmem:[#allocation8 + $0x5e8] sm:$0xff]
        %v4090 = vld [vmem:[#allocation8 + $0x5f0] sm:$0xff]
        %v4091 = vld [vmem:[#allocation8 + $0x5f8] sm:$0xff]
        %v4092 = vld [vmem:[#allocation8 + $0x600] sm:$0xff]
        %v4093 = vld [vmem:[#allocation8 + $0x608] sm:$0xff]
        %v4094 = vld [vmem:[#allocation8 + $0x610] sm:$0xff]
        %v4095 = vld [vmem:[#allocation8 + $0x618] sm:$0xff]
        %v4096 = vld [vmem:[#allocation8 + $0x620] sm:$0xff]
        %v4097 = vld [vmem:[#allocation8 + $0x628] sm:$0xff]
        %v4098 = vld [vmem:[#allocation8 + $0x630] sm:$0xff]
        %v4099 = vld [vmem:[#allocation8 + $0x638] sm:$0xff]
        %v4100 = vld [vmem:[#allocation8 + $0x640] sm:$0xff]
        %v4101 = vld [vmem:[#allocation8 + $0x648] sm:$0xff]
        %v4102 = vld [vmem:[#allocation8 + $0x650] sm:$0xff]
        %v4103 = vld [vmem:[#allocation8 + $0x658] sm:$0xff]
        %v4104 = vld [vmem:[#allocation8 + $0x660] sm:$0xff]
        %v4105 = vld [vmem:[#allocation8 + $0x668] sm:$0xff]
        %v4106 = vld [vmem:[#allocation8 + $0x670] sm:$0xff]
        %v4107 = vld [vmem:[#allocation8 + $0x678] sm:$0xff]
        %v4108 = vld [vmem:[#allocation8 + $0x680] sm:$0xff]
        %v4109 = vld [vmem:[#allocation8 + $0x688] sm:$0xff]
        %v4110 = vld [vmem:[#allocation8 + $0x690] sm:$0xff]
        %v4111 = vld [vmem:[#allocation8 + $0x698] sm:$0xff]
        %v4112 = vld [vmem:[#allocation8 + $0x6a0] sm:$0xff]
        %v4113 = vld [vmem:[#allocation8 + $0x6a8] sm:$0xff]
        %v4114 = vld [vmem:[#allocation8 + $0x6b0] sm:$0xff]
        %v4115 = vld [vmem:[#allocation8 + $0x6b8] sm:$0xff]
        %v4116 = vld [vmem:[#allocation8 + $0x6c0] sm:$0xff]
        %v4117 = vld [vmem:[#allocation8 + $0x6c8] sm:$0xff]
        %v4118 = vld [vmem:[#allocation8 + $0x6d0] sm:$0xff]
        %v4119 = vld [vmem:[#allocation8 + $0x6d8] sm:$0xff]
        %v4120 = vld [vmem:[#allocation8 + $0x6e0] sm:$0xff]
        %v4121 = vld [vmem:[#allocation8 + $0x6e8] sm:$0xff]
        %v4122 = vld [vmem:[#allocation8 + $0x6f0] sm:$0xff]
        %v4123 = vld [vmem:[#allocation8 + $0x6f8] sm:$0xff]
        %v4124 = vld [vmem:[#allocation8 + $0x700] sm:$0xff]
        %v4125 = vld [vmem:[#allocation8 + $0x708] sm:$0xff]
        %v4126 = vld [vmem:[#allocation8 + $0x710] sm:$0xff]
        %v4127 = vld [vmem:[#allocation8 + $0x718] sm:$0xff]
        %v4128 = vld [vmem:[#allocation8 + $0x720] sm:$0xff]
        %v4129 = vld [vmem:[#allocation8 + $0x728] sm:$0xff]
        %v4130 = vld [vmem:[#allocation8 + $0x730] sm:$0xff]
        %v4131 = vld [vmem:[#allocation8 + $0x738] sm:$0xff]
        %v4132 = vld [vmem:[#allocation8 + $0x740] sm:$0xff]
        %v4133 = vld [vmem:[#allocation8 + $0x748] sm:$0xff]
        %v4134 = vld [vmem:[#allocation8 + $0x750] sm:$0xff]
        %v4135 = vld [vmem:[#allocation8 + $0x758] sm:$0xff]
        %v4136 = vld [vmem:[#allocation8 + $0x760] sm:$0xff]
        %v4137 = vld [vmem:[#allocation8 + $0x768] sm:$0xff]
        %v4138 = vld [vmem:[#allocation8 + $0x770] sm:$0xff]
        %v4139 = vld [vmem:[#allocation8 + $0x778] sm:$0xff]
        %v4140 = vld [vmem:[#allocation8 + $0x780] sm:$0xff]
        %v4141 = vld [vmem:[#allocation8 + $0x788] sm:$0xff]
        %v4142 = vld [vmem:[#allocation8 + $0x790] sm:$0xff]
        %v4143 = vld [vmem:[#allocation8 + $0x798] sm:$0xff]
        %v4144 = vld [vmem:[#allocation8 + $0x7a0] sm:$0xff]
        %v4145 = vld [vmem:[#allocation8 + $0x7a8] sm:$0xff]
        %v4146 = vld [vmem:[#allocation8 + $0x7b0] sm:$0xff]
        %v4147 = vld [vmem:[#allocation8 + $0x7b8] sm:$0xff]
        %v4148 = vld [vmem:[#allocation8 + $0x7c0] sm:$0xff]
        %v4149 = vld [vmem:[#allocation8 + $0x7c8] sm:$0xff]
        %v4150 = vld [vmem:[#allocation8 + $0x7d0] sm:$0xff]
        %v4151 = vld [vmem:[#allocation8 + $0x7d8] sm:$0xff]
        %v4152 = vld [vmem:[#allocation8 + $0x7e0] sm:$0xff]
        %v4153 = vld [vmem:[#allocation8 + $0x7e8] sm:$0xff]
        %v4154 = vld [vmem:[#allocation8 + $0x7f0] sm:$0xff]
        %v4155 = vld [vmem:[#allocation8 + $0x7f8] sm:$0xff]
        %v4156 = vld [vmem:[#allocation10] sm:$0xf]
        %v4158 = vperm.slane %v4156, 0
        %v4159 = vperm.slane %v4156, 1
        %v4160 = vperm.slane %v4156, 2
        %v4161 = vperm.slane %v4156, 3
        %v4422 = vunpack.c.l.b16 %v3900
        %v4423 = vunpack.c.h.b16 %v3900
        %v4424 = vunpack.c.l.b16 %v3901
        %v4425 = vunpack.c.h.b16 %v3901
        %v4426 = vunpack.c.l.b16 %v3902
        %v4427 = vunpack.c.h.b16 %v3902
        %v4428 = vunpack.c.l.b16 %v3903
        %v4429 = vunpack.c.h.b16 %v3903
        %v4430 = vunpack.c.l.b16 %v3904
        %v4431 = vunpack.c.h.b16 %v3904
        %v4432 = vunpack.c.l.b16 %v3905
        %v4433 = vunpack.c.h.b16 %v3905
        %v4434 = vunpack.c.l.b16 %v3906
        %v4435 = vunpack.c.h.b16 %v3906
        %v4436 = vunpack.c.l.b16 %v3907
        %v4437 = vunpack.c.h.b16 %v3907
        %v4438 = vunpack.c.l.b16 %v3908
        %v4439 = vunpack.c.h.b16 %v3908
        %v4440 = vunpack.c.l.b16 %v3909
        %v4441 = vunpack.c.h.b16 %v3909
        %v4442 = vunpack.c.l.b16 %v3910
        %v4443 = vunpack.c.h.b16 %v3910
        %v4444 = vunpack.c.l.b16 %v3911
        %v4445 = vunpack.c.h.b16 %v3911
        %v4446 = vunpack.c.l.b16 %v3912
        %v4447 = vunpack.c.h.b16 %v3912
        %v4448 = vunpack.c.l.b16 %v3913
        %v4449 = vunpack.c.h.b16 %v3913
        %v4450 = vunpack.c.l.b16 %v3914
        %v4451 = vunpack.c.h.b16 %v3914
        %v4452 = vunpack.c.l.b16 %v3915
        %v4453 = vunpack.c.h.b16 %v3915
        %v4454 = vunpack.c.l.b16 %v3916
        %v4455 = vunpack.c.h.b16 %v3916
        %v4456 = vunpack.c.l.b16 %v3917
        %v4457 = vunpack.c.h.b16 %v3917
        %v4458 = vunpack.c.l.b16 %v3918
        %v4459 = vunpack.c.h.b16 %v3918
        %v4460 = vunpack.c.l.b16 %v3919
        %v4461 = vunpack.c.h.b16 %v3919
        %v4462 = vunpack.c.l.b16 %v3920
        %v4463 = vunpack.c.h.b16 %v3920
        %v4464 = vunpack.c.l.b16 %v3921
        %v4465 = vunpack.c.h.b16 %v3921
        %v4466 = vunpack.c.l.b16 %v3922
        %v4467 = vunpack.c.h.b16 %v3922
        %v4468 = vunpack.c.l.b16 %v3923
        %v4469 = vunpack.c.h.b16 %v3923
        %v4470 = vunpack.c.l.b16 %v3924
        %v4471 = vunpack.c.h.b16 %v3924
        %v4472 = vunpack.c.l.b16 %v3925
        %v4473 = vunpack.c.h.b16 %v3925
        %v4474 = vunpack.c.l.b16 %v3926
        %v4475 = vunpack.c.h.b16 %v3926
        %v4476 = vunpack.c.l.b16 %v3927
        %v4477 = vunpack.c.h.b16 %v3927
        %v4478 = vunpack.c.l.b16 %v3928
        %v4479 = vunpack.c.h.b16 %v3928
        %v4480 = vunpack.c.l.b16 %v3929
        %v4481 = vunpack.c.h.b16 %v3929
        %v4482 = vunpack.c.l.b16 %v3930
        %v4483 = vunpack.c.h.b16 %v3930
        %v4484 = vunpack.c.l.b16 %v3931
        %v4485 = vunpack.c.h.b16 %v3931
        %v4486 = vunpack.c.l.b16 %v3932
        %v4487 = vunpack.c.h.b16 %v3932
        %v4488 = vunpack.c.l.b16 %v3933
        %v4489 = vunpack.c.h.b16 %v3933
        %v4490 = vunpack.c.l.b16 %v3934
        %v4491 = vunpack.c.h.b16 %v3934
        %v4492 = vunpack.c.l.b16 %v3935
        %v4493 = vunpack.c.h.b16 %v3935
        %v4494 = vunpack.c.l.b16 %v3936
        %v4495 = vunpack.c.h.b16 %v3936
        %v4496 = vunpack.c.l.b16 %v3937
        %v4497 = vunpack.c.h.b16 %v3937
        %v4498 = vunpack.c.l.b16 %v3938
        %v4499 = vunpack.c.h.b16 %v3938
        %v4500 = vunpack.c.l.b16 %v3939
        %v4501 = vunpack.c.h.b16 %v3939
        %v4502 = vunpack.c.l.b16 %v3940
        %v4503 = vunpack.c.h.b16 %v3940
        %v4504 = vunpack.c.l.b16 %v3941
        %v4505 = vunpack.c.h.b16 %v3941
        %v4506 = vunpack.c.l.b16 %v3942
        %v4507 = vunpack.c.h.b16 %v3942
        %v4508 = vunpack.c.l.b16 %v3943
        %v4509 = vunpack.c.h.b16 %v3943
        %v4510 = vunpack.c.l.b16 %v3944
        %v4511 = vunpack.c.h.b16 %v3944
        %v4512 = vunpack.c.l.b16 %v3945
        %v4513 = vunpack.c.h.b16 %v3945
        %v4514 = vunpack.c.l.b16 %v3946
        %v4515 = vunpack.c.h.b16 %v3946
        %v4516 = vunpack.c.l.b16 %v3947
        %v4517 = vunpack.c.h.b16 %v3947
        %v4518 = vunpack.c.l.b16 %v3948
        %v4519 = vunpack.c.h.b16 %v3948
        %v4520 = vunpack.c.l.b16 %v3949
        %v4521 = vunpack.c.h.b16 %v3949
        %v4522 = vunpack.c.l.b16 %v3950
        %v4523 = vunpack.c.h.b16 %v3950
        %v4524 = vunpack.c.l.b16 %v3951
        %v4525 = vunpack.c.h.b16 %v3951
        %v4526 = vunpack.c.l.b16 %v3952
        %v4527 = vunpack.c.h.b16 %v3952
        %v4528 = vunpack.c.l.b16 %v3953
        %v4529 = vunpack.c.h.b16 %v3953
        %v4530 = vunpack.c.l.b16 %v3954
        %v4531 = vunpack.c.h.b16 %v3954
        %v4532 = vunpack.c.l.b16 %v3955
        %v4533 = vunpack.c.h.b16 %v3955
        %v4534 = vunpack.c.l.b16 %v3956
        %v4535 = vunpack.c.h.b16 %v3956
        %v4536 = vunpack.c.l.b16 %v3957
        %v4537 = vunpack.c.h.b16 %v3957
        %v4538 = vunpack.c.l.b16 %v3958
        %v4539 = vunpack.c.h.b16 %v3958
        %v4540 = vunpack.c.l.b16 %v3959
        %v4541 = vunpack.c.h.b16 %v3959
        %v4542 = vunpack.c.l.b16 %v3960
        %v4543 = vunpack.c.h.b16 %v3960
        %v4544 = vunpack.c.l.b16 %v3961
        %v4545 = vunpack.c.h.b16 %v3961
        %v4546 = vunpack.c.l.b16 %v3962
        %v4547 = vunpack.c.h.b16 %v3962
        %v4548 = vunpack.c.l.b16 %v3963
        %v4549 = vunpack.c.h.b16 %v3963
        %v4550 = vunpack.c.l.b16 %v3964
        %v4551 = vunpack.c.h.b16 %v3964
        %v4552 = vunpack.c.l.b16 %v3965
        %v4553 = vunpack.c.h.b16 %v3965
        %v4554 = vunpack.c.l.b16 %v3966
        %v4555 = vunpack.c.h.b16 %v3966
        %v4556 = vunpack.c.l.b16 %v3967
        %v4557 = vunpack.c.h.b16 %v3967
        %v4558 = vunpack.c.l.b16 %v3968
        %v4559 = vunpack.c.h.b16 %v3968
        %v4560 = vunpack.c.l.b16 %v3969
        %v4561 = vunpack.c.h.b16 %v3969
        %v4562 = vunpack.c.l.b16 %v3970
        %v4563 = vunpack.c.h.b16 %v3970
        %v4564 = vunpack.c.l.b16 %v3971
        %v4565 = vunpack.c.h.b16 %v3971
        %v4566 = vunpack.c.l.b16 %v3972
        %v4567 = vunpack.c.h.b16 %v3972
        %v4568 = vunpack.c.l.b16 %v3973
        %v4569 = vunpack.c.h.b16 %v3973
        %v4570 = vunpack.c.l.b16 %v3974
        %v4571 = vunpack.c.h.b16 %v3974
        %v4572 = vunpack.c.l.b16 %v3975
        %v4573 = vunpack.c.h.b16 %v3975
        %v4574 = vunpack.c.l.b16 %v3976
        %v4575 = vunpack.c.h.b16 %v3976
        %v4576 = vunpack.c.l.b16 %v3977
        %v4577 = vunpack.c.h.b16 %v3977
        %v4578 = vunpack.c.l.b16 %v3978
        %v4579 = vunpack.c.h.b16 %v3978
        %v4580 = vunpack.c.l.b16 %v3979
        %v4581 = vunpack.c.h.b16 %v3979
        %v4582 = vunpack.c.l.b16 %v3980
        %v4583 = vunpack.c.h.b16 %v3980
        %v4584 = vunpack.c.l.b16 %v3981
        %v4585 = vunpack.c.h.b16 %v3981
        %v4586 = vunpack.c.l.b16 %v3982
        %v4587 = vunpack.c.h.b16 %v3982
        %v4588 = vunpack.c.l.b16 %v3983
        %v4589 = vunpack.c.h.b16 %v3983
        %v4590 = vunpack.c.l.b16 %v3984
        %v4591 = vunpack.c.h.b16 %v3984
        %v4592 = vunpack.c.l.b16 %v3985
        %v4593 = vunpack.c.h.b16 %v3985
        %v4594 = vunpack.c.l.b16 %v3986
        %v4595 = vunpack.c.h.b16 %v3986
        %v4596 = vunpack.c.l.b16 %v3987
        %v4597 = vunpack.c.h.b16 %v3987
        %v4598 = vunpack.c.l.b16 %v3988
        %v4599 = vunpack.c.h.b16 %v3988
        %v4600 = vunpack.c.l.b16 %v3989
        %v4601 = vunpack.c.h.b16 %v3989
        %v4602 = vunpack.c.l.b16 %v3990
        %v4603 = vunpack.c.h.b16 %v3990
        %v4604 = vunpack.c.l.b16 %v3991
        %v4605 = vunpack.c.h.b16 %v3991
        %v4606 = vunpack.c.l.b16 %v3992
        %v4607 = vunpack.c.h.b16 %v3992
        %v4608 = vunpack.c.l.b16 %v3993
        %v4609 = vunpack.c.h.b16 %v3993
        %v4610 = vunpack.c.l.b16 %v3994
        %v4611 = vunpack.c.h.b16 %v3994
        %v4612 = vunpack.c.l.b16 %v3995
        %v4613 = vunpack.c.h.b16 %v3995
        %v4614 = vunpack.c.l.b16 %v3996
        %v4615 = vunpack.c.h.b16 %v3996
        %v4616 = vunpack.c.l.b16 %v3997
        %v4617 = vunpack.c.h.b16 %v3997
        %v4618 = vunpack.c.l.b16 %v3998
        %v4619 = vunpack.c.h.b16 %v3998
        %v4620 = vunpack.c.l.b16 %v3999
        %v4621 = vunpack.c.h.b16 %v3999
        %v4622 = vunpack.c.l.b16 %v4000
        %v4623 = vunpack.c.h.b16 %v4000
        %v4624 = vunpack.c.l.b16 %v4001
        %v4625 = vunpack.c.h.b16 %v4001
        %v4626 = vunpack.c.l.b16 %v4002
        %v4627 = vunpack.c.h.b16 %v4002
        %v4628 = vunpack.c.l.b16 %v4003
        %v4629 = vunpack.c.h.b16 %v4003
        %v4630 = vunpack.c.l.b16 %v4004
        %v4631 = vunpack.c.h.b16 %v4004
        %v4632 = vunpack.c.l.b16 %v4005
        %v4633 = vunpack.c.h.b16 %v4005
        %v4634 = vunpack.c.l.b16 %v4006
        %v4635 = vunpack.c.h.b16 %v4006
        %v4636 = vunpack.c.l.b16 %v4007
        %v4637 = vunpack.c.h.b16 %v4007
        %v4638 = vunpack.c.l.b16 %v4008
        %v4639 = vunpack.c.h.b16 %v4008
        %v4640 = vunpack.c.l.b16 %v4009
        %v4641 = vunpack.c.h.b16 %v4009
        %v4642 = vunpack.c.l.b16 %v4010
        %v4643 = vunpack.c.h.b16 %v4010
        %v4644 = vunpack.c.l.b16 %v4011
        %v4645 = vunpack.c.h.b16 %v4011
        %v4646 = vunpack.c.l.b16 %v4012
        %v4647 = vunpack.c.h.b16 %v4012
        %v4648 = vunpack.c.l.b16 %v4013
        %v4649 = vunpack.c.h.b16 %v4013
        %v4650 = vunpack.c.l.b16 %v4014
        %v4651 = vunpack.c.h.b16 %v4014
        %v4652 = vunpack.c.l.b16 %v4015
        %v4653 = vunpack.c.h.b16 %v4015
        %v4654 = vunpack.c.l.b16 %v4016
        %v4655 = vunpack.c.h.b16 %v4016
        %v4656 = vunpack.c.l.b16 %v4017
        %v4657 = vunpack.c.h.b16 %v4017
        %v4658 = vunpack.c.l.b16 %v4018
        %v4659 = vunpack.c.h.b16 %v4018
        %v4660 = vunpack.c.l.b16 %v4019
        %v4661 = vunpack.c.h.b16 %v4019
        %v4662 = vunpack.c.l.b16 %v4020
        %v4663 = vunpack.c.h.b16 %v4020
        %v4664 = vunpack.c.l.b16 %v4021
        %v4665 = vunpack.c.h.b16 %v4021
        %v4666 = vunpack.c.l.b16 %v4022
        %v4667 = vunpack.c.h.b16 %v4022
        %v4668 = vunpack.c.l.b16 %v4023
        %v4669 = vunpack.c.h.b16 %v4023
        %v4670 = vunpack.c.l.b16 %v4024
        %v4671 = vunpack.c.h.b16 %v4024
        %v4672 = vunpack.c.l.b16 %v4025
        %v4673 = vunpack.c.h.b16 %v4025
        %v4674 = vunpack.c.l.b16 %v4026
        %v4675 = vunpack.c.h.b16 %v4026
        %v4676 = vunpack.c.l.b16 %v4027
        %v4677 = vunpack.c.h.b16 %v4027
        %v4678 = vunpack.c.l.b16 %v4028
        %v4679 = vunpack.c.h.b16 %v4028
        %v4680 = vunpack.c.l.b16 %v4029
        %v4681 = vunpack.c.h.b16 %v4029
        %v4682 = vunpack.c.l.b16 %v4030
        %v4683 = vunpack.c.h.b16 %v4030
        %v4684 = vunpack.c.l.b16 %v4031
        %v4685 = vunpack.c.h.b16 %v4031
        %v4686 = vunpack.c.l.b16 %v4032
        %v4687 = vunpack.c.h.b16 %v4032
        %v4688 = vunpack.c.l.b16 %v4033
        %v4689 = vunpack.c.h.b16 %v4033
        %v4690 = vunpack.c.l.b16 %v4034
        %v4691 = vunpack.c.h.b16 %v4034
        %v4692 = vunpack.c.l.b16 %v4035
        %v4693 = vunpack.c.h.b16 %v4035
        %v4694 = vunpack.c.l.b16 %v4036
        %v4695 = vunpack.c.h.b16 %v4036
        %v4696 = vunpack.c.l.b16 %v4037
        %v4697 = vunpack.c.h.b16 %v4037
        %v4698 = vunpack.c.l.b16 %v4038
        %v4699 = vunpack.c.h.b16 %v4038
        %v4700 = vunpack.c.l.b16 %v4039
        %v4701 = vunpack.c.h.b16 %v4039
        %v4702 = vunpack.c.l.b16 %v4040
        %v4703 = vunpack.c.h.b16 %v4040
        %v4704 = vunpack.c.l.b16 %v4041
        %v4705 = vunpack.c.h.b16 %v4041
        %v4706 = vunpack.c.l.b16 %v4042
        %v4707 = vunpack.c.h.b16 %v4042
        %v4708 = vunpack.c.l.b16 %v4043
        %v4709 = vunpack.c.h.b16 %v4043
        %v4710 = vunpack.c.l.b16 %v4044
        %v4711 = vunpack.c.h.b16 %v4044
        %v4712 = vunpack.c.l.b16 %v4045
        %v4713 = vunpack.c.h.b16 %v4045
        %v4714 = vunpack.c.l.b16 %v4046
        %v4715 = vunpack.c.h.b16 %v4046
        %v4716 = vunpack.c.l.b16 %v4047
        %v4717 = vunpack.c.h.b16 %v4047
        %v4718 = vunpack.c.l.b16 %v4048
        %v4719 = vunpack.c.h.b16 %v4048
        %v4720 = vunpack.c.l.b16 %v4049
        %v4721 = vunpack.c.h.b16 %v4049
        %v4722 = vunpack.c.l.b16 %v4050
        %v4723 = vunpack.c.h.b16 %v4050
        %v4724 = vunpack.c.l.b16 %v4051
        %v4725 = vunpack.c.h.b16 %v4051
        %v4726 = vunpack.c.l.b16 %v4052
        %v4727 = vunpack.c.h.b16 %v4052
        %v4728 = vunpack.c.l.b16 %v4053
        %v4729 = vunpack.c.h.b16 %v4053
        %v4730 = vunpack.c.l.b16 %v4054
        %v4731 = vunpack.c.h.b16 %v4054
        %v4732 = vunpack.c.l.b16 %v4055
        %v4733 = vunpack.c.h.b16 %v4055
        %v4734 = vunpack.c.l.b16 %v4056
        %v4735 = vunpack.c.h.b16 %v4056
        %v4736 = vunpack.c.l.b16 %v4057
        %v4737 = vunpack.c.h.b16 %v4057
        %v4738 = vunpack.c.l.b16 %v4058
        %v4739 = vunpack.c.h.b16 %v4058
        %v4740 = vunpack.c.l.b16 %v4059
        %v4741 = vunpack.c.h.b16 %v4059
        %v4742 = vunpack.c.l.b16 %v4060
        %v4743 = vunpack.c.h.b16 %v4060
        %v4744 = vunpack.c.l.b16 %v4061
        %v4745 = vunpack.c.h.b16 %v4061
        %v4746 = vunpack.c.l.b16 %v4062
        %v4747 = vunpack.c.h.b16 %v4062
        %v4748 = vunpack.c.l.b16 %v4063
        %v4749 = vunpack.c.h.b16 %v4063
        %v4750 = vunpack.c.l.b16 %v4064
        %v4751 = vunpack.c.h.b16 %v4064
        %v4752 = vunpack.c.l.b16 %v4065
        %v4753 = vunpack.c.h.b16 %v4065
        %v4754 = vunpack.c.l.b16 %v4066
        %v4755 = vunpack.c.h.b16 %v4066
        %v4756 = vunpack.c.l.b16 %v4067
        %v4757 = vunpack.c.h.b16 %v4067
        %v4758 = vunpack.c.l.b16 %v4068
        %v4759 = vunpack.c.h.b16 %v4068
        %v4760 = vunpack.c.l.b16 %v4069
        %v4761 = vunpack.c.h.b16 %v4069
        %v4762 = vunpack.c.l.b16 %v4070
        %v4763 = vunpack.c.h.b16 %v4070
        %v4764 = vunpack.c.l.b16 %v4071
        %v4765 = vunpack.c.h.b16 %v4071
        %v4766 = vunpack.c.l.b16 %v4072
        %v4767 = vunpack.c.h.b16 %v4072
        %v4768 = vunpack.c.l.b16 %v4073
        %v4769 = vunpack.c.h.b16 %v4073
        %v4770 = vunpack.c.l.b16 %v4074
        %v4771 = vunpack.c.h.b16 %v4074
        %v4772 = vunpack.c.l.b16 %v4075
        %v4773 = vunpack.c.h.b16 %v4075
        %v4774 = vunpack.c.l.b16 %v4076
        %v4775 = vunpack.c.h.b16 %v4076
        %v4776 = vunpack.c.l.b16 %v4077
        %v4777 = vunpack.c.h.b16 %v4077
        %v4778 = vunpack.c.l.b16 %v4078
        %v4779 = vunpack.c.h.b16 %v4078
        %v4780 = vunpack.c.l.b16 %v4079
        %v4781 = vunpack.c.h.b16 %v4079
        %v4782 = vunpack.c.l.b16 %v4080
        %v4783 = vunpack.c.h.b16 %v4080
        %v4784 = vunpack.c.l.b16 %v4081
        %v4785 = vunpack.c.h.b16 %v4081
        %v4786 = vunpack.c.l.b16 %v4082
        %v4787 = vunpack.c.h.b16 %v4082
        %v4788 = vunpack.c.l.b16 %v4083
        %v4789 = vunpack.c.h.b16 %v4083
        %v4790 = vunpack.c.l.b16 %v4084
        %v4791 = vunpack.c.h.b16 %v4084
        %v4792 = vunpack.c.l.b16 %v4085
        %v4793 = vunpack.c.h.b16 %v4085
        %v4794 = vunpack.c.l.b16 %v4086
        %v4795 = vunpack.c.h.b16 %v4086
        %v4796 = vunpack.c.l.b16 %v4087
        %v4797 = vunpack.c.h.b16 %v4087
        %v4798 = vunpack.c.l.b16 %v4088
        %v4799 = vunpack.c.h.b16 %v4088
        %v4800 = vunpack.c.l.b16 %v4089
        %v4801 = vunpack.c.h.b16 %v4089
        %v4802 = vunpack.c.l.b16 %v4090
        %v4803 = vunpack.c.h.b16 %v4090
        %v4804 = vunpack.c.l.b16 %v4091
        %v4805 = vunpack.c.h.b16 %v4091
        %v4806 = vunpack.c.l.b16 %v4092
        %v4807 = vunpack.c.h.b16 %v4092
        %v4808 = vunpack.c.l.b16 %v4093
        %v4809 = vunpack.c.h.b16 %v4093
        %v4810 = vunpack.c.l.b16 %v4094
        %v4811 = vunpack.c.h.b16 %v4094
        %v4812 = vunpack.c.l.b16 %v4095
        %v4813 = vunpack.c.h.b16 %v4095
        %v4814 = vunpack.c.l.b16 %v4096
        %v4815 = vunpack.c.h.b16 %v4096
        %v4816 = vunpack.c.l.b16 %v4097
        %v4817 = vunpack.c.h.b16 %v4097
        %v4818 = vunpack.c.l.b16 %v4098
        %v4819 = vunpack.c.h.b16 %v4098
        %v4820 = vunpack.c.l.b16 %v4099
        %v4821 = vunpack.c.h.b16 %v4099
        %v4822 = vunpack.c.l.b16 %v4100
        %v4823 = vunpack.c.h.b16 %v4100
        %v4824 = vunpack.c.l.b16 %v4101
        %v4825 = vunpack.c.h.b16 %v4101
        %v4826 = vunpack.c.l.b16 %v4102
        %v4827 = vunpack.c.h.b16 %v4102
        %v4828 = vunpack.c.l.b16 %v4103
        %v4829 = vunpack.c.h.b16 %v4103
        %v4830 = vunpack.c.l.b16 %v4104
        %v4831 = vunpack.c.h.b16 %v4104
        %v4832 = vunpack.c.l.b16 %v4105
        %v4833 = vunpack.c.h.b16 %v4105
        %v4834 = vunpack.c.l.b16 %v4106
        %v4835 = vunpack.c.h.b16 %v4106
        %v4836 = vunpack.c.l.b16 %v4107
        %v4837 = vunpack.c.h.b16 %v4107
        %v4838 = vunpack.c.l.b16 %v4108
        %v4839 = vunpack.c.h.b16 %v4108
        %v4840 = vunpack.c.l.b16 %v4109
        %v4841 = vunpack.c.h.b16 %v4109
        %v4842 = vunpack.c.l.b16 %v4110
        %v4843 = vunpack.c.h.b16 %v4110
        %v4844 = vunpack.c.l.b16 %v4111
        %v4845 = vunpack.c.h.b16 %v4111
        %v4846 = vunpack.c.l.b16 %v4112
        %v4847 = vunpack.c.h.b16 %v4112
        %v4848 = vunpack.c.l.b16 %v4113
        %v4849 = vunpack.c.h.b16 %v4113
        %v4850 = vunpack.c.l.b16 %v4114
        %v4851 = vunpack.c.h.b16 %v4114
        %v4852 = vunpack.c.l.b16 %v4115
        %v4853 = vunpack.c.h.b16 %v4115
        %v4854 = vunpack.c.l.b16 %v4116
        %v4855 = vunpack.c.h.b16 %v4116
        %v4856 = vunpack.c.l.b16 %v4117
        %v4857 = vunpack.c.h.b16 %v4117
        %v4858 = vunpack.c.l.b16 %v4118
        %v4859 = vunpack.c.h.b16 %v4118
        %v4860 = vunpack.c.l.b16 %v4119
        %v4861 = vunpack.c.h.b16 %v4119
        %v4862 = vunpack.c.l.b16 %v4120
        %v4863 = vunpack.c.h.b16 %v4120
        %v4864 = vunpack.c.l.b16 %v4121
        %v4865 = vunpack.c.h.b16 %v4121
        %v4866 = vunpack.c.l.b16 %v4122
        %v4867 = vunpack.c.h.b16 %v4122
        %v4868 = vunpack.c.l.b16 %v4123
        %v4869 = vunpack.c.h.b16 %v4123
        %v4870 = vunpack.c.l.b16 %v4124
        %v4871 = vunpack.c.h.b16 %v4124
        %v4872 = vunpack.c.l.b16 %v4125
        %v4873 = vunpack.c.h.b16 %v4125
        %v4874 = vunpack.c.l.b16 %v4126
        %v4875 = vunpack.c.h.b16 %v4126
        %v4876 = vunpack.c.l.b16 %v4127
        %v4877 = vunpack.c.h.b16 %v4127
        %v4878 = vunpack.c.l.b16 %v4128
        %v4879 = vunpack.c.h.b16 %v4128
        %v4880 = vunpack.c.l.b16 %v4129
        %v4881 = vunpack.c.h.b16 %v4129
        %v4882 = vunpack.c.l.b16 %v4130
        %v4883 = vunpack.c.h.b16 %v4130
        %v4884 = vunpack.c.l.b16 %v4131
        %v4885 = vunpack.c.h.b16 %v4131
        %v4886 = vunpack.c.l.b16 %v4132
        %v4887 = vunpack.c.h.b16 %v4132
        %v4888 = vunpack.c.l.b16 %v4133
        %v4889 = vunpack.c.h.b16 %v4133
        %v4890 = vunpack.c.l.b16 %v4134
        %v4891 = vunpack.c.h.b16 %v4134
        %v4892 = vunpack.c.l.b16 %v4135
        %v4893 = vunpack.c.h.b16 %v4135
        %v4894 = vunpack.c.l.b16 %v4136
        %v4895 = vunpack.c.h.b16 %v4136
        %v4896 = vunpack.c.l.b16 %v4137
        %v4897 = vunpack.c.h.b16 %v4137
        %v4898 = vunpack.c.l.b16 %v4138
        %v4899 = vunpack.c.h.b16 %v4138
        %v4900 = vunpack.c.l.b16 %v4139
        %v4901 = vunpack.c.h.b16 %v4139
        %v4902 = vunpack.c.l.b16 %v4140
        %v4903 = vunpack.c.h.b16 %v4140
        %v4904 = vunpack.c.l.b16 %v4141
        %v4905 = vunpack.c.h.b16 %v4141
        %v4906 = vunpack.c.l.b16 %v4142
        %v4907 = vunpack.c.h.b16 %v4142
        %v4908 = vunpack.c.l.b16 %v4143
        %v4909 = vunpack.c.h.b16 %v4143
        %v4910 = vunpack.c.l.b16 %v4144
        %v4911 = vunpack.c.h.b16 %v4144
        %v4912 = vunpack.c.l.b16 %v4145
        %v4913 = vunpack.c.h.b16 %v4145
        %v4914 = vunpack.c.l.b16 %v4146
        %v4915 = vunpack.c.h.b16 %v4146
        %v4916 = vunpack.c.l.b16 %v4147
        %v4917 = vunpack.c.h.b16 %v4147
        %v4918 = vunpack.c.l.b16 %v4148
        %v4919 = vunpack.c.h.b16 %v4148
        %v4920 = vunpack.c.l.b16 %v4149
        %v4921 = vunpack.c.h.b16 %v4149
        %v4922 = vunpack.c.l.b16 %v4150
        %v4923 = vunpack.c.h.b16 %v4150
        %v4924 = vunpack.c.l.b16 %v4151
        %v4925 = vunpack.c.h.b16 %v4151
        %v4926 = vunpack.c.l.b16 %v4152
        %v4927 = vunpack.c.h.b16 %v4152
        %v4928 = vunpack.c.l.b16 %v4153
        %v4929 = vunpack.c.h.b16 %v4153
        %v4930 = vunpack.c.l.b16 %v4154
        %v4931 = vunpack.c.h.b16 %v4154
        %v4932 = vunpack.c.l.b16 %v4155
        %v4933 = vunpack.c.h.b16 %v4155
        %v4934 = vpack.c.b16 %v4426, %v4422
        %v4935 = vpack.c.b16 %v4427, %v4423
        %v4936 = vpack.c.b16 %v4428, %v4424
        %v4937 = vpack.c.b16 %v4429, %v4425
        %v4938 = vpack.c.b16 %v4434, %v4430
        %v4939 = vpack.c.b16 %v4435, %v4431
        %v4940 = vpack.c.b16 %v4436, %v4432
        %v4941 = vpack.c.b16 %v4437, %v4433
        %v4942 = vpack.c.b16 %v4442, %v4438
        %v4943 = vpack.c.b16 %v4443, %v4439
        %v4944 = vpack.c.b16 %v4444, %v4440
        %v4945 = vpack.c.b16 %v4445, %v4441
        %v4946 = vpack.c.b16 %v4450, %v4446
        %v4947 = vpack.c.b16 %v4451, %v4447
        %v4948 = vpack.c.b16 %v4452, %v4448
        %v4949 = vpack.c.b16 %v4453, %v4449
        %v4950 = vpack.c.b16 %v4458, %v4454
        %v4951 = vpack.c.b16 %v4459, %v4455
        %v4952 = vpack.c.b16 %v4460, %v4456
        %v4953 = vpack.c.b16 %v4461, %v4457
        %v4954 = vpack.c.b16 %v4466, %v4462
        %v4955 = vpack.c.b16 %v4467, %v4463
        %v4956 = vpack.c.b16 %v4468, %v4464
        %v4957 = vpack.c.b16 %v4469, %v4465
        %v4958 = vpack.c.b16 %v4474, %v4470
        %v4959 = vpack.c.b16 %v4475, %v4471
        %v4960 = vpack.c.b16 %v4476, %v4472
        %v4961 = vpack.c.b16 %v4477, %v4473
        %v4962 = vpack.c.b16 %v4482, %v4478
        %v4963 = vpack.c.b16 %v4483, %v4479
        %v4964 = vpack.c.b16 %v4484, %v4480
        %v4965 = vpack.c.b16 %v4485, %v4481
        %v4966 = vpack.c.b16 %v4490, %v4486
        %v4967 = vpack.c.b16 %v4491, %v4487
        %v4968 = vpack.c.b16 %v4492, %v4488
        %v4969 = vpack.c.b16 %v4493, %v4489
        %v4970 = vpack.c.b16 %v4498, %v4494
        %v4971 = vpack.c.b16 %v4499, %v4495
        %v4972 = vpack.c.b16 %v4500, %v4496
        %v4973 = vpack.c.b16 %v4501, %v4497
        %v4974 = vpack.c.b16 %v4506, %v4502
        %v4975 = vpack.c.b16 %v4507, %v4503
        %v4976 = vpack.c.b16 %v4508, %v4504
        %v4977 = vpack.c.b16 %v4509, %v4505
        %v4978 = vpack.c.b16 %v4514, %v4510
        %v4979 = vpack.c.b16 %v4515, %v4511
        %v4980 = vpack.c.b16 %v4516, %v4512
        %v4981 = vpack.c.b16 %v4517, %v4513
        %v4982 = vpack.c.b16 %v4522, %v4518
        %v4983 = vpack.c.b16 %v4523, %v4519
        %v4984 = vpack.c.b16 %v4524, %v4520
        %v4985 = vpack.c.b16 %v4525, %v4521
        %v4986 = vpack.c.b16 %v4530, %v4526
        %v4987 = vpack.c.b16 %v4531, %v4527
        %v4988 = vpack.c.b16 %v4532, %v4528
        %v4989 = vpack.c.b16 %v4533, %v4529
        %v4990 = vpack.c.b16 %v4538, %v4534
        %v4991 = vpack.c.b16 %v4539, %v4535
        %v4992 = vpack.c.b16 %v4540, %v4536
        %v4993 = vpack.c.b16 %v4541, %v4537
        %v4994 = vpack.c.b16 %v4546, %v4542
        %v4995 = vpack.c.b16 %v4547, %v4543
        %v4996 = vpack.c.b16 %v4548, %v4544
        %v4997 = vpack.c.b16 %v4549, %v4545
        %v4998 = vpack.c.b16 %v4554, %v4550
        %v4999 = vpack.c.b16 %v4555, %v4551
        %v5000 = vpack.c.b16 %v4556, %v4552
        %v5001 = vpack.c.b16 %v4557, %v4553
        %v5002 = vpack.c.b16 %v4562, %v4558
        %v5003 = vpack.c.b16 %v4563, %v4559
        %v5004 = vpack.c.b16 %v4564, %v4560
        %v5005 = vpack.c.b16 %v4565, %v4561
        %v5006 = vpack.c.b16 %v4570, %v4566
        %v5007 = vpack.c.b16 %v4571, %v4567
        %v5008 = vpack.c.b16 %v4572, %v4568
        %v5009 = vpack.c.b16 %v4573, %v4569
        %v5010 = vpack.c.b16 %v4578, %v4574
        %v5011 = vpack.c.b16 %v4579, %v4575
        %v5012 = vpack.c.b16 %v4580, %v4576
        %v5013 = vpack.c.b16 %v4581, %v4577
        %v5014 = vpack.c.b16 %v4586, %v4582
        %v5015 = vpack.c.b16 %v4587, %v4583
        %v5016 = vpack.c.b16 %v4588, %v4584
        %v5017 = vpack.c.b16 %v4589, %v4585
        %v5018 = vpack.c.b16 %v4594, %v4590
        %v5019 = vpack.c.b16 %v4595, %v4591
        %v5020 = vpack.c.b16 %v4596, %v4592
        %v5021 = vpack.c.b16 %v4597, %v4593
        %v5022 = vpack.c.b16 %v4602, %v4598
        %v5023 = vpack.c.b16 %v4603, %v4599
        %v5024 = vpack.c.b16 %v4604, %v4600
        %v5025 = vpack.c.b16 %v4605, %v4601
        %v5026 = vpack.c.b16 %v4610, %v4606
        %v5027 = vpack.c.b16 %v4611, %v4607
        %v5028 = vpack.c.b16 %v4612, %v4608
        %v5029 = vpack.c.b16 %v4613, %v4609
        %v5030 = vpack.c.b16 %v4618, %v4614
        %v5031 = vpack.c.b16 %v4619, %v4615
        %v5032 = vpack.c.b16 %v4620, %v4616
        %v5033 = vpack.c.b16 %v4621, %v4617
        %v5034 = vpack.c.b16 %v4626, %v4622
        %v5035 = vpack.c.b16 %v4627, %v4623
        %v5036 = vpack.c.b16 %v4628, %v4624
        %v5037 = vpack.c.b16 %v4629, %v4625
        %v5038 = vpack.c.b16 %v4634, %v4630
        %v5039 = vpack.c.b16 %v4635, %v4631
        %v5040 = vpack.c.b16 %v4636, %v4632
        %v5041 = vpack.c.b16 %v4637, %v4633
        %v5042 = vpack.c.b16 %v4642, %v4638
        %v5043 = vpack.c.b16 %v4643, %v4639
        %v5044 = vpack.c.b16 %v4644, %v4640
        %v5045 = vpack.c.b16 %v4645, %v4641
        %v5046 = vpack.c.b16 %v4650, %v4646
        %v5047 = vpack.c.b16 %v4651, %v4647
        %v5048 = vpack.c.b16 %v4652, %v4648
        %v5049 = vpack.c.b16 %v4653, %v4649
        %v5050 = vpack.c.b16 %v4658, %v4654
        %v5051 = vpack.c.b16 %v4659, %v4655
        %v5052 = vpack.c.b16 %v4660, %v4656
        %v5053 = vpack.c.b16 %v4661, %v4657
        %v5054 = vpack.c.b16 %v4666, %v4662
        %v5055 = vpack.c.b16 %v4667, %v4663
        %v5056 = vpack.c.b16 %v4668, %v4664
        %v5057 = vpack.c.b16 %v4669, %v4665
        %v5058 = vpack.c.b16 %v4674, %v4670
        %v5059 = vpack.c.b16 %v4675, %v4671
        %v5060 = vpack.c.b16 %v4676, %v4672
        %v5061 = vpack.c.b16 %v4677, %v4673
        %v5062 = vpack.c.b16 %v4682, %v4678
        %v5063 = vpack.c.b16 %v4683, %v4679
        %v5064 = vpack.c.b16 %v4684, %v4680
        %v5065 = vpack.c.b16 %v4685, %v4681
        %v5066 = vpack.c.b16 %v4690, %v4686
        %v5067 = vpack.c.b16 %v4691, %v4687
        %v5068 = vpack.c.b16 %v4692, %v4688
        %v5069 = vpack.c.b16 %v4693, %v4689
        %v5070 = vpack.c.b16 %v4698, %v4694
        %v5071 = vpack.c.b16 %v4699, %v4695
        %v5072 = vpack.c.b16 %v4700, %v4696
        %v5073 = vpack.c.b16 %v4701, %v4697
        %v5074 = vpack.c.b16 %v4706, %v4702
        %v5075 = vpack.c.b16 %v4707, %v4703
        %v5076 = vpack.c.b16 %v4708, %v4704
        %v5077 = vpack.c.b16 %v4709, %v4705
        %v5078 = vpack.c.b16 %v4714, %v4710
        %v5079 = vpack.c.b16 %v4715, %v4711
        %v5080 = vpack.c.b16 %v4716, %v4712
        %v5081 = vpack.c.b16 %v4717, %v4713
        %v5082 = vpack.c.b16 %v4722, %v4718
        %v5083 = vpack.c.b16 %v4723, %v4719
        %v5084 = vpack.c.b16 %v4724, %v4720
        %v5085 = vpack.c.b16 %v4725, %v4721
        %v5086 = vpack.c.b16 %v4730, %v4726
        %v5087 = vpack.c.b16 %v4731, %v4727
        %v5088 = vpack.c.b16 %v4732, %v4728
        %v5089 = vpack.c.b16 %v4733, %v4729
        %v5090 = vpack.c.b16 %v4738, %v4734
        %v5091 = vpack.c.b16 %v4739, %v4735
        %v5092 = vpack.c.b16 %v4740, %v4736
        %v5093 = vpack.c.b16 %v4741, %v4737
        %v5094 = vpack.c.b16 %v4746, %v4742
        %v5095 = vpack.c.b16 %v4747, %v4743
        %v5096 = vpack.c.b16 %v4748, %v4744
        %v5097 = vpack.c.b16 %v4749, %v4745
        %v5098 = vpack.c.b16 %v4754, %v4750
        %v5099 = vpack.c.b16 %v4755, %v4751
        %v5100 = vpack.c.b16 %v4756, %v4752
        %v5101 = vpack.c.b16 %v4757, %v4753
        %v5102 = vpack.c.b16 %v4762, %v4758
        %v5103 = vpack.c.b16 %v4763, %v4759
        %v5104 = vpack.c.b16 %v4764, %v4760
        %v5105 = vpack.c.b16 %v4765, %v4761
        %v5106 = vpack.c.b16 %v4770, %v4766
        %v5107 = vpack.c.b16 %v4771, %v4767
        %v5108 = vpack.c.b16 %v4772, %v4768
        %v5109 = vpack.c.b16 %v4773, %v4769
        %v5110 = vpack.c.b16 %v4778, %v4774
        %v5111 = vpack.c.b16 %v4779, %v4775
        %v5112 = vpack.c.b16 %v4780, %v4776
        %v5113 = vpack.c.b16 %v4781, %v4777
        %v5114 = vpack.c.b16 %v4786, %v4782
        %v5115 = vpack.c.b16 %v4787, %v4783
        %v5116 = vpack.c.b16 %v4788, %v4784
        %v5117 = vpack.c.b16 %v4789, %v4785
        %v5118 = vpack.c.b16 %v4794, %v4790
        %v5119 = vpack.c.b16 %v4795, %v4791
        %v5120 = vpack.c.b16 %v4796, %v4792
        %v5121 = vpack.c.b16 %v4797, %v4793
        %v5122 = vpack.c.b16 %v4802, %v4798
        %v5123 = vpack.c.b16 %v4803, %v4799
        %v5124 = vpack.c.b16 %v4804, %v4800
        %v5125 = vpack.c.b16 %v4805, %v4801
        %v5126 = vpack.c.b16 %v4810, %v4806
        %v5127 = vpack.c.b16 %v4811, %v4807
        %v5128 = vpack.c.b16 %v4812, %v4808
        %v5129 = vpack.c.b16 %v4813, %v4809
        %v5130 = vpack.c.b16 %v4818, %v4814
        %v5131 = vpack.c.b16 %v4819, %v4815
        %v5132 = vpack.c.b16 %v4820, %v4816
        %v5133 = vpack.c.b16 %v4821, %v4817
        %v5134 = vpack.c.b16 %v4826, %v4822
        %v5135 = vpack.c.b16 %v4827, %v4823
        %v5136 = vpack.c.b16 %v4828, %v4824
        %v5137 = vpack.c.b16 %v4829, %v4825
        %v5138 = vpack.c.b16 %v4834, %v4830
        %v5139 = vpack.c.b16 %v4835, %v4831
        %v5140 = vpack.c.b16 %v4836, %v4832
        %v5141 = vpack.c.b16 %v4837, %v4833
        %v5142 = vpack.c.b16 %v4842, %v4838
        %v5143 = vpack.c.b16 %v4843, %v4839
        %v5144 = vpack.c.b16 %v4844, %v4840
        %v5145 = vpack.c.b16 %v4845, %v4841
        %v5146 = vpack.c.b16 %v4850, %v4846
        %v5147 = vpack.c.b16 %v4851, %v4847
        %v5148 = vpack.c.b16 %v4852, %v4848
        %v5149 = vpack.c.b16 %v4853, %v4849
        %v5150 = vpack.c.b16 %v4858, %v4854
        %v5151 = vpack.c.b16 %v4859, %v4855
        %v5152 = vpack.c.b16 %v4860, %v4856
        %v5153 = vpack.c.b16 %v4861, %v4857
        %v5154 = vpack.c.b16 %v4866, %v4862
        %v5155 = vpack.c.b16 %v4867, %v4863
        %v5156 = vpack.c.b16 %v4868, %v4864
        %v5157 = vpack.c.b16 %v4869, %v4865
        %v5158 = vpack.c.b16 %v4874, %v4870
        %v5159 = vpack.c.b16 %v4875, %v4871
        %v5160 = vpack.c.b16 %v4876, %v4872
        %v5161 = vpack.c.b16 %v4877, %v4873
        %v5162 = vpack.c.b16 %v4882, %v4878
        %v5163 = vpack.c.b16 %v4883, %v4879
        %v5164 = vpack.c.b16 %v4884, %v4880
        %v5165 = vpack.c.b16 %v4885, %v4881
        %v5166 = vpack.c.b16 %v4890, %v4886
        %v5167 = vpack.c.b16 %v4891, %v4887
        %v5168 = vpack.c.b16 %v4892, %v4888
        %v5169 = vpack.c.b16 %v4893, %v4889
        %v5170 = vpack.c.b16 %v4898, %v4894
        %v5171 = vpack.c.b16 %v4899, %v4895
        %v5172 = vpack.c.b16 %v4900, %v4896
        %v5173 = vpack.c.b16 %v4901, %v4897
        %v5174 = vpack.c.b16 %v4906, %v4902
        %v5175 = vpack.c.b16 %v4907, %v4903
        %v5176 = vpack.c.b16 %v4908, %v4904
        %v5177 = vpack.c.b16 %v4909, %v4905
        %v5178 = vpack.c.b16 %v4914, %v4910
        %v5179 = vpack.c.b16 %v4915, %v4911
        %v5180 = vpack.c.b16 %v4916, %v4912
        %v5181 = vpack.c.b16 %v4917, %v4913
        %v5182 = vpack.c.b16 %v4922, %v4918
        %v5183 = vpack.c.b16 %v4923, %v4919
        %v5184 = vpack.c.b16 %v4924, %v4920
        %v5185 = vpack.c.b16 %v4925, %v4921
        %v5186 = vpack.c.b16 %v4930, %v4926
        %v5187 = vpack.c.b16 %v4931, %v4927
        %v5188 = vpack.c.b16 %v4932, %v4928
        %v5189 = vpack.c.b16 %v4933, %v4929
        %5446 = vmatpush.bf16.msra.mxu0 %v4962
        %5447 = vmatpush.bf16.msra.mxu0 %v4958
        %5448 = vmatpush.bf16.msra.mxu0 %v4954
        %5449 = vmatpush.bf16.msra.mxu0 %v4950
        %5450 = vmatpush.bf16.msra.mxu0 %v4946
        %5451 = vmatpush.bf16.msra.mxu0 %v4942
        %5452 = vmatpush.bf16.msra.mxu0 %v4938
        %5453 = vmatpush.bf16.msra.mxu0 %v4934
        %5454 = vmatmul.bf16.gmra.mxu0 %v3892
        %v5455 = vpop.f32.mrf.mxu0
        %v5456 = vadd.f32 %v4158, %v5455
        %v5457 = vpop.f32.mrf.mxu0
        %v5458 = vadd.f32 %v4158, %v5457
        %5459 = vdwg.mxu0
        %5460 = vmatpush.bf16.msra.mxu0 %v4994
        %5461 = vmatpush.bf16.msra.mxu0 %v4990
        %5462 = vmatpush.bf16.msra.mxu0 %v4986
        %5463 = vmatpush.bf16.msra.mxu0 %v4982
        %5464 = vmatpush.bf16.msra.mxu0 %v4978
        %5465 = vmatpush.bf16.msra.mxu0 %v4974
        %5466 = vmatpush.bf16.msra.mxu0 %v4970
        %5467 = vmatpush.bf16.msra.mxu0 %v4966
        %5468 = vmatmul.bf16.gmra.mxu0 %v3893
        %v5469 = vpop.f32.mrf.mxu0
        %v5470 = vadd.f32 %v5456, %v5469
        %v5471 = vpop.f32.mrf.mxu0
        %v5472 = vadd.f32 %v5458, %v5471
        %5473 = vdwg.mxu0
        %5474 = vmatpush.bf16.msra.mxu0 %v5026
        %5475 = vmatpush.bf16.msra.mxu0 %v5022
        %5476 = vmatpush.bf16.msra.mxu0 %v5018
        %5477 = vmatpush.bf16.msra.mxu0 %v5014
        %5478 = vmatpush.bf16.msra.mxu0 %v5010
        %5479 = vmatpush.bf16.msra.mxu0 %v5006
        %5480 = vmatpush.bf16.msra.mxu0 %v5002
        %5481 = vmatpush.bf16.msra.mxu0 %v4998
        %5482 = vmatmul.bf16.gmra.mxu0 %v3894
        %v5483 = vpop.f32.mrf.mxu0
        %v5484 = vadd.f32 %v5470, %v5483
        %v5485 = vpop.f32.mrf.mxu0
        %v5486 = vadd.f32 %v5472, %v5485
        %5487 = vdwg.mxu0
        %5488 = vmatpush.bf16.msra.mxu0 %v5058
        %5489 = vmatpush.bf16.msra.mxu0 %v5054
        %5490 = vmatpush.bf16.msra.mxu0 %v5050
        %5491 = vmatpush.bf16.msra.mxu0 %v5046
        %5492 = vmatpush.bf16.msra.mxu0 %v5042
        %5493 = vmatpush.bf16.msra.mxu0 %v5038
        %5494 = vmatpush.bf16.msra.mxu0 %v5034
        %5495 = vmatpush.bf16.msra.mxu0 %v5030
        %5496 = vmatmul.bf16.gmra.mxu0 %v3895
        %v5497 = vpop.f32.mrf.mxu0
        %v5498 = vadd.f32 %v5484, %v5497
        %v5499 = vpop.f32.mrf.mxu0
        %v5500 = vadd.f32 %v5486, %v5499
        %5501 = vdwg.mxu0
        %5502 = vmatpush.bf16.msra.mxu0 %v5090
        %5503 = vmatpush.bf16.msra.mxu0 %v5086
        %5504 = vmatpush.bf16.msra.mxu0 %v5082
        %5505 = vmatpush.bf16.msra.mxu0 %v5078
        %5506 = vmatpush.bf16.msra.mxu0 %v5074
        %5507 = vmatpush.bf16.msra.mxu0 %v5070
        %5508 = vmatpush.bf16.msra.mxu0 %v5066
        %5509 = vmatpush.bf16.msra.mxu0 %v5062
        %5510 = vmatmul.bf16.gmra.mxu0 %v3896
        %v5511 = vpop.f32.mrf.mxu0
        %v5512 = vadd.f32 %v5498, %v5511
        %v5513 = vpop.f32.mrf.mxu0
        %v5514 = vadd.f32 %v5500, %v5513
        %5515 = vdwg.mxu0
        %5516 = vmatpush.bf16.msra.mxu0 %v5122
        %5517 = vmatpush.bf16.msra.mxu0 %v5118
        %5518 = vmatpush.bf16.msra.mxu0 %v5114
        %5519 = vmatpush.bf16.msra.mxu0 %v5110
        %5520 = vmatpush.bf16.msra.mxu0 %v5106
        %5521 = vmatpush.bf16.msra.mxu0 %v5102
        %5522 = vmatpush.bf16.msra.mxu0 %v5098
        %5523 = vmatpush.bf16.msra.mxu0 %v5094
        %5524 = vmatmul.bf16.gmra.mxu0 %v3897
        %v5525 = vpop.f32.mrf.mxu0
        %v5526 = vadd.f32 %v5512, %v5525
        %v5527 = vpop.f32.mrf.mxu0
        %v5528 = vadd.f32 %v5514, %v5527
        %5529 = vdwg.mxu0
        %5530 = vmatpush.bf16.msra.mxu0 %v5154
        %5531 = vmatpush.bf16.msra.mxu0 %v5150
        %5532 = vmatpush.bf16.msra.mxu0 %v5146
        %5533 = vmatpush.bf16.msra.mxu0 %v5142
        %5534 = vmatpush.bf16.msra.mxu0 %v5138
        %5535 = vmatpush.bf16.msra.mxu0 %v5134
        %5536 = vmatpush.bf16.msra.mxu0 %v5130
        %5537 = vmatpush.bf16.msra.mxu0 %v5126
        %5538 = vmatmul.bf16.gmra.mxu0 %v3898
        %v5539 = vpop.f32.mrf.mxu0
        %v5540 = vadd.f32 %v5526, %v5539
        %v5541 = vpop.f32.mrf.mxu0
        %v5542 = vadd.f32 %v5528, %v5541
        %5543 = vdwg.mxu0
        %5544 = vmatpush.bf16.msra.mxu0 %v5186
        %5545 = vmatpush.bf16.msra.mxu0 %v5182
        %5546 = vmatpush.bf16.msra.mxu0 %v5178
        %5547 = vmatpush.bf16.msra.mxu0 %v5174
        %5548 = vmatpush.bf16.msra.mxu0 %v5170
        %5549 = vmatpush.bf16.msra.mxu0 %v5166
        %5550 = vmatpush.bf16.msra.mxu0 %v5162
        %5551 = vmatpush.bf16.msra.mxu0 %v5158
        %5552 = vmatmul.bf16.gmra.mxu0 %v3899
        %v5553 = vpop.f32.mrf.mxu0
        %v5554 = vadd.f32 %v5540, %v5553
        %v5555 = vpop.f32.mrf.mxu0
        %v5556 = vadd.f32 %v5542, %v5555
        %5557 = vdwg.mxu0
        %5558 = vmatpush.bf16.msra.mxu0 %v4963
        %5559 = vmatpush.bf16.msra.mxu0 %v4959
        %5560 = vmatpush.bf16.msra.mxu0 %v4955
        %5561 = vmatpush.bf16.msra.mxu0 %v4951
        %5562 = vmatpush.bf16.msra.mxu0 %v4947
        %5563 = vmatpush.bf16.msra.mxu0 %v4943
        %5564 = vmatpush.bf16.msra.mxu0 %v4939
        %5565 = vmatpush.bf16.msra.mxu0 %v4935
        %5566 = vmatmul.bf16.gmra.mxu0 %v3892
        %v5567 = vpop.f32.mrf.mxu0
        %v5568 = vadd.f32 %v4159, %v5567
        %v5569 = vpop.f32.mrf.mxu0
        %v5570 = vadd.f32 %v4159, %v5569
        %5571 = vdwg.mxu0
        %5572 = vmatpush.bf16.msra.mxu0 %v4995
        %5573 = vmatpush.bf16.msra.mxu0 %v4991
        %5574 = vmatpush.bf16.msra.mxu0 %v4987
        %5575 = vmatpush.bf16.msra.mxu0 %v4983
        %5576 = vmatpush.bf16.msra.mxu0 %v4979
        %5577 = vmatpush.bf16.msra.mxu0 %v4975
        %5578 = vmatpush.bf16.msra.mxu0 %v4971
        %5579 = vmatpush.bf16.msra.mxu0 %v4967
        %5580 = vmatmul.bf16.gmra.mxu0 %v3893
        %v5581 = vpop.f32.mrf.mxu0
        %v5582 = vadd.f32 %v5568, %v5581
        %v5583 = vpop.f32.mrf.mxu0
        %v5584 = vadd.f32 %v5570, %v5583
        %5585 = vdwg.mxu0
        %5586 = vmatpush.bf16.msra.mxu0 %v5027
        %5587 = vmatpush.bf16.msra.mxu0 %v5023
        %5588 = vmatpush.bf16.msra.mxu0 %v5019
        %5589 = vmatpush.bf16.msra.mxu0 %v5015
        %5590 = vmatpush.bf16.msra.mxu0 %v5011
        %5591 = vmatpush.bf16.msra.mxu0 %v5007
        %5592 = vmatpush.bf16.msra.mxu0 %v5003
        %5593 = vmatpush.bf16.msra.mxu0 %v4999
        %5594 = vmatmul.bf16.gmra.mxu0 %v3894
        %v5595 = vpop.f32.mrf.mxu0
        %v5596 = vadd.f32 %v5582, %v5595
        %v5597 = vpop.f32.mrf.mxu0
        %v5598 = vadd.f32 %v5584, %v5597
        %5599 = vdwg.mxu0
        %5600 = vmatpush.bf16.msra.mxu0 %v5059
        %5601 = vmatpush.bf16.msra.mxu0 %v5055
        %5602 = vmatpush.bf16.msra.mxu0 %v5051
        %5603 = vmatpush.bf16.msra.mxu0 %v5047
        %5604 = vmatpush.bf16.msra.mxu0 %v5043
        %5605 = vmatpush.bf16.msra.mxu0 %v5039
        %5606 = vmatpush.bf16.msra.mxu0 %v5035
        %5607 = vmatpush.bf16.msra.mxu0 %v5031
        %5608 = vmatmul.bf16.gmra.mxu0 %v3895
        %v5609 = vpop.f32.mrf.mxu0
        %v5610 = vadd.f32 %v5596, %v5609
        %v5611 = vpop.f32.mrf.mxu0
        %v5612 = vadd.f32 %v5598, %v5611
        %5613 = vdwg.mxu0
        %5614 = vmatpush.bf16.msra.mxu0 %v5091
        %5615 = vmatpush.bf16.msra.mxu0 %v5087
        %5616 = vmatpush.bf16.msra.mxu0 %v5083
        %5617 = vmatpush.bf16.msra.mxu0 %v5079
        %5618 = vmatpush.bf16.msra.mxu0 %v5075
        %5619 = vmatpush.bf16.msra.mxu0 %v5071
        %5620 = vmatpush.bf16.msra.mxu0 %v5067
        %5621 = vmatpush.bf16.msra.mxu0 %v5063
        %5622 = vmatmul.bf16.gmra.mxu0 %v3896
        %v5623 = vpop.f32.mrf.mxu0
        %v5624 = vadd.f32 %v5610, %v5623
        %v5625 = vpop.f32.mrf.mxu0
        %v5626 = vadd.f32 %v5612, %v5625
        %5627 = vdwg.mxu0
        %5628 = vmatpush.bf16.msra.mxu0 %v5123
        %5629 = vmatpush.bf16.msra.mxu0 %v5119
        %5630 = vmatpush.bf16.msra.mxu0 %v5115
        %5631 = vmatpush.bf16.msra.mxu0 %v5111
        %5632 = vmatpush.bf16.msra.mxu0 %v5107
        %5633 = vmatpush.bf16.msra.mxu0 %v5103
        %5634 = vmatpush.bf16.msra.mxu0 %v5099
        %5635 = vmatpush.bf16.msra.mxu0 %v5095
        %5636 = vmatmul.bf16.gmra.mxu0 %v3897
        %v5637 = vpop.f32.mrf.mxu0
        %v5638 = vadd.f32 %v5624, %v5637
        %v5639 = vpop.f32.mrf.mxu0
        %v5640 = vadd.f32 %v5626, %v5639
        %5641 = vdwg.mxu0
        %5642 = vmatpush.bf16.msra.mxu0 %v5155
        %5643 = vmatpush.bf16.msra.mxu0 %v5151
        %5644 = vmatpush.bf16.msra.mxu0 %v5147
        %5645 = vmatpush.bf16.msra.mxu0 %v5143
        %5646 = vmatpush.bf16.msra.mxu0 %v5139
        %5647 = vmatpush.bf16.msra.mxu0 %v5135
        %5648 = vmatpush.bf16.msra.mxu0 %v5131
        %5649 = vmatpush.bf16.msra.mxu0 %v5127
        %5650 = vmatmul.bf16.gmra.mxu0 %v3898
        %v5651 = vpop.f32.mrf.mxu0
        %v5652 = vadd.f32 %v5638, %v5651
        %v5653 = vpop.f32.mrf.mxu0
        %v5654 = vadd.f32 %v5640, %v5653
        %5655 = vdwg.mxu0
        %5656 = vmatpush.bf16.msra.mxu0 %v5187
        %5657 = vmatpush.bf16.msra.mxu0 %v5183
        %5658 = vmatpush.bf16.msra.mxu0 %v5179
        %5659 = vmatpush.bf16.msra.mxu0 %v5175
        %5660 = vmatpush.bf16.msra.mxu0 %v5171
        %5661 = vmatpush.bf16.msra.mxu0 %v5167
        %5662 = vmatpush.bf16.msra.mxu0 %v5163
        %5663 = vmatpush.bf16.msra.mxu0 %v5159
        %5664 = vmatmul.bf16.gmra.mxu0 %v3899
        %v5665 = vpop.f32.mrf.mxu0
        %v5666 = vadd.f32 %v5652, %v5665
        %v5667 = vpop.f32.mrf.mxu0
        %v5668 = vadd.f32 %v5654, %v5667
        %5669 = vdwg.mxu0
        %5670 = vmatpush.bf16.msra.mxu0 %v4964
        %5671 = vmatpush.bf16.msra.mxu0 %v4960
        %5672 = vmatpush.bf16.msra.mxu0 %v4956
        %5673 = vmatpush.bf16.msra.mxu0 %v4952
        %5674 = vmatpush.bf16.msra.mxu0 %v4948
        %5675 = vmatpush.bf16.msra.mxu0 %v4944
        %5676 = vmatpush.bf16.msra.mxu0 %v4940
        %5677 = vmatpush.bf16.msra.mxu0 %v4936
        %5678 = vmatmul.bf16.gmra.mxu0 %v3892
        %v5679 = vpop.f32.mrf.mxu0
        %v5680 = vadd.f32 %v4160, %v5679
        %v5681 = vpop.f32.mrf.mxu0
        %v5682 = vadd.f32 %v4160, %v5681
        %5683 = vdwg.mxu0
        %5684 = vmatpush.bf16.msra.mxu0 %v4996
        %5685 = vmatpush.bf16.msra.mxu0 %v4992
        %5686 = vmatpush.bf16.msra.mxu0 %v4988
        %5687 = vmatpush.bf16.msra.mxu0 %v4984
        %5688 = vmatpush.bf16.msra.mxu0 %v4980
        %5689 = vmatpush.bf16.msra.mxu0 %v4976
        %5690 = vmatpush.bf16.msra.mxu0 %v4972
        %5691 = vmatpush.bf16.msra.mxu0 %v4968
        %5692 = vmatmul.bf16.gmra.mxu0 %v3893
        %v5693 = vpop.f32.mrf.mxu0
        %v5694 = vadd.f32 %v5680, %v5693
        %v5695 = vpop.f32.mrf.mxu0
        %v5696 = vadd.f32 %v5682, %v5695
        %5697 = vdwg.mxu0
        %5698 = vmatpush.bf16.msra.mxu0 %v5028
        %5699 = vmatpush.bf16.msra.mxu0 %v5024
        %5700 = vmatpush.bf16.msra.mxu0 %v5020
        %5701 = vmatpush.bf16.msra.mxu0 %v5016
        %5702 = vmatpush.bf16.msra.mxu0 %v5012
        %5703 = vmatpush.bf16.msra.mxu0 %v5008
        %5704 = vmatpush.bf16.msra.mxu0 %v5004
        %5705 = vmatpush.bf16.msra.mxu0 %v5000
        %5706 = vmatmul.bf16.gmra.mxu0 %v3894
        %v5707 = vpop.f32.mrf.mxu0
        %v5708 = vadd.f32 %v5694, %v5707
        %v5709 = vpop.f32.mrf.mxu0
        %v5710 = vadd.f32 %v5696, %v5709
        %5711 = vdwg.mxu0
        %5712 = vmatpush.bf16.msra.mxu0 %v5060
        %5713 = vmatpush.bf16.msra.mxu0 %v5056
        %5714 = vmatpush.bf16.msra.mxu0 %v5052
        %5715 = vmatpush.bf16.msra.mxu0 %v5048
        %5716 = vmatpush.bf16.msra.mxu0 %v5044
        %5717 = vmatpush.bf16.msra.mxu0 %v5040
        %5718 = vmatpush.bf16.msra.mxu0 %v5036
        %5719 = vmatpush.bf16.msra.mxu0 %v5032
        %5720 = vmatmul.bf16.gmra.mxu0 %v3895
        %v5721 = vpop.f32.mrf.mxu0
        %v5722 = vadd.f32 %v5708, %v5721
        %v5723 = vpop.f32.mrf.mxu0
        %v5724 = vadd.f32 %v5710, %v5723
        %5725 = vdwg.mxu0
        %5726 = vmatpush.bf16.msra.mxu0 %v5092
        %5727 = vmatpush.bf16.msra.mxu0 %v5088
        %5728 = vmatpush.bf16.msra.mxu0 %v5084
        %5729 = vmatpush.bf16.msra.mxu0 %v5080
        %5730 = vmatpush.bf16.msra.mxu0 %v5076
        %5731 = vmatpush.bf16.msra.mxu0 %v5072
        %5732 = vmatpush.bf16.msra.mxu0 %v5068
        %5733 = vmatpush.bf16.msra.mxu0 %v5064
        %5734 = vmatmul.bf16.gmra.mxu0 %v3896
        %v5735 = vpop.f32.mrf.mxu0
        %v5736 = vadd.f32 %v5722, %v5735
        %v5737 = vpop.f32.mrf.mxu0
        %v5738 = vadd.f32 %v5724, %v5737
        %5739 = vdwg.mxu0
        %5740 = vmatpush.bf16.msra.mxu0 %v5124
        %5741 = vmatpush.bf16.msra.mxu0 %v5120
        %5742 = vmatpush.bf16.msra.mxu0 %v5116
        %5743 = vmatpush.bf16.msra.mxu0 %v5112
        %5744 = vmatpush.bf16.msra.mxu0 %v5108
        %5745 = vmatpush.bf16.msra.mxu0 %v5104
        %5746 = vmatpush.bf16.msra.mxu0 %v5100
        %5747 = vmatpush.bf16.msra.mxu0 %v5096
        %5748 = vmatmul.bf16.gmra.mxu0 %v3897
        %v5749 = vpop.f32.mrf.mxu0
        %v5750 = vadd.f32 %v5736, %v5749
        %v5751 = vpop.f32.mrf.mxu0
        %v5752 = vadd.f32 %v5738, %v5751
        %5753 = vdwg.mxu0
        %5754 = vmatpush.bf16.msra.mxu0 %v5156
        %5755 = vmatpush.bf16.msra.mxu0 %v5152
        %5756 = vmatpush.bf16.msra.mxu0 %v5148
        %5757 = vmatpush.bf16.msra.mxu0 %v5144
        %5758 = vmatpush.bf16.msra.mxu0 %v5140
        %5759 = vmatpush.bf16.msra.mxu0 %v5136
        %5760 = vmatpush.bf16.msra.mxu0 %v5132
        %5761 = vmatpush.bf16.msra.mxu0 %v5128
        %5762 = vmatmul.bf16.gmra.mxu0 %v3898
        %v5763 = vpop.f32.mrf.mxu0
        %v5764 = vadd.f32 %v5750, %v5763
        %v5765 = vpop.f32.mrf.mxu0
        %v5766 = vadd.f32 %v5752, %v5765
        %5767 = vdwg.mxu0
        %5768 = vmatpush.bf16.msra.mxu0 %v5188
        %5769 = vmatpush.bf16.msra.mxu0 %v5184
        %5770 = vmatpush.bf16.msra.mxu0 %v5180
        %5771 = vmatpush.bf16.msra.mxu0 %v5176
        %5772 = vmatpush.bf16.msra.mxu0 %v5172
        %5773 = vmatpush.bf16.msra.mxu0 %v5168
        %5774 = vmatpush.bf16.msra.mxu0 %v5164
        %5775 = vmatpush.bf16.msra.mxu0 %v5160
        %5776 = vmatmul.bf16.gmra.mxu0 %v3899
        %v5777 = vpop.f32.mrf.mxu0
        %v5778 = vadd.f32 %v5764, %v5777
        %v5779 = vpop.f32.mrf.mxu0
        %v5780 = vadd.f32 %v5766, %v5779
        %5781 = vdwg.mxu0
        %5782 = vmatpush.bf16.msra.mxu0 %v4965
        %5783 = vmatpush.bf16.msra.mxu0 %v4961
        %5784 = vmatpush.bf16.msra.mxu0 %v4957
        %5785 = vmatpush.bf16.msra.mxu0 %v4953
        %5786 = vmatpush.bf16.msra.mxu0 %v4949
        %5787 = vmatpush.bf16.msra.mxu0 %v4945
        %5788 = vmatpush.bf16.msra.mxu0 %v4941
        %5789 = vmatpush.bf16.msra.mxu0 %v4937
        %5790 = vmatmul.bf16.gmra.mxu0 %v3892
        %v5791 = vpop.f32.mrf.mxu0
        %v5792 = vadd.f32 %v4161, %v5791
        %v5793 = vpop.f32.mrf.mxu0
        %v5794 = vadd.f32 %v4161, %v5793
        %5795 = vdwg.mxu0
        %5796 = vmatpush.bf16.msra.mxu0 %v4997
        %5797 = vmatpush.bf16.msra.mxu0 %v4993
        %5798 = vmatpush.bf16.msra.mxu0 %v4989
        %5799 = vmatpush.bf16.msra.mxu0 %v4985
        %5800 = vmatpush.bf16.msra.mxu0 %v4981
        %5801 = vmatpush.bf16.msra.mxu0 %v4977
        %5802 = vmatpush.bf16.msra.mxu0 %v4973
        %5803 = vmatpush.bf16.msra.mxu0 %v4969
        %5804 = vmatmul.bf16.gmra.mxu0 %v3893
        %v5805 = vpop.f32.mrf.mxu0
        %v5806 = vadd.f32 %v5792, %v5805
        %v5807 = vpop.f32.mrf.mxu0
        %v5808 = vadd.f32 %v5794, %v5807
        %5809 = vdwg.mxu0
        %5810 = vmatpush.bf16.msra.mxu0 %v5029
        %5811 = vmatpush.bf16.msra.mxu0 %v5025
        %5812 = vmatpush.bf16.msra.mxu0 %v5021
        %5813 = vmatpush.bf16.msra.mxu0 %v5017
        %5814 = vmatpush.bf16.msra.mxu0 %v5013
        %5815 = vmatpush.bf16.msra.mxu0 %v5009
        %5816 = vmatpush.bf16.msra.mxu0 %v5005
        %5817 = vmatpush.bf16.msra.mxu0 %v5001
        %5818 = vmatmul.bf16.gmra.mxu0 %v3894
        %v5819 = vpop.f32.mrf.mxu0
        %v5820 = vadd.f32 %v5806, %v5819
        %v5821 = vpop.f32.mrf.mxu0
        %v5822 = vadd.f32 %v5808, %v5821
        %5823 = vdwg.mxu0
        %5824 = vmatpush.bf16.msra.mxu0 %v5061
        %5825 = vmatpush.bf16.msra.mxu0 %v5057
        %5826 = vmatpush.bf16.msra.mxu0 %v5053
        %5827 = vmatpush.bf16.msra.mxu0 %v5049
        %5828 = vmatpush.bf16.msra.mxu0 %v5045
        %5829 = vmatpush.bf16.msra.mxu0 %v5041
        %5830 = vmatpush.bf16.msra.mxu0 %v5037
        %5831 = vmatpush.bf16.msra.mxu0 %v5033
        %5832 = vmatmul.bf16.gmra.mxu0 %v3895
        %v5833 = vpop.f32.mrf.mxu0
        %v5834 = vadd.f32 %v5820, %v5833
        %v5835 = vpop.f32.mrf.mxu0
        %v5836 = vadd.f32 %v5822, %v5835
        %5837 = vdwg.mxu0
        %5838 = vmatpush.bf16.msra.mxu0 %v5093
        %5839 = vmatpush.bf16.msra.mxu0 %v5089
        %5840 = vmatpush.bf16.msra.mxu0 %v5085
        %5841 = vmatpush.bf16.msra.mxu0 %v5081
        %5842 = vmatpush.bf16.msra.mxu0 %v5077
        %5843 = vmatpush.bf16.msra.mxu0 %v5073
        %5844 = vmatpush.bf16.msra.mxu0 %v5069
        %5845 = vmatpush.bf16.msra.mxu0 %v5065
        %5846 = vmatmul.bf16.gmra.mxu0 %v3896
        %v5847 = vpop.f32.mrf.mxu0
        %v5848 = vadd.f32 %v5834, %v5847
        %v5849 = vpop.f32.mrf.mxu0
        %v5850 = vadd.f32 %v5836, %v5849
        %5851 = vdwg.mxu0
        %5852 = vmatpush.bf16.msra.mxu0 %v5125
        %5853 = vmatpush.bf16.msra.mxu0 %v5121
        %5854 = vmatpush.bf16.msra.mxu0 %v5117
        %5855 = vmatpush.bf16.msra.mxu0 %v5113
        %5856 = vmatpush.bf16.msra.mxu0 %v5109
        %5857 = vmatpush.bf16.msra.mxu0 %v5105
        %5858 = vmatpush.bf16.msra.mxu0 %v5101
        %5859 = vmatpush.bf16.msra.mxu0 %v5097
        %5860 = vmatmul.bf16.gmra.mxu0 %v3897
        %v5861 = vpop.f32.mrf.mxu0
        %v5862 = vadd.f32 %v5848, %v5861
        %v5863 = vpop.f32.mrf.mxu0
        %v5864 = vadd.f32 %v5850, %v5863
        %5865 = vdwg.mxu0
        %5866 = vmatpush.bf16.msra.mxu0 %v5157
        %5867 = vmatpush.bf16.msra.mxu0 %v5153
        %5868 = vmatpush.bf16.msra.mxu0 %v5149
        %5869 = vmatpush.bf16.msra.mxu0 %v5145
        %5870 = vmatpush.bf16.msra.mxu0 %v5141
        %5871 = vmatpush.bf16.msra.mxu0 %v5137
        %5872 = vmatpush.bf16.msra.mxu0 %v5133
        %5873 = vmatpush.bf16.msra.mxu0 %v5129
        %5874 = vmatmul.bf16.gmra.mxu0 %v3898
        %v5875 = vpop.f32.mrf.mxu0
        %v5876 = vadd.f32 %v5862, %v5875
        %v5877 = vpop.f32.mrf.mxu0
        %v5878 = vadd.f32 %v5864, %v5877
        %5879 = vdwg.mxu0
        %5880 = vmatpush.bf16.msra.mxu0 %v5189
        %5881 = vmatpush.bf16.msra.mxu0 %v5185
        %5882 = vmatpush.bf16.msra.mxu0 %v5181
        %5883 = vmatpush.bf16.msra.mxu0 %v5177
        %5884 = vmatpush.bf16.msra.mxu0 %v5173
        %5885 = vmatpush.bf16.msra.mxu0 %v5169
        %5886 = vmatpush.bf16.msra.mxu0 %v5165
        %5887 = vmatpush.bf16.msra.mxu0 %v5161
        %5888 = vmatmul.bf16.gmra.mxu0 %v3899
        %v5889 = vpop.f32.mrf.mxu0
        %v5890 = vadd.f32 %v5876, %v5889
        %v5891 = vpop.f32.mrf.mxu0
        %v5892 = vadd.f32 %v5878, %v5891
        %5893 = vdwg.mxu0
        %vm5894 = vcmp.gt.f32.partialorder %v5554, 0.0
        %vm5895 = vcmp.gt.f32.partialorder %v5666, 0.0
        %vm5896 = vcmp.gt.f32.partialorder %v5778, 0.0
        %vm5897 = vcmp.gt.f32.partialorder %v5890, 0.0
        %vm5898 = vcmp.gt.f32.partialorder %v5556, 0.0
        %vm5899 = vcmp.gt.f32.partialorder %v5668, 0.0
        %vm5900 = vcmp.gt.f32.partialorder %v5780, 0.0
        %vm5901 = vcmp.gt.f32.partialorder %v5892, 0.0
        %v5902 = vmul.f32 %v5554, 0.2
        %v5903 = vmul.f32 %v5666, 0.2
        %v5904 = vmul.f32 %v5778, 0.2
        %v5905 = vmul.f32 %v5890, 0.2
        %v5906 = vmul.f32 %v5556, 0.2
        %v5907 = vmul.f32 %v5668, 0.2
        %v5908 = vmul.f32 %v5780, 0.2
        %v5909 = vmul.f32 %v5892, 0.2
        %v5910 = vsel %vm5894, %v5554, %v5902
        %v5911 = vsel %vm5895, %v5666, %v5903
        %v5912 = vsel %vm5896, %v5778, %v5904
        %v5913 = vsel %vm5897, %v5890, %v5905
        %v5914 = vsel %vm5898, %v5556, %v5906
        %v5915 = vsel %vm5899, %v5668, %v5907
        %v5916 = vsel %vm5900, %v5780, %v5908
        %v5917 = vsel %vm5901, %v5892, %v5909
        %v5918 = vld [vmem:[%s609] sm:$0xff]
        %v5919 = vld [vmem:[%s609 + $0x8] sm:$0xff]
        %v5920 = vld [vmem:[%s609 + $0x10] sm:$0xff]
        %v5921 = vld [vmem:[%s609 + $0x18] sm:$0xff]
        %v5922 = vunpack.c.l.bf16 %v5918
        %v5923 = vunpack.c.h.bf16 %v5918
        %v5924 = vunpack.c.l.bf16 %v5919
        %v5925 = vunpack.c.h.bf16 %v5919
        %v5926 = vunpack.c.l.bf16 %v5920
        %v5927 = vunpack.c.h.bf16 %v5920
        %v5928 = vunpack.c.l.bf16 %v5921
        %v5929 = vunpack.c.h.bf16 %v5921
        %v5930 = vmul.f32 %v5910, %v5922
        %v5931 = vmul.f32 %v5911, %v5923
        %v5932 = vmul.f32 %v5912, %v5924
        %v5933 = vmul.f32 %v5913, %v5925
        %v5934 = vmul.f32 %v5914, %v5926
        %v5935 = vmul.f32 %v5915, %v5927
        %v5936 = vmul.f32 %v5916, %v5928
        %v5937 = vmul.f32 %v5917, %v5929
        %v5938 = vpack.c.bf16 %v5934, %v5930
        %v5939 = vpack.c.bf16 %v5935, %v5931
        %v5940 = vpack.c.bf16 %v5936, %v5932
        %v5941 = vpack.c.bf16 %v5937, %v5933
        %v5942 = vld [vmem:[#allocation11] sm:$0xff]
        %v5943 = vld [vmem:[#allocation11 + $0x8] sm:$0xff]
        %v5944 = vld [vmem:[#allocation11 + $0x10] sm:$0xff]
        %v5945 = vld [vmem:[#allocation11 + $0x18] sm:$0xff]
        %v5946 = vld [vmem:[#allocation11 + $0x20] sm:$0xff]
        %v5947 = vld [vmem:[#allocation11 + $0x28] sm:$0xff]
        %v5948 = vld [vmem:[#allocation11 + $0x30] sm:$0xff]
        %v5949 = vld [vmem:[#allocation11 + $0x38] sm:$0xff]
        %v5950 = vld [vmem:[#allocation11 + $0x40] sm:$0xff]
        %v5951 = vld [vmem:[#allocation11 + $0x48] sm:$0xff]
        %v5952 = vld [vmem:[#allocation11 + $0x50] sm:$0xff]
        %v5953 = vld [vmem:[#allocation11 + $0x58] sm:$0xff]
        %v5954 = vld [vmem:[#allocation11 + $0x60] sm:$0xff]
        %v5955 = vld [vmem:[#allocation11 + $0x68] sm:$0xff]
        %v5956 = vld [vmem:[#allocation11 + $0x70] sm:$0xff]
        %v5957 = vld [vmem:[#allocation11 + $0x78] sm:$0xff]
        %v5958 = vld [vmem:[#allocation11 + $0x80] sm:$0xff]
        %v5959 = vld [vmem:[#allocation11 + $0x88] sm:$0xff]
        %v5960 = vld [vmem:[#allocation11 + $0x90] sm:$0xff]
        %v5961 = vld [vmem:[#allocation11 + $0x98] sm:$0xff]
        %v5962 = vld [vmem:[#allocation11 + $0xa0] sm:$0xff]
        %v5963 = vld [vmem:[#allocation11 + $0xa8] sm:$0xff]
        %v5964 = vld [vmem:[#allocation11 + $0xb0] sm:$0xff]
        %v5965 = vld [vmem:[#allocation11 + $0xb8] sm:$0xff]
        %v5966 = vld [vmem:[#allocation11 + $0xc0] sm:$0xff]
        %v5967 = vld [vmem:[#allocation11 + $0xc8] sm:$0xff]
        %v5968 = vld [vmem:[#allocation11 + $0xd0] sm:$0xff]
        %v5969 = vld [vmem:[#allocation11 + $0xd8] sm:$0xff]
        %v5970 = vld [vmem:[#allocation11 + $0xe0] sm:$0xff]
        %v5971 = vld [vmem:[#allocation11 + $0xe8] sm:$0xff]
        %v5972 = vld [vmem:[#allocation11 + $0xf0] sm:$0xff]
        %v5973 = vld [vmem:[#allocation11 + $0xf8] sm:$0xff]
        %v5974 = vld [vmem:[#allocation11 + $0x100] sm:$0xff]
        %v5975 = vld [vmem:[#allocation11 + $0x108] sm:$0xff]
        %v5976 = vld [vmem:[#allocation11 + $0x110] sm:$0xff]
        %v5977 = vld [vmem:[#allocation11 + $0x118] sm:$0xff]
        %v5978 = vld [vmem:[#allocation11 + $0x120] sm:$0xff]
        %v5979 = vld [vmem:[#allocation11 + $0x128] sm:$0xff]
        %v5980 = vld [vmem:[#allocation11 + $0x130] sm:$0xff]
        %v5981 = vld [vmem:[#allocation11 + $0x138] sm:$0xff]
        %v5982 = vld [vmem:[#allocation11 + $0x140] sm:$0xff]
        %v5983 = vld [vmem:[#allocation11 + $0x148] sm:$0xff]
        %v5984 = vld [vmem:[#allocation11 + $0x150] sm:$0xff]
        %v5985 = vld [vmem:[#allocation11 + $0x158] sm:$0xff]
        %v5986 = vld [vmem:[#allocation11 + $0x160] sm:$0xff]
        %v5987 = vld [vmem:[#allocation11 + $0x168] sm:$0xff]
        %v5988 = vld [vmem:[#allocation11 + $0x170] sm:$0xff]
        %v5989 = vld [vmem:[#allocation11 + $0x178] sm:$0xff]
        %v5990 = vld [vmem:[#allocation11 + $0x180] sm:$0xff]
        %v5991 = vld [vmem:[#allocation11 + $0x188] sm:$0xff]
        %v5992 = vld [vmem:[#allocation11 + $0x190] sm:$0xff]
        %v5993 = vld [vmem:[#allocation11 + $0x198] sm:$0xff]
        %v5994 = vld [vmem:[#allocation11 + $0x1a0] sm:$0xff]
        %v5995 = vld [vmem:[#allocation11 + $0x1a8] sm:$0xff]
        %v5996 = vld [vmem:[#allocation11 + $0x1b0] sm:$0xff]
        %v5997 = vld [vmem:[#allocation11 + $0x1b8] sm:$0xff]
        %v5998 = vld [vmem:[#allocation11 + $0x1c0] sm:$0xff]
        %v5999 = vld [vmem:[#allocation11 + $0x1c8] sm:$0xff]
        %v6000 = vld [vmem:[#allocation11 + $0x1d0] sm:$0xff]
        %v6001 = vld [vmem:[#allocation11 + $0x1d8] sm:$0xff]
        %v6002 = vld [vmem:[#allocation11 + $0x1e0] sm:$0xff]
        %v6003 = vld [vmem:[#allocation11 + $0x1e8] sm:$0xff]
        %v6004 = vld [vmem:[#allocation11 + $0x1f0] sm:$0xff]
        %v6005 = vld [vmem:[#allocation11 + $0x1f8] sm:$0xff]
        %v6006 = vld [vmem:[#allocation13] sm:$0x3]
        %v6008 = vperm.slane %v6006, 0
        %v6009 = vperm.slane %v6006, 1
        %v6076 = vunpack.c.l.b16 %v5942
        %v6077 = vunpack.c.h.b16 %v5942
        %v6078 = vunpack.c.l.b16 %v5943
        %v6079 = vunpack.c.h.b16 %v5943
        %v6080 = vunpack.c.l.b16 %v5944
        %v6081 = vunpack.c.h.b16 %v5944
        %v6082 = vunpack.c.l.b16 %v5945
        %v6083 = vunpack.c.h.b16 %v5945
        %v6084 = vunpack.c.l.b16 %v5946
        %v6085 = vunpack.c.h.b16 %v5946
        %v6086 = vunpack.c.l.b16 %v5947
        %v6087 = vunpack.c.h.b16 %v5947
        %v6088 = vunpack.c.l.b16 %v5948
        %v6089 = vunpack.c.h.b16 %v5948
        %v6090 = vunpack.c.l.b16 %v5949
        %v6091 = vunpack.c.h.b16 %v5949
        %v6092 = vunpack.c.l.b16 %v5950
        %v6093 = vunpack.c.h.b16 %v5950
        %v6094 = vunpack.c.l.b16 %v5951
        %v6095 = vunpack.c.h.b16 %v5951
        %v6096 = vunpack.c.l.b16 %v5952
        %v6097 = vunpack.c.h.b16 %v5952
        %v6098 = vunpack.c.l.b16 %v5953
        %v6099 = vunpack.c.h.b16 %v5953
        %v6100 = vunpack.c.l.b16 %v5954
        %v6101 = vunpack.c.h.b16 %v5954
        %v6102 = vunpack.c.l.b16 %v5955
        %v6103 = vunpack.c.h.b16 %v5955
        %v6104 = vunpack.c.l.b16 %v5956
        %v6105 = vunpack.c.h.b16 %v5956
        %v6106 = vunpack.c.l.b16 %v5957
        %v6107 = vunpack.c.h.b16 %v5957
        %v6108 = vunpack.c.l.b16 %v5958
        %v6109 = vunpack.c.h.b16 %v5958
        %v6110 = vunpack.c.l.b16 %v5959
        %v6111 = vunpack.c.h.b16 %v5959
        %v6112 = vunpack.c.l.b16 %v5960
        %v6113 = vunpack.c.h.b16 %v5960
        %v6114 = vunpack.c.l.b16 %v5961
        %v6115 = vunpack.c.h.b16 %v5961
        %v6116 = vunpack.c.l.b16 %v5962
        %v6117 = vunpack.c.h.b16 %v5962
        %v6118 = vunpack.c.l.b16 %v5963
        %v6119 = vunpack.c.h.b16 %v5963
        %v6120 = vunpack.c.l.b16 %v5964
        %v6121 = vunpack.c.h.b16 %v5964
        %v6122 = vunpack.c.l.b16 %v5965
        %v6123 = vunpack.c.h.b16 %v5965
        %v6124 = vunpack.c.l.b16 %v5966
        %v6125 = vunpack.c.h.b16 %v5966
        %v6126 = vunpack.c.l.b16 %v5967
        %v6127 = vunpack.c.h.b16 %v5967
        %v6128 = vunpack.c.l.b16 %v5968
        %v6129 = vunpack.c.h.b16 %v5968
        %v6130 = vunpack.c.l.b16 %v5969
        %v6131 = vunpack.c.h.b16 %v5969
        %v6132 = vunpack.c.l.b16 %v5970
        %v6133 = vunpack.c.h.b16 %v5970
        %v6134 = vunpack.c.l.b16 %v5971
        %v6135 = vunpack.c.h.b16 %v5971
        %v6136 = vunpack.c.l.b16 %v5972
        %v6137 = vunpack.c.h.b16 %v5972
        %v6138 = vunpack.c.l.b16 %v5973
        %v6139 = vunpack.c.h.b16 %v5973
        %v6140 = vunpack.c.l.b16 %v5974
        %v6141 = vunpack.c.h.b16 %v5974
        %v6142 = vunpack.c.l.b16 %v5975
        %v6143 = vunpack.c.h.b16 %v5975
        %v6144 = vunpack.c.l.b16 %v5976
        %v6145 = vunpack.c.h.b16 %v5976
        %v6146 = vunpack.c.l.b16 %v5977
        %v6147 = vunpack.c.h.b16 %v5977
        %v6148 = vunpack.c.l.b16 %v5978
        %v6149 = vunpack.c.h.b16 %v5978
        %v6150 = vunpack.c.l.b16 %v5979
        %v6151 = vunpack.c.h.b16 %v5979
        %v6152 = vunpack.c.l.b16 %v5980
        %v6153 = vunpack.c.h.b16 %v5980
        %v6154 = vunpack.c.l.b16 %v5981
        %v6155 = vunpack.c.h.b16 %v5981
        %v6156 = vunpack.c.l.b16 %v5982
        %v6157 = vunpack.c.h.b16 %v5982
        %v6158 = vunpack.c.l.b16 %v5983
        %v6159 = vunpack.c.h.b16 %v5983
        %v6160 = vunpack.c.l.b16 %v5984
        %v6161 = vunpack.c.h.b16 %v5984
        %v6162 = vunpack.c.l.b16 %v5985
        %v6163 = vunpack.c.h.b16 %v5985
        %v6164 = vunpack.c.l.b16 %v5986
        %v6165 = vunpack.c.h.b16 %v5986
        %v6166 = vunpack.c.l.b16 %v5987
        %v6167 = vunpack.c.h.b16 %v5987
        %v6168 = vunpack.c.l.b16 %v5988
        %v6169 = vunpack.c.h.b16 %v5988
        %v6170 = vunpack.c.l.b16 %v5989
        %v6171 = vunpack.c.h.b16 %v5989
        %v6172 = vunpack.c.l.b16 %v5990
        %v6173 = vunpack.c.h.b16 %v5990
        %v6174 = vunpack.c.l.b16 %v5991
        %v6175 = vunpack.c.h.b16 %v5991
        %v6176 = vunpack.c.l.b16 %v5992
        %v6177 = vunpack.c.h.b16 %v5992
        %v6178 = vunpack.c.l.b16 %v5993
        %v6179 = vunpack.c.h.b16 %v5993
        %v6180 = vunpack.c.l.b16 %v5994
        %v6181 = vunpack.c.h.b16 %v5994
        %v6182 = vunpack.c.l.b16 %v5995
        %v6183 = vunpack.c.h.b16 %v5995
        %v6184 = vunpack.c.l.b16 %v5996
        %v6185 = vunpack.c.h.b16 %v5996
        %v6186 = vunpack.c.l.b16 %v5997
        %v6187 = vunpack.c.h.b16 %v5997
        %v6188 = vunpack.c.l.b16 %v5998
        %v6189 = vunpack.c.h.b16 %v5998
        %v6190 = vunpack.c.l.b16 %v5999
        %v6191 = vunpack.c.h.b16 %v5999
        %v6192 = vunpack.c.l.b16 %v6000
        %v6193 = vunpack.c.h.b16 %v6000
        %v6194 = vunpack.c.l.b16 %v6001
        %v6195 = vunpack.c.h.b16 %v6001
        %v6196 = vunpack.c.l.b16 %v6002
        %v6197 = vunpack.c.h.b16 %v6002
        %v6198 = vunpack.c.l.b16 %v6003
        %v6199 = vunpack.c.h.b16 %v6003
        %v6200 = vunpack.c.l.b16 %v6004
        %v6201 = vunpack.c.h.b16 %v6004
        %v6202 = vunpack.c.l.b16 %v6005
        %v6203 = vunpack.c.h.b16 %v6005
        %v6204 = vpack.c.b16 %v6078, %v6076
        %v6205 = vpack.c.b16 %v6079, %v6077
        %v6206 = vpack.c.b16 %v6082, %v6080
        %v6207 = vpack.c.b16 %v6083, %v6081
        %v6208 = vpack.c.b16 %v6086, %v6084
        %v6209 = vpack.c.b16 %v6087, %v6085
        %v6210 = vpack.c.b16 %v6090, %v6088
        %v6211 = vpack.c.b16 %v6091, %v6089
        %v6212 = vpack.c.b16 %v6094, %v6092
        %v6213 = vpack.c.b16 %v6095, %v6093
        %v6214 = vpack.c.b16 %v6098, %v6096
        %v6215 = vpack.c.b16 %v6099, %v6097
        %v6216 = vpack.c.b16 %v6102, %v6100
        %v6217 = vpack.c.b16 %v6103, %v6101
        %v6218 = vpack.c.b16 %v6106, %v6104
        %v6219 = vpack.c.b16 %v6107, %v6105
        %v6220 = vpack.c.b16 %v6110, %v6108
        %v6221 = vpack.c.b16 %v6111, %v6109
        %v6222 = vpack.c.b16 %v6114, %v6112
        %v6223 = vpack.c.b16 %v6115, %v6113
        %v6224 = vpack.c.b16 %v6118, %v6116
        %v6225 = vpack.c.b16 %v6119, %v6117
        %v6226 = vpack.c.b16 %v6122, %v6120
        %v6227 = vpack.c.b16 %v6123, %v6121
        %v6228 = vpack.c.b16 %v6126, %v6124
        %v6229 = vpack.c.b16 %v6127, %v6125
        %v6230 = vpack.c.b16 %v6130, %v6128
        %v6231 = vpack.c.b16 %v6131, %v6129
        %v6232 = vpack.c.b16 %v6134, %v6132
        %v6233 = vpack.c.b16 %v6135, %v6133
        %v6234 = vpack.c.b16 %v6138, %v6136
        %v6235 = vpack.c.b16 %v6139, %v6137
        %v6236 = vpack.c.b16 %v6142, %v6140
        %v6237 = vpack.c.b16 %v6143, %v6141
        %v6238 = vpack.c.b16 %v6146, %v6144
        %v6239 = vpack.c.b16 %v6147, %v6145
        %v6240 = vpack.c.b16 %v6150, %v6148
        %v6241 = vpack.c.b16 %v6151, %v6149
        %v6242 = vpack.c.b16 %v6154, %v6152
        %v6243 = vpack.c.b16 %v6155, %v6153
        %v6244 = vpack.c.b16 %v6158, %v6156
        %v6245 = vpack.c.b16 %v6159, %v6157
        %v6246 = vpack.c.b16 %v6162, %v6160
        %v6247 = vpack.c.b16 %v6163, %v6161
        %v6248 = vpack.c.b16 %v6166, %v6164
        %v6249 = vpack.c.b16 %v6167, %v6165
        %v6250 = vpack.c.b16 %v6170, %v6168
        %v6251 = vpack.c.b16 %v6171, %v6169
        %v6252 = vpack.c.b16 %v6174, %v6172
        %v6253 = vpack.c.b16 %v6175, %v6173
        %v6254 = vpack.c.b16 %v6178, %v6176
        %v6255 = vpack.c.b16 %v6179, %v6177
        %v6256 = vpack.c.b16 %v6182, %v6180
        %v6257 = vpack.c.b16 %v6183, %v6181
        %v6258 = vpack.c.b16 %v6186, %v6184
        %v6259 = vpack.c.b16 %v6187, %v6185
        %v6260 = vpack.c.b16 %v6190, %v6188
        %v6261 = vpack.c.b16 %v6191, %v6189
        %v6262 = vpack.c.b16 %v6194, %v6192
        %v6263 = vpack.c.b16 %v6195, %v6193
        %v6264 = vpack.c.b16 %v6198, %v6196
        %v6265 = vpack.c.b16 %v6199, %v6197
        %v6266 = vpack.c.b16 %v6202, %v6200
        %v6267 = vpack.c.b16 %v6203, %v6201
        %6332 = vmatpush.bf16.msra.mxu0 %v6218
        %6333 = vmatpush.bf16.msra.mxu0 %v6216
        %6334 = vmatpush.bf16.msra.mxu0 %v6214
        %6335 = vmatpush.bf16.msra.mxu0 %v6212
        %6336 = vmatpush.bf16.msra.mxu0 %v6210
        %6337 = vmatpush.bf16.msra.mxu0 %v6208
        %6338 = vmatpush.bf16.msra.mxu0 %v6206
        %6339 = vmatpush.bf16.msra.mxu0 %v6204
        %6340 = vmatmul.bf16.gmra.mxu0 %v5938
        %v6341 = vpop.f32.mrf.mxu0
        %v6342 = vadd.f32 %v6008, %v6341
        %v6343 = vpop.f32.mrf.mxu0
        %v6344 = vadd.f32 %v6008, %v6343
        %6345 = vdwg.mxu0
        %6346 = vmatpush.bf16.msra.mxu0 %v6234
        %6347 = vmatpush.bf16.msra.mxu0 %v6232
        %6348 = vmatpush.bf16.msra.mxu0 %v6230
        %6349 = vmatpush.bf16.msra.mxu0 %v6228
        %6350 = vmatpush.bf16.msra.mxu0 %v6226
        %6351 = vmatpush.bf16.msra.mxu0 %v6224
        %6352 = vmatpush.bf16.msra.mxu0 %v6222
        %6353 = vmatpush.bf16.msra.mxu0 %v6220
        %6354 = vmatmul.bf16.gmra.mxu0 %v5939
        %v6355 = vpop.f32.mrf.mxu0
        %v6356 = vadd.f32 %v6342, %v6355
        %v6357 = vpop.f32.mrf.mxu0
        %v6358 = vadd.f32 %v6344, %v6357
        %6359 = vdwg.mxu0
        %6360 = vmatpush.bf16.msra.mxu0 %v6250
        %6361 = vmatpush.bf16.msra.mxu0 %v6248
        %6362 = vmatpush.bf16.msra.mxu0 %v6246
        %6363 = vmatpush.bf16.msra.mxu0 %v6244
        %6364 = vmatpush.bf16.msra.mxu0 %v6242
        %6365 = vmatpush.bf16.msra.mxu0 %v6240
        %6366 = vmatpush.bf16.msra.mxu0 %v6238
        %6367 = vmatpush.bf16.msra.mxu0 %v6236
        %6368 = vmatmul.bf16.gmra.mxu0 %v5940
        %v6369 = vpop.f32.mrf.mxu0
        %v6370 = vadd.f32 %v6356, %v6369
        %v6371 = vpop.f32.mrf.mxu0
        %v6372 = vadd.f32 %v6358, %v6371
        %6373 = vdwg.mxu0
        %6374 = vmatpush.bf16.msra.mxu0 %v6266
        %6375 = vmatpush.bf16.msra.mxu0 %v6264
        %6376 = vmatpush.bf16.msra.mxu0 %v6262
        %6377 = vmatpush.bf16.msra.mxu0 %v6260
        %6378 = vmatpush.bf16.msra.mxu0 %v6258
        %6379 = vmatpush.bf16.msra.mxu0 %v6256
        %6380 = vmatpush.bf16.msra.mxu0 %v6254
        %6381 = vmatpush.bf16.msra.mxu0 %v6252
        %6382 = vmatmul.bf16.gmra.mxu0 %v5941
        %v6383 = vpop.f32.mrf.mxu0
        %v6384 = vadd.f32 %v6370, %v6383
        %v6385 = vpop.f32.mrf.mxu0
        %v6386 = vadd.f32 %v6372, %v6385
        %6387 = vdwg.mxu0
        %6388 = vmatpush.bf16.msra.mxu0 %v6219
        %6389 = vmatpush.bf16.msra.mxu0 %v6217
        %6390 = vmatpush.bf16.msra.mxu0 %v6215
        %6391 = vmatpush.bf16.msra.mxu0 %v6213
        %6392 = vmatpush.bf16.msra.mxu0 %v6211
        %6393 = vmatpush.bf16.msra.mxu0 %v6209
        %6394 = vmatpush.bf16.msra.mxu0 %v6207
        %6395 = vmatpush.bf16.msra.mxu0 %v6205
        %6396 = vmatmul.bf16.gmra.mxu0 %v5938
        %v6397 = vpop.f32.mrf.mxu0
        %v6398 = vadd.f32 %v6009, %v6397
        %v6399 = vpop.f32.mrf.mxu0
        %v6400 = vadd.f32 %v6009, %v6399
        %6401 = vdwg.mxu0
        %6402 = vmatpush.bf16.msra.mxu0 %v6235
        %6403 = vmatpush.bf16.msra.mxu0 %v6233
        %6404 = vmatpush.bf16.msra.mxu0 %v6231
        %6405 = vmatpush.bf16.msra.mxu0 %v6229
        %6406 = vmatpush.bf16.msra.mxu0 %v6227
        %6407 = vmatpush.bf16.msra.mxu0 %v6225
        %6408 = vmatpush.bf16.msra.mxu0 %v6223
        %6409 = vmatpush.bf16.msra.mxu0 %v6221
        %6410 = vmatmul.bf16.gmra.mxu0 %v5939
        %v6411 = vpop.f32.mrf.mxu0
        %v6412 = vadd.f32 %v6398, %v6411
        %v6413 = vpop.f32.mrf.mxu0
        %v6414 = vadd.f32 %v6400, %v6413
        %6415 = vdwg.mxu0
        %6416 = vmatpush.bf16.msra.mxu0 %v6251
        %6417 = vmatpush.bf16.msra.mxu0 %v6249
        %6418 = vmatpush.bf16.msra.mxu0 %v6247
        %6419 = vmatpush.bf16.msra.mxu0 %v6245
        %6420 = vmatpush.bf16.msra.mxu0 %v6243
        %6421 = vmatpush.bf16.msra.mxu0 %v6241
        %6422 = vmatpush.bf16.msra.mxu0 %v6239
        %6423 = vmatpush.bf16.msra.mxu0 %v6237
        %6424 = vmatmul.bf16.gmra.mxu0 %v5940
        %v6425 = vpop.f32.mrf.mxu0
        %v6426 = vadd.f32 %v6412, %v6425
        %v6427 = vpop.f32.mrf.mxu0
        %v6428 = vadd.f32 %v6414, %v6427
        %6429 = vdwg.mxu0
        %6430 = vmatpush.bf16.msra.mxu0 %v6267
        %6431 = vmatpush.bf16.msra.mxu0 %v6265
        %6432 = vmatpush.bf16.msra.mxu0 %v6263
        %6433 = vmatpush.bf16.msra.mxu0 %v6261
        %6434 = vmatpush.bf16.msra.mxu0 %v6259
        %6435 = vmatpush.bf16.msra.mxu0 %v6257
        %6436 = vmatpush.bf16.msra.mxu0 %v6255
        %6437 = vmatpush.bf16.msra.mxu0 %v6253
        %6438 = vmatmul.bf16.gmra.mxu0 %v5941
        %v6439 = vpop.f32.mrf.mxu0
        %v6440 = vadd.f32 %v6426, %v6439
        %v6441 = vpop.f32.mrf.mxu0
        %v6442 = vadd.f32 %v6428, %v6441
        %6443 = vdwg.mxu0
        %vm6444 = vcmp.gt.f32.partialorder %v6384, 0.0
        %vm6445 = vcmp.gt.f32.partialorder %v6440, 0.0
        %vm6446 = vcmp.gt.f32.partialorder %v6386, 0.0
        %vm6447 = vcmp.gt.f32.partialorder %v6442, 0.0
        %v6448 = vmul.f32 %v6384, 0.2
        %v6449 = vmul.f32 %v6440, 0.2
        %v6450 = vmul.f32 %v6386, 0.2
        %v6451 = vmul.f32 %v6442, 0.2
        %v6452 = vsel %vm6444, %v6384, %v6448
        %v6453 = vsel %vm6445, %v6440, %v6449
        %v6454 = vsel %vm6446, %v6386, %v6450
        %v6455 = vsel %vm6447, %v6442, %v6451
        %v6456 = vld [vmem:[%s616] sm:$0xff]
        %v6457 = vld [vmem:[%s616 + $0x8] sm:$0xff]
        %v6458 = vunpack.c.l.bf16 %v6456
        %v6459 = vunpack.c.h.bf16 %v6456
        %v6460 = vunpack.c.l.bf16 %v6457
        %v6461 = vunpack.c.h.bf16 %v6457
        %v6462 = vmul.f32 %v6452, %v6458
        %v6463 = vmul.f32 %v6453, %v6459
        %v6464 = vmul.f32 %v6454, %v6460
        %v6465 = vmul.f32 %v6455, %v6461
        %v6466 = vld [vmem:[#allocation14] sm:$0x3]
        %v6467 = vunpack.c.l.bf16 %v6466
        %v6469 = vperm.slane %v6467, 0
        %v6470 = vperm.slane %v6467, 2
        %v6473 = vperm.slane %v6469, 0
        %v6474 = vperm.slane %v6470, 0
        %v6475 = vmul.f32 %v6462, %v6473
        %v6476 = vmul.f32 %v6463, %v6474
        %v6477 = vmul.f32 %v6464, %v6473
        %v6478 = vmul.f32 %v6465, %v6474
        %v6479 = vadd.f32 %v6475, %v6476
        %6480 = vadd.xlane.f32.xlu0 %v6479
        %v6481 = vpop.xlane.xlu0 %6480
        %v6482 = vadd.f32 %v6477, %v6478
        %6483 = vadd.xlane.f32.xlu0 %v6482
        %v6484 = vpop.xlane.xlu0 %6483
        %v6485 = vld [vmem:[#allocation2] sm:$0x1]
        %v6487 = vperm.slane %v6485, 0
        %v6489 = vadd.f32 %v6481, %v6487
        %v6490 = vadd.f32 %v6484, %v6487
        %v6491 = vsub.f32 0.0, %v6489
        %v6492 = vsub.f32 0.0, %v6490
        %v6493 = vmul.f32 %v6491, 1.442695
        %v6494 = vpow.pop %v6493
        %v6495 = vmul.f32 %v6492, 1.442695
        %v6496 = vpow.pop %v6495
        %v6497 = vadd.f32 %v6494, 1.0
        %v6498 = vadd.f32 %v6496, 1.0
        %v6499 = vrcp.pop %v6497
        %v6500 = vmul.f32 %v6497, %v6499
        %v6501 = vsub.f32 1.0, %v6500
        %v6502 = vmul.f32 %v6499, %v6501
        %v6503 = vadd.f32 %v6499, %v6502
        %vm6504 = vweird.f32 %v6497
        %vm6505 = vweird.f32 %v6499
        %vm6506 = vmor %vm6504, %vm6505
        %v6507 = vsel %vm6506, %v6499, %v6503
        %v6508 = vand.u32 2147483647, %v6497
        %vm6509 = vcmp.eq.f32.partialorder %v6508, 8.507059e+37
        %v6510 = vand.u32 %v6497, 2147483648
        %v6511 = vor.u32 1.1754944e-38, %v6510
        %v6512 = vsel %vm6509, %v6511, %v6507
        %v6513 = vmul.f32 1.0, %v6512
        %v6514 = vrcp.pop %v6498
        %v6515 = vmul.f32 %v6498, %v6514
        %v6516 = vsub.f32 1.0, %v6515
        %v6517 = vmul.f32 %v6514, %v6516
        %v6518 = vadd.f32 %v6514, %v6517
        %vm6519 = vweird.f32 %v6498
        %vm6520 = vweird.f32 %v6514
        %vm6521 = vmor %vm6519, %vm6520
        %v6522 = vsel %vm6521, %v6514, %v6518
        %v6523 = vand.u32 2147483647, %v6498
        %vm6524 = vcmp.eq.f32.partialorder %v6523, 8.507059e+37
        %v6525 = vand.u32 %v6498, 2147483648
        %v6526 = vor.u32 1.1754944e-38, %v6525
        %v6527 = vsel %vm6524, %v6526, %v6522
        %v6528 = vmul.f32 1.0, %v6527
        %vm6529 = vcmask 7168
        %6530 = vst.msk [vmem:[%s622] sm:$0xff] %vm6529, %v6513
        %6531 = vst.msk [vmem:[%s622 + $0x8] sm:$0xff] %vm6529, %v6528
        %s6532 = smul.u32 2, %s32
        %p6533 = scmp.lt.s32.totalorder %s6532, 3
        %s6534 = scalar_select %p6533, %s6532, 3
        %s6535 = smul.addr %s6534, 8
        %s6536 = scalar_lea.vmem %s12, %s6535
        // Predicated region
        $region101: #{discriminator_forward.3} parent=67 // pred_check
          %p6537 = pneg %p322
        $region102: #{discriminator_forward.3} parent=67 // pred_check_branch
          %6539 = sbr.rel (%p6537) target = $region104
        $region103: #{discriminator_forward.3} parent=67 // pred_region
          %s6540 = smul.u32 2, %s32
        $region104: #{discriminator_forward.3} parent=67 // pred_fallthru
          _
      $region68: #{discriminator_forward.3} parent=5 // pred_fallthru
        _
      %p6541 = scmp.le.s32.totalorder 2, %s27
      // Predicated region
      $region105: #{discriminator_forward.3} parent=5 // pred_check
        %p6542 = pneg %p6541
      $region106: #{discriminator_forward.3} parent=5 // pred_check_branch
        %6544 = sbr.rel (%p6542) target = $region108
      $region107: #{discriminator_forward.3} parent=5 // pred_region
        %s6545 = ssub.s32 %s27, 2
        // Predicated region
        $region109: #{discriminator_forward.3} parent=107 // pred_check
          %p6546 = pneg %p328
        $region110: #{discriminator_forward.3} parent=107 // pred_check_branch
          %6548 = sbr.rel (%p6546) target = $region112
        $region111: #{discriminator_forward.3} parent=107 // pred_region
          %s6549 = smul.u32 2, %s33
          %p6550 = scmp.lt.s32.totalorder %s6549, 3
          %s6551 = scalar_select %p6550, %s6549, 3
          %s6552 = smul.addr %s6551, 8
          %s6553 = scalar_lea.vmem %s12, %s6552
        $region112: #{discriminator_forward.3} parent=107 // pred_fallthru
          _
      $region108: #{discriminator_forward.3} parent=5 // pred_fallthru
        _
    $region6: #{discriminator_forward.3} parent=1 // loop_footer
      %s31 = sadd.s32 1, %s27
    $region7: #{discriminator_forward.3} parent=1 // loop_footer_branch
      %26 = sbr.rel target = $region3
    $region8: #{discriminator_forward.3} parent=1 // loop_exit
      _
    %6554 = vsyncpa [#allocation4], 1
    %s6555 = scalar_lea.sflag [#allocation4], 1
    %6556 = vsyncpa %s6555, 1
    %6557 = vsyncpa [#allocation6], 1
    %6558 = vsyncpa [#allocation9], 1
    %6559 = vsyncpa [#allocation12], 1
    %6560 = vsyncpa [#allocation15], 1

</llo_original>
